<compile_context>
chip_gen: v7x
topology: tpu7x:2x2x1
jax: 0.10.0
libtpu: 0.0.40
codegen_flags: <defaults>
</compile_context>

<pallas_src>
import numpy as np

import jax
import jax.numpy as jnp
from jax import lax
from jax.experimental import pallas as pl
from jax.experimental.pallas import tpu as pltpu


# ----------------------------------------------------------------------------
# Host-side construction of the lane-space conv matrices (runs on weights only)
# ----------------------------------------------------------------------------

def _reflect_index(j, size):
    # reflect pad=1 (PyTorch padding_mode='reflect'):  -1 -> 1,  size -> size-2
    if j < 0:
        return -j
    if j >= size:
        return 2 * size - 2 - j
    return j


def _tap_selector(size):
    # R[w, dx, ws] = 1 iff reflect(w + dx - 1) == ws   (static numpy constant)
    r = np.zeros((size, 3, size), dtype=np.float32)
    for w in range(size):
        for dx in range(3):
            r[w, dx, _reflect_index(w + dx - 1, size)] = 1.0
    return r


def _build_operands(params):
    """Fold dx taps / reflect W-pad / pool column-selection / flatten into weights."""
    f32 = jnp.float32
    w1, b1 = params["w1"].astype(f32), params["b1"].astype(f32)   # (8,1,3,3),(8,)
    w2, b2 = params["w2"].astype(f32), params["b2"].astype(f32)   # (16,8,3,3),(16,)
    w3, b3 = params["w3"].astype(f32), params["b3"].astype(f32)   # (32,16,3,3),(32,)
    wf, bf = params["wf"].astype(f32), params["bf"].astype(f32)   # (10,1568),(10,)

    r28 = jnp.asarray(_tap_selector(28))
    r14 = jnp.asarray(_tap_selector(14))
    r7 = jnp.asarray(_tap_selector(7))

    # conv1: input lanes = w_src in [0,28) (cin=1); output lanes = w*8 + cout (224)
    w1p = jnp.transpose(w1[:, 0, :, :], (1, 2, 0))                    # (dy,dx,co)
    m1 = jnp.einsum("wds,ydc->yswc", r28, w1p).reshape(3, 28, 224)

    # conv2: input lanes = max-combined layer-1 lanes (216); only lanes
    # 2*ws*8 + cin are meaningful (pool column subsample folded in as zero rows).
    w2p = jnp.transpose(w2, (2, 3, 1, 0))                             # (dy,dx,ci,co)
    m2d = jnp.einsum("wds,ydic->ysiwc", r14, w2p).reshape(3, 14 * 8, 14 * 16)
    rows2 = np.array([2 * ws * 8 + ci for ws in range(14) for ci in range(8)])
    m2 = jnp.zeros((3, 216, 224), f32).at[:, rows2, :].set(m2d)

    # conv3: input lanes = max-combined layer-2 lanes (208); rows 2*ws*16 + cin.
    w3p = jnp.transpose(w3, (2, 3, 1, 0))
    m3d = jnp.einsum("wds,ydic->ysiwc", r7, w3p).reshape(3, 7 * 16, 7 * 32)
    rows3 = np.array([2 * ws * 16 + ci for ws in range(7) for ci in range(16)])
    m3 = jnp.zeros((3, 208, 224), f32).at[:, rows3, :].set(m3d)

    # FC: torch flattens NCHW -> feature f = c*49 + h*7 + w.  Our conv3 output row h
    # has lanes w*32 + c, so wf3[h, w*32+c, k] = wf[k, c*49 + h*7 + w].
    wf3 = jnp.transpose(wf.reshape(10, 32, 7, 7), (2, 3, 1, 0)).reshape(7, 224, 10)

    b1r = jnp.tile(b1.reshape(1, 8), (1, 28))      # (1,224) lane = w*8+c
    b2r = jnp.tile(b2.reshape(1, 16), (1, 14))     # (1,224) lane = w*16+c
    b3r = jnp.tile(b3.reshape(1, 32), (1, 7))      # (1,224) lane = w*32+c
    bfr = bf.reshape(1, 10)
    return m1, b1r, m2, b2r, m3, b3r, wf3, bfr


# ----------------------------------------------------------------------------
# The fused Pallas kernel (whole network, per batch tile)
# ----------------------------------------------------------------------------

def _net_kernel(x_ref, m1_ref, b1_ref, m2_ref, b2_ref, m3_ref, b3_ref,
                wf_ref, bf_ref, o_ref,
                xp1, a1, pc1, xp2, a2, pc2, xp3, a3):
    f32 = jnp.float32
    tb = x_ref.shape[0]

    def one_image(b, carry):
        # ---------------- conv1: 1 -> 8 on 28x28 (reflect pad) ----------------
        xp1[pl.ds(1, 28), :] = x_ref[b]                 # interior rows 1..28
        xp1[pl.ds(0, 1), :] = xp1[pl.ds(2, 1), :]       # reflect top    (row 1)
        xp1[pl.ds(29, 1), :] = xp1[pl.ds(27, 1), :]     # reflect bottom (row 26)
        acc = jnp.zeros((28, 224), f32) + b1_ref[...]
        for dy in range(3):
            acc = acc + jnp.dot(xp1[pl.ds(dy, 28), :], m1_ref[dy],
                                preferred_element_type=f32)
        a1[...] = jnp.maximum(acc, 0.0)                 # (28, 224) lane = w*8+c

        # ---------------- maxpool 2x2 (combined, not yet subsampled) ----------
        pc1[...] = jnp.maximum(
            jnp.maximum(a1[pl.ds(0, 27), pl.ds(0, 216)],
                        a1[pl.ds(1, 27), pl.ds(0, 216)]),
            jnp.maximum(a1[pl.ds(0, 27), pl.ds(8, 216)],
                        a1[pl.ds(1, 27), pl.ds(8, 216)]))

        # conv2 padded-row input: rows = pooled rows 0..13 (+reflect), lanes = pc1
        for j in range(14):
            xp2[pl.ds(j + 1, 1), :] = pc1[pl.ds(2 * j, 1), :]
        xp2[pl.ds(0, 1), :] = pc1[pl.ds(2, 1), :]       # reflect: pooled row 1
        xp2[pl.ds(15, 1), :] = pc1[pl.ds(24, 1), :]     # reflect: pooled row 12

        # ---------------- conv2: 8 -> 16 on 14x14 ----------------
        acc = jnp.zeros((14, 224), f32) + b2_ref[...]
        for dy in range(3):
            acc = acc + jnp.dot(xp2[pl.ds(dy, 14), :], m2_ref[dy],
                                preferred_element_type=f32)
        a2[...] = jnp.maximum(acc, 0.0)                 # (14, 224) lane = w*16+c

        # ---------------- maxpool 2x2 ----------------
        pc2[...] = jnp.maximum(
            jnp.maximum(a2[pl.ds(0, 13), pl.ds(0, 208)],
                        a2[pl.ds(1, 13), pl.ds(0, 208)]),
            jnp.maximum(a2[pl.ds(0, 13), pl.ds(16, 208)],
                        a2[pl.ds(1, 13), pl.ds(16, 208)]))

        # conv3 padded-row input
        for j in range(7):
            xp3[pl.ds(j + 1, 1), :] = pc2[pl.ds(2 * j, 1), :]
        xp3[pl.ds(0, 1), :] = pc2[pl.ds(2, 1), :]       # reflect: pooled row 1
        xp3[pl.ds(8, 1), :] = pc2[pl.ds(10, 1), :]      # reflect: pooled row 5

        # ---------------- conv3: 16 -> 32 on 7x7 ----------------
        acc = jnp.zeros((7, 224), f32) + b3_ref[...]
        for dy in range(3):
            acc = acc + jnp.dot(xp3[pl.ds(dy, 7), :], m3_ref[dy],
                                preferred_element_type=f32)
        a3[...] = jnp.maximum(acc, 0.0)                 # (7, 224) lane = w*32+c

        # ---------------- fc (1568 -> 10) + log_softmax ----------------
        logits = jnp.zeros((1, 10), f32) + bf_ref[...]
        for h in range(7):
            logits = logits + jnp.dot(a3[pl.ds(h, 1), :], wf_ref[h],
                                      preferred_element_type=f32)
        m = jnp.max(logits, axis=-1, keepdims=True)
        s = logits - m
        lse = jnp.log(jnp.sum(jnp.exp(s), axis=-1, keepdims=True))
        o_ref[pl.ds(b, 1), :] = (s - lse).astype(o_ref.dtype)
        return carry

    lax.fori_loop(0, tb, one_image, 0)


# ----------------------------------------------------------------------------
# Wrapper
# ----------------------------------------------------------------------------

def net_forward(params, x_nchw):
    m1, b1r, m2, b2r, m3, b3r, wf3, bfr = _build_operands(params)

    x = x_nchw[:, 0, :, :].astype(jnp.float32)          # (N, 28, 28)
    n = x.shape[0]
    tb = min(8, n)                                      # images per grid step
    n_pad = int(np.ceil(n / tb)) * tb
    if n_pad != n:
        x = jnp.pad(x, ((0, n_pad - n), (0, 0), (0, 0)))

    out = pl.pallas_call(
        _net_kernel,
        out_shape=jax.ShapeDtypeStruct((n_pad, 10), jnp.float32),
        grid_spec=pltpu.PrefetchScalarGridSpec(
            num_scalar_prefetch=0,
            grid=(n_pad // tb,),
            in_specs=[
                pl.BlockSpec((tb, 28, 28), lambda i: (i, 0, 0)),   # images
                pl.BlockSpec((3, 28, 224), lambda i: (0, 0, 0)),   # m1 (resident)
                pl.BlockSpec((1, 224), lambda i: (0, 0)),          # b1
                pl.BlockSpec((3, 216, 224), lambda i: (0, 0, 0)),  # m2
                pl.BlockSpec((1, 224), lambda i: (0, 0)),          # b2
                pl.BlockSpec((3, 208, 224), lambda i: (0, 0, 0)),  # m3
                pl.BlockSpec((1, 224), lambda i: (0, 0)),          # b3
                pl.BlockSpec((7, 224, 10), lambda i: (0, 0, 0)),   # fc weights
                pl.BlockSpec((1, 10), lambda i: (0, 0)),           # fc bias
            ],
            out_specs=pl.BlockSpec((tb, 10), lambda i: (i, 0)),
            scratch_shapes=[
                pltpu.VMEM((30, 28), jnp.float32),    # xp1: row-padded input
                pltpu.VMEM((28, 224), jnp.float32),   # a1 : conv1+relu
                pltpu.VMEM((27, 216), jnp.float32),   # pc1: pool1 combined
                pltpu.VMEM((16, 216), jnp.float32),   # xp2: conv2 padded rows
                pltpu.VMEM((14, 224), jnp.float32),   # a2 : conv2+relu
                pltpu.VMEM((13, 208), jnp.float32),   # pc2: pool2 combined
                pltpu.VMEM((9, 208), jnp.float32),    # xp3: conv3 padded rows
                pltpu.VMEM((7, 224), jnp.float32),    # a3 : conv3+relu
            ],
        ),
        compiler_params=pltpu.CompilerParams(
            dimension_semantics=("parallel",),
            vmem_limit_bytes=32 * 1024 * 1024,
        ),
    )(x, m1, b1r, m2, b2r, m3, b3r, wf3, bfr)
    return out[:n]


# ----------------------------------------------------------------------------
# Params + pure-JAX reference (for the in-script correctness check)
# ----------------------------------------------------------------------------

def init_params(key):
    ks = jax.random.split(key, 8)

    def conv_init(kw, kb, cin, cout):
        bound = 1.0 / float(np.sqrt(cin * 9.0))
        w = jax.random.uniform(kw, (cout, cin, 3, 3), jnp.float32, -bound, bound)
        b = jax.random.uniform(kb, (cout,), jnp.float32, -bound, bound)
        return w, b

    w1, b1 = conv_init(ks[0], ks[1], 1, 8)
    w2, b2 = conv_init(ks[2], ks[3], 8, 16)
    w3, b3 = conv_init(ks[4], ks[5], 16, 32)
    bound = 1.0 / float(np.sqrt(1568.0))
    wf = jax.random.uniform(ks[6], (10, 1568), jnp.float32, -bound, bound)
    bf = jax.random.uniform(ks[7], (10,), jnp.float32, -bound, bound)
    return dict(w1=w1, b1=b1, w2=w2, b2=b2, w3=w3, b3=b3, wf=wf, bf=bf)


def _reference_forward(params, x_nchw):
    hi = jax.lax.Precision.HIGHEST
    x = x_nchw.astype(jnp.float32)

    def conv_reflect(h, w, b):
        n, ci, hh, ww = h.shape
        hp = jnp.pad(h, ((0, 0), (0, 0), (1, 1), (1, 1)), mode="reflect")
        out = jnp.zeros((n, w.shape[0], hh, ww), jnp.float32) + b[None, :, None, None]
        for dy in range(3):
            for dx in range(3):
                patch = hp[:, :, dy:dy + hh, dx:dx + ww]
                out = out + jnp.einsum("ncij,oc->noij", patch, w[:, :, dy, dx],
                                       precision=hi)
        return out

    def pool(h):
        n, c, hh, ww = h.shape
        return h.reshape(n, c, hh // 2, 2, ww // 2, 2).max(axis=(3, 5))

    h = pool(jax.nn.relu(conv_reflect(x, params["w1"], params["b1"])))
    h = pool(jax.nn.relu(conv_reflect(h, params["w2"], params["b2"])))
    h = jax.nn.relu(conv_reflect(h, params["w3"], params["b3"]))
    h = h.reshape(h.shape[0], -1)                       # NCHW flatten (c, h, w)
    logits = jnp.dot(h, params["wf"].T, precision=hi) + params["bf"][None, :]
    return jax.nn.log_softmax(logits, axis=-1)


if __name__ == "__main__":
    key = jax.random.PRNGKey(0)
    pkey, xkey = jax.random.split(key)
    params = init_params(pkey)
    x = jax.random.normal(xkey, (2, 1, 28, 28), dtype=jnp.float32)  # NCHW like PyTorch

    out = jax.jit(net_forward)(params, x)
    out = jax.block_until_ready(out)

    assert out.shape == (2, 10), out.shape
    assert bool(jnp.all(jnp.isfinite(out)))
    assert bool(jnp.allclose(jnp.sum(jnp.exp(out), axis=1), 1.0, atol=1e-4))

    ref = _reference_forward(params, x)
    assert bool(jnp.allclose(out, ref, atol=2e-2, rtol=2e-2)), \
        float(jnp.max(jnp.abs(out - ref)))
    print("KERNEL_OK")
</pallas_src>

<mosaic_0001>
module attributes {stable_mosaic.version = 11 : i64} {
  func.func @_net_kernel(%arg0: i32, %arg1: memref<2x28x28xf32, #tpu.memory_space<vmem>>, %arg2: memref<3x28x224xf32, #tpu.memory_space<vmem>>, %arg3: memref<1x224xf32, #tpu.memory_space<vmem>>, %arg4: memref<3x216x224xf32, #tpu.memory_space<vmem>>, %arg5: memref<1x224xf32, #tpu.memory_space<vmem>>, %arg6: memref<3x208x224xf32, #tpu.memory_space<vmem>>, %arg7: memref<1x224xf32, #tpu.memory_space<vmem>>, %arg8: memref<7x224x10xf32, #tpu.memory_space<vmem>>, %arg9: memref<1x10xf32, #tpu.memory_space<vmem>>, %arg10: memref<2x10xf32, #tpu.memory_space<vmem>>, %arg11: memref<30x28xf32, #tpu.memory_space<vmem>>, %arg12: memref<28x224xf32, #tpu.memory_space<vmem>>, %arg13: memref<27x216xf32, #tpu.memory_space<vmem>>, %arg14: memref<16x216xf32, #tpu.memory_space<vmem>>, %arg15: memref<14x224xf32, #tpu.memory_space<vmem>>, %arg16: memref<13x208xf32, #tpu.memory_space<vmem>>, %arg17: memref<9x208xf32, #tpu.memory_space<vmem>>, %arg18: memref<7x224xf32, #tpu.memory_space<vmem>>) attributes {dimension_semantics = [#tpu.dimension_semantics<parallel>], iteration_bounds = array<i64: 1>, scalar_prefetch = 0 : i64, scratch_operands = 8 : i64, tpu.core_type = #tpu.core_type<tc>, window_params = [{transform_indices = @transform_0, window_bounds = array<i64: 2, 28, 28>}, {pipeline_mode = #tpu.pipeline_mode<synchronous>, transform_indices = @transform_1, window_bounds = array<i64: 3, 28, 224>}, {pipeline_mode = #tpu.pipeline_mode<synchronous>, transform_indices = @transform_2, window_bounds = array<i64: 1, 224>}, {pipeline_mode = #tpu.pipeline_mode<synchronous>, transform_indices = @transform_3, window_bounds = array<i64: 3, 216, 224>}, {pipeline_mode = #tpu.pipeline_mode<synchronous>, transform_indices = @transform_4, window_bounds = array<i64: 1, 224>}, {pipeline_mode = #tpu.pipeline_mode<synchronous>, transform_indices = @transform_5, window_bounds = array<i64: 3, 208, 224>}, {pipeline_mode = #tpu.pipeline_mode<synchronous>, transform_indices = @transform_6, window_bounds = array<i64: 1, 224>}, {pipeline_mode = #tpu.pipeline_mode<synchronous>, transform_indices = @transform_7, window_bounds = array<i64: 7, 224, 10>}, {pipeline_mode = #tpu.pipeline_mode<synchronous>, transform_indices = @transform_8, window_bounds = array<i64: 1, 10>}, {transform_indices = @transform_9, window_bounds = array<i64: 2, 10>}]} {
    %c0_i32 = arith.constant 0 : i32
    %c2_i32 = arith.constant 2 : i32
    %0 = arith.addi %c0_i32, %c2_i32 : i32
    %c1_i32 = arith.constant 1 : i32
    scf.for %arg19 = %c0_i32 to %0 step %c1_i32  : i32 {
      %1 = arith.index_cast %arg19 : i32 to index
      %c0 = arith.constant 0 : index
      %c0_1 = arith.constant 0 : index
      %2 = vector.load %arg1[%1, %c0, %c0_1] : memref<2x28x28xf32, #tpu.memory_space<vmem>>, vector<1x28x28xf32>
      %3 = vector.shape_cast %2 : vector<1x28x28xf32> to vector<28x28xf32>
      %c1 = arith.constant 1 : index
      %c0_2 = arith.constant 0 : index
      %4 = vector.load %arg11[%c1, %c0_2] : memref<30x28xf32, #tpu.memory_space<vmem>>, vector<28x28xf32>
      tpu.vector_store %arg11[%c1, %c0_2], %3 {strides = array<i32>} : memref<30x28xf32, #tpu.memory_space<vmem>>, vector<28x28xf32>,
      %c2 = arith.constant 2 : index
      %c0_3 = arith.constant 0 : index
      %5 = vector.load %arg11[%c2, %c0_3] : memref<30x28xf32, #tpu.memory_space<vmem>>, vector<1x28xf32>
      %c0_4 = arith.constant 0 : index
      %c0_5 = arith.constant 0 : index
      %6 = vector.load %arg11[%c0_4, %c0_5] : memref<30x28xf32, #tpu.memory_space<vmem>>, vector<1x28xf32>
      tpu.vector_store %arg11[%c0_4, %c0_5], %5 {strides = array<i32>} : memref<30x28xf32, #tpu.memory_space<vmem>>, vector<1x28xf32>,
      %c27 = arith.constant 27 : index
      %c0_6 = arith.constant 0 : index
      %7 = vector.load %arg11[%c27, %c0_6] : memref<30x28xf32, #tpu.memory_space<vmem>>, vector<1x28xf32>
      %c29 = arith.constant 29 : index
      %c0_7 = arith.constant 0 : index
      %8 = vector.load %arg11[%c29, %c0_7] : memref<30x28xf32, #tpu.memory_space<vmem>>, vector<1x28xf32>
      tpu.vector_store %arg11[%c29, %c0_7], %7 {strides = array<i32>} : memref<30x28xf32, #tpu.memory_space<vmem>>, vector<1x28xf32>,
      %cst = arith.constant 0.000000e+00 : f32
      %9 = vector.broadcast %cst : f32 to vector<28x224xf32>
      %c0_8 = arith.constant 0 : index
      %c0_9 = arith.constant 0 : index
      %10 = vector.load %arg3[%c0_8, %c0_9] : memref<1x224xf32, #tpu.memory_space<vmem>>, vector<1x224xf32>
      %11 = vector.broadcast %10 : vector<1x224xf32> to vector<28x224xf32>
      %12 = arith.addf %9, %11 : vector<28x224xf32>
      %c0_10 = arith.constant 0 : index
      %c0_11 = arith.constant 0 : index
      %13 = vector.load %arg11[%c0_10, %c0_11] : memref<30x28xf32, #tpu.memory_space<vmem>>, vector<28x28xf32>
      %c0_12 = arith.constant 0 : index
      %c0_13 = arith.constant 0 : index
      %c0_14 = arith.constant 0 : index
      %14 = vector.load %arg2[%c0_12, %c0_13, %c0_14] : memref<3x28x224xf32, #tpu.memory_space<vmem>>, vector<1x28x224xf32>
      %15 = vector.shape_cast %14 : vector<1x28x224xf32> to vector<28x224xf32>
      %cst_15 = arith.constant dense<0.000000e+00> : vector<28x224xf32>
      %16 = tpu.matmul %13, %15, %cst_15 {dimension_numbers = #tpu.dot_dimension_numbers<[1], [0], [0], [1], [0, 0, 1, 1], [], []>} : vector<28x28xf32>, vector<28x224xf32>, vector<28x224xf32> -> vector<28x224xf32>
      %17 = arith.addf %12, %16 : vector<28x224xf32>
      %c1_16 = arith.constant 1 : index
      %c0_17 = arith.constant 0 : index
      %18 = vector.load %arg11[%c1_16, %c0_17] : memref<30x28xf32, #tpu.memory_space<vmem>>, vector<28x28xf32>
      %c1_18 = arith.constant 1 : index
      %c0_19 = arith.constant 0 : index
      %c0_20 = arith.constant 0 : index
      %19 = vector.load %arg2[%c1_18, %c0_19, %c0_20] : memref<3x28x224xf32, #tpu.memory_space<vmem>>, vector<1x28x224xf32>
      %20 = vector.shape_cast %19 : vector<1x28x224xf32> to vector<28x224xf32>
      %cst_21 = arith.constant dense<0.000000e+00> : vector<28x224xf32>
      %21 = tpu.matmul %18, %20, %cst_21 {dimension_numbers = #tpu.dot_dimension_numbers<[1], [0], [0], [1], [0, 0, 1, 1], [], []>} : vector<28x28xf32>, vector<28x224xf32>, vector<28x224xf32> -> vector<28x224xf32>
      %22 = arith.addf %17, %21 : vector<28x224xf32>
      %c2_22 = arith.constant 2 : index
      %c0_23 = arith.constant 0 : index
      %23 = vector.load %arg11[%c2_22, %c0_23] : memref<30x28xf32, #tpu.memory_space<vmem>>, vector<28x28xf32>
      %c2_24 = arith.constant 2 : index
      %c0_25 = arith.constant 0 : index
      %c0_26 = arith.constant 0 : index
      %24 = vector.load %arg2[%c2_24, %c0_25, %c0_26] : memref<3x28x224xf32, #tpu.memory_space<vmem>>, vector<1x28x224xf32>
      %25 = vector.shape_cast %24 : vector<1x28x224xf32> to vector<28x224xf32>
      %cst_27 = arith.constant dense<0.000000e+00> : vector<28x224xf32>
      %26 = tpu.matmul %23, %25, %cst_27 {dimension_numbers = #tpu.dot_dimension_numbers<[1], [0], [0], [1], [0, 0, 1, 1], [], []>} : vector<28x28xf32>, vector<28x224xf32>, vector<28x224xf32> -> vector<28x224xf32>
      %27 = arith.addf %22, %26 : vector<28x224xf32>
      %cst_28 = arith.constant 0.000000e+00 : f32
      %28 = vector.broadcast %cst_28 : f32 to vector<28x224xf32>
      %29 = arith.maximumf %27, %28 : vector<28x224xf32>
      %c0_29 = arith.constant 0 : index
      %c0_30 = arith.constant 0 : index
      %30 = vector.load %arg12[%c0_29, %c0_30] : memref<28x224xf32, #tpu.memory_space<vmem>>, vector<28x224xf32>
      tpu.vector_store %arg12[%c0_29, %c0_30], %29 {strides = array<i32>} : memref<28x224xf32, #tpu.memory_space<vmem>>, vector<28x224xf32>,
      %c0_31 = arith.constant 0 : index
      %c0_32 = arith.constant 0 : index
      %31 = vector.load %arg12[%c0_31, %c0_32] : memref<28x224xf32, #tpu.memory_space<vmem>>, vector<27x216xf32>
      %c1_33 = arith.constant 1 : index
      %c0_34 = arith.constant 0 : index
      %32 = vector.load %arg12[%c1_33, %c0_34] : memref<28x224xf32, #tpu.memory_space<vmem>>, vector<27x216xf32>
      %33 = arith.maximumf %31, %32 : vector<27x216xf32>
      %c0_35 = arith.constant 0 : index
      %c8 = arith.constant 8 : index
      %34 = vector.load %arg12[%c0_35, %c8] : memref<28x224xf32, #tpu.memory_space<vmem>>, vector<27x216xf32>
      %c1_36 = arith.constant 1 : index
      %c8_37 = arith.constant 8 : index
      %35 = vector.load %arg12[%c1_36, %c8_37] : memref<28x224xf32, #tpu.memory_space<vmem>>, vector<27x216xf32>
      %36 = arith.maximumf %34, %35 : vector<27x216xf32>
      %37 = arith.maximumf %33, %36 : vector<27x216xf32>
      %c0_38 = arith.constant 0 : index
      %c0_39 = arith.constant 0 : index
      %38 = vector.load %arg13[%c0_38, %c0_39] : memref<27x216xf32, #tpu.memory_space<vmem>>, vector<27x216xf32>
      tpu.vector_store %arg13[%c0_38, %c0_39], %37 {strides = array<i32>} : memref<27x216xf32, #tpu.memory_space<vmem>>, vector<27x216xf32>,
      %c0_40 = arith.constant 0 : index
      %c0_41 = arith.constant 0 : index
      %39 = vector.load %arg13[%c0_40, %c0_41] : memref<27x216xf32, #tpu.memory_space<vmem>>, vector<1x216xf32>
      %c1_42 = arith.constant 1 : index
      %c0_43 = arith.constant 0 : index
      %40 = vector.load %arg14[%c1_42, %c0_43] : memref<16x216xf32, #tpu.memory_space<vmem>>, vector<1x216xf32>
      tpu.vector_store %arg14[%c1_42, %c0_43], %39 {strides = array<i32>} : memref<16x216xf32, #tpu.memory_space<vmem>>, vector<1x216xf32>,
      %c2_44 = arith.constant 2 : index
      %c0_45 = arith.constant 0 : index
      %41 = vector.load %arg13[%c2_44, %c0_45] : memref<27x216xf32, #tpu.memory_space<vmem>>, vector<1x216xf32>
      %c2_46 = arith.constant 2 : index
      %c0_47 = arith.constant 0 : index
      %42 = vector.load %arg14[%c2_46, %c0_47] : memref<16x216xf32, #tpu.memory_space<vmem>>, vector<1x216xf32>
      tpu.vector_store %arg14[%c2_46, %c0_47], %41 {strides = array<i32>} : memref<16x216xf32, #tpu.memory_space<vmem>>, vector<1x216xf32>,
      %c4 = arith.constant 4 : index
      %c0_48 = arith.constant 0 : index
      %43 = vector.load %arg13[%c4, %c0_48] : memref<27x216xf32, #tpu.memory_space<vmem>>, vector<1x216xf32>
      %c3 = arith.constant 3 : index
      %c0_49 = arith.constant 0 : index
      %44 = vector.load %arg14[%c3, %c0_49] : memref<16x216xf32, #tpu.memory_space<vmem>>, vector<1x216xf32>
      tpu.vector_store %arg14[%c3, %c0_49], %43 {strides = array<i32>} : memref<16x216xf32, #tpu.memory_space<vmem>>, vector<1x216xf32>,
      %c6 = arith.constant 6 : index
      %c0_50 = arith.constant 0 : index
      %45 = vector.load %arg13[%c6, %c0_50] : memref<27x216xf32, #tpu.memory_space<vmem>>, vector<1x216xf32>
      %c4_51 = arith.constant 4 : index
      %c0_52 = arith.constant 0 : index
      %46 = vector.load %arg14[%c4_51, %c0_52] : memref<16x216xf32, #tpu.memory_space<vmem>>, vector<1x216xf32>
      tpu.vector_store %arg14[%c4_51, %c0_52], %45 {strides = array<i32>} : memref<16x216xf32, #tpu.memory_space<vmem>>, vector<1x216xf32>,
      %c8_53 = arith.constant 8 : index
      %c0_54 = arith.constant 0 : index
      %47 = vector.load %arg13[%c8_53, %c0_54] : memref<27x216xf32, #tpu.memory_space<vmem>>, vector<1x216xf32>
      %c5 = arith.constant 5 : index
      %c0_55 = arith.constant 0 : index
      %48 = vector.load %arg14[%c5, %c0_55] : memref<16x216xf32, #tpu.memory_space<vmem>>, vector<1x216xf32>
      tpu.vector_store %arg14[%c5, %c0_55], %47 {strides = array<i32>} : memref<16x216xf32, #tpu.memory_space<vmem>>, vector<1x216xf32>,
      %c10 = arith.constant 10 : index
      %c0_56 = arith.constant 0 : index
      %49 = vector.load %arg13[%c10, %c0_56] : memref<27x216xf32, #tpu.memory_space<vmem>>, vector<1x216xf32>
      %c6_57 = arith.constant 6 : index
      %c0_58 = arith.constant 0 : index
      %50 = vector.load %arg14[%c6_57, %c0_58] : memref<16x216xf32, #tpu.memory_space<vmem>>, vector<1x216xf32>
      tpu.vector_store %arg14[%c6_57, %c0_58], %49 {strides = array<i32>} : memref<16x216xf32, #tpu.memory_space<vmem>>, vector<1x216xf32>,
      %c12 = arith.constant 12 : index
      %c0_59 = arith.constant 0 : index
      %51 = vector.load %arg13[%c12, %c0_59] : memref<27x216xf32, #tpu.memory_space<vmem>>, vector<1x216xf32>
      %c7 = arith.constant 7 : index
      %c0_60 = arith.constant 0 : index
      %52 = vector.load %arg14[%c7, %c0_60] : memref<16x216xf32, #tpu.memory_space<vmem>>, vector<1x216xf32>
      tpu.vector_store %arg14[%c7, %c0_60], %51 {strides = array<i32>} : memref<16x216xf32, #tpu.memory_space<vmem>>, vector<1x216xf32>,
      %c14 = arith.constant 14 : index
      %c0_61 = arith.constant 0 : index
      %53 = vector.load %arg13[%c14, %c0_61] : memref<27x216xf32, #tpu.memory_space<vmem>>, vector<1x216xf32>
      %c8_62 = arith.constant 8 : index
      %c0_63 = arith.constant 0 : index
      %54 = vector.load %arg14[%c8_62, %c0_63] : memref<16x216xf32, #tpu.memory_space<vmem>>, vector<1x216xf32>
      tpu.vector_store %arg14[%c8_62, %c0_63], %53 {strides = array<i32>} : memref<16x216xf32, #tpu.memory_space<vmem>>, vector<1x216xf32>,
      %c16 = arith.constant 16 : index
      %c0_64 = arith.constant 0 : index
      %55 = vector.load %arg13[%c16, %c0_64] : memref<27x216xf32, #tpu.memory_space<vmem>>, vector<1x216xf32>
      %c9 = arith.constant 9 : index
      %c0_65 = arith.constant 0 : index
      %56 = vector.load %arg14[%c9, %c0_65] : memref<16x216xf32, #tpu.memory_space<vmem>>, vector<1x216xf32>
      tpu.vector_store %arg14[%c9, %c0_65], %55 {strides = array<i32>} : memref<16x216xf32, #tpu.memory_space<vmem>>, vector<1x216xf32>,
      %c18 = arith.constant 18 : index
      %c0_66 = arith.constant 0 : index
      %57 = vector.load %arg13[%c18, %c0_66] : memref<27x216xf32, #tpu.memory_space<vmem>>, vector<1x216xf32>
      %c10_67 = arith.constant 10 : index
      %c0_68 = arith.constant 0 : index
      %58 = vector.load %arg14[%c10_67, %c0_68] : memref<16x216xf32, #tpu.memory_space<vmem>>, vector<1x216xf32>
      tpu.vector_store %arg14[%c10_67, %c0_68], %57 {strides = array<i32>} : memref<16x216xf32, #tpu.memory_space<vmem>>, vector<1x216xf32>,
      %c20 = arith.constant 20 : index
      %c0_69 = arith.constant 0 : index
      %59 = vector.load %arg13[%c20, %c0_69] : memref<27x216xf32, #tpu.memory_space<vmem>>, vector<1x216xf32>
      %c11 = arith.constant 11 : index
      %c0_70 = arith.constant 0 : index
      %60 = vector.load %arg14[%c11, %c0_70] : memref<16x216xf32, #tpu.memory_space<vmem>>, vector<1x216xf32>
      tpu.vector_store %arg14[%c11, %c0_70], %59 {strides = array<i32>} : memref<16x216xf32, #tpu.memory_space<vmem>>, vector<1x216xf32>,
      %c22 = arith.constant 22 : index
      %c0_71 = arith.constant 0 : index
      %61 = vector.load %arg13[%c22, %c0_71] : memref<27x216xf32, #tpu.memory_space<vmem>>, vector<1x216xf32>
      %c12_72 = arith.constant 12 : index
      %c0_73 = arith.constant 0 : index
      %62 = vector.load %arg14[%c12_72, %c0_73] : memref<16x216xf32, #tpu.memory_space<vmem>>, vector<1x216xf32>
      tpu.vector_store %arg14[%c12_72, %c0_73], %61 {strides = array<i32>} : memref<16x216xf32, #tpu.memory_space<vmem>>, vector<1x216xf32>,
      %c24 = arith.constant 24 : index
      %c0_74 = arith.constant 0 : index
      %63 = vector.load %arg13[%c24, %c0_74] : memref<27x216xf32, #tpu.memory_space<vmem>>, vector<1x216xf32>
      %c13 = arith.constant 13 : index
      %c0_75 = arith.constant 0 : index
      %64 = vector.load %arg14[%c13, %c0_75] : memref<16x216xf32, #tpu.memory_space<vmem>>, vector<1x216xf32>
      tpu.vector_store %arg14[%c13, %c0_75], %63 {strides = array<i32>} : memref<16x216xf32, #tpu.memory_space<vmem>>, vector<1x216xf32>,
      %c26 = arith.constant 26 : index
      %c0_76 = arith.constant 0 : index
      %65 = vector.load %arg13[%c26, %c0_76] : memref<27x216xf32, #tpu.memory_space<vmem>>, vector<1x216xf32>
      %c14_77 = arith.constant 14 : index
      %c0_78 = arith.constant 0 : index
      %66 = vector.load %arg14[%c14_77, %c0_78] : memref<16x216xf32, #tpu.memory_space<vmem>>, vector<1x216xf32>
      tpu.vector_store %arg14[%c14_77, %c0_78], %65 {strides = array<i32>} : memref<16x216xf32, #tpu.memory_space<vmem>>, vector<1x216xf32>,
      %c2_79 = arith.constant 2 : index
      %c0_80 = arith.constant 0 : index
      %67 = vector.load %arg13[%c2_79, %c0_80] : memref<27x216xf32, #tpu.memory_space<vmem>>, vector<1x216xf32>
      %c0_81 = arith.constant 0 : index
      %c0_82 = arith.constant 0 : index
      %68 = vector.load %arg14[%c0_81, %c0_82] : memref<16x216xf32, #tpu.memory_space<vmem>>, vector<1x216xf32>
      tpu.vector_store %arg14[%c0_81, %c0_82], %67 {strides = array<i32>} : memref<16x216xf32, #tpu.memory_space<vmem>>, vector<1x216xf32>,
      %c24_83 = arith.constant 24 : index
      %c0_84 = arith.constant 0 : index
      %69 = vector.load %arg13[%c24_83, %c0_84] : memref<27x216xf32, #tpu.memory_space<vmem>>, vector<1x216xf32>
      %c15 = arith.constant 15 : index
      %c0_85 = arith.constant 0 : index
      %70 = vector.load %arg14[%c15, %c0_85] : memref<16x216xf32, #tpu.memory_space<vmem>>, vector<1x216xf32>
      tpu.vector_store %arg14[%c15, %c0_85], %69 {strides = array<i32>} : memref<16x216xf32, #tpu.memory_space<vmem>>, vector<1x216xf32>,
      %cst_86 = arith.constant 0.000000e+00 : f32
      %71 = vector.broadcast %cst_86 : f32 to vector<14x224xf32>
      %c0_87 = arith.constant 0 : index
      %c0_88 = arith.constant 0 : index
      %72 = vector.load %arg5[%c0_87, %c0_88] : memref<1x224xf32, #tpu.memory_space<vmem>>, vector<1x224xf32>
      %73 = vector.broadcast %72 : vector<1x224xf32> to vector<14x224xf32>
      %74 = arith.addf %71, %73 : vector<14x224xf32>
      %c0_89 = arith.constant 0 : index
      %c0_90 = arith.constant 0 : index
      %75 = vector.load %arg14[%c0_89, %c0_90] : memref<16x216xf32, #tpu.memory_space<vmem>>, vector<14x216xf32>
      %c0_91 = arith.constant 0 : index
      %c0_92 = arith.constant 0 : index
      %c0_93 = arith.constant 0 : index
      %76 = vector.load %arg4[%c0_91, %c0_92, %c0_93] : memref<3x216x224xf32, #tpu.memory_space<vmem>>, vector<1x216x224xf32>
      %77 = vector.shape_cast %76 : vector<1x216x224xf32> to vector<216x224xf32>
      %cst_94 = arith.constant dense<0.000000e+00> : vector<14x224xf32>
      %78 = tpu.matmul %75, %77, %cst_94 {dimension_numbers = #tpu.dot_dimension_numbers<[1], [0], [0], [1], [0, 0, 1, 1], [], []>} : vector<14x216xf32>, vector<216x224xf32>, vector<14x224xf32> -> vector<14x224xf32>
      %79 = arith.addf %74, %78 : vector<14x224xf32>
      %c1_95 = arith.constant 1 : index
      %c0_96 = arith.constant 0 : index
      %80 = vector.load %arg14[%c1_95, %c0_96] : memref<16x216xf32, #tpu.memory_space<vmem>>, vector<14x216xf32>
      %c1_97 = arith.constant 1 : index
      %c0_98 = arith.constant 0 : index
      %c0_99 = arith.constant 0 : index
      %81 = vector.load %arg4[%c1_97, %c0_98, %c0_99] : memref<3x216x224xf32, #tpu.memory_space<vmem>>, vector<1x216x224xf32>
      %82 = vector.shape_cast %81 : vector<1x216x224xf32> to vector<216x224xf32>
      %cst_100 = arith.constant dense<0.000000e+00> : vector<14x224xf32>
      %83 = tpu.matmul %80, %82, %cst_100 {dimension_numbers = #tpu.dot_dimension_numbers<[1], [0], [0], [1], [0, 0, 1, 1], [], []>} : vector<14x216xf32>, vector<216x224xf32>, vector<14x224xf32> -> vector<14x224xf32>
      %84 = arith.addf %79, %83 : vector<14x224xf32>
      %c2_101 = arith.constant 2 : index
      %c0_102 = arith.constant 0 : index
      %85 = vector.load %arg14[%c2_101, %c0_102] : memref<16x216xf32, #tpu.memory_space<vmem>>, vector<14x216xf32>
      %c2_103 = arith.constant 2 : index
      %c0_104 = arith.constant 0 : index
      %c0_105 = arith.constant 0 : index
      %86 = vector.load %arg4[%c2_103, %c0_104, %c0_105] : memref<3x216x224xf32, #tpu.memory_space<vmem>>, vector<1x216x224xf32>
      %87 = vector.shape_cast %86 : vector<1x216x224xf32> to vector<216x224xf32>
      %cst_106 = arith.constant dense<0.000000e+00> : vector<14x224xf32>
      %88 = tpu.matmul %85, %87, %cst_106 {dimension_numbers = #tpu.dot_dimension_numbers<[1], [0], [0], [1], [0, 0, 1, 1], [], []>} : vector<14x216xf32>, vector<216x224xf32>, vector<14x224xf32> -> vector<14x224xf32>
      %89 = arith.addf %84, %88 : vector<14x224xf32>
      %cst_107 = arith.constant 0.000000e+00 : f32
      %90 = vector.broadcast %cst_107 : f32 to vector<14x224xf32>
      %91 = arith.maximumf %89, %90 : vector<14x224xf32>
      %c0_108 = arith.constant 0 : index
      %c0_109 = arith.constant 0 : index
      %92 = vector.load %arg15[%c0_108, %c0_109] : memref<14x224xf32, #tpu.memory_space<vmem>>, vector<14x224xf32>
      tpu.vector_store %arg15[%c0_108, %c0_109], %91 {strides = array<i32>} : memref<14x224xf32, #tpu.memory_space<vmem>>, vector<14x224xf32>,
      %c0_110 = arith.constant 0 : index
      %c0_111 = arith.constant 0 : index
      %93 = vector.load %arg15[%c0_110, %c0_111] : memref<14x224xf32, #tpu.memory_space<vmem>>, vector<13x208xf32>
      %c1_112 = arith.constant 1 : index
      %c0_113 = arith.constant 0 : index
      %94 = vector.load %arg15[%c1_112, %c0_113] : memref<14x224xf32, #tpu.memory_space<vmem>>, vector<13x208xf32>
      %95 = arith.maximumf %93, %94 : vector<13x208xf32>
      %c0_114 = arith.constant 0 : index
      %c16_115 = arith.constant 16 : index
      %96 = vector.load %arg15[%c0_114, %c16_115] : memref<14x224xf32, #tpu.memory_space<vmem>>, vector<13x208xf32>
      %c1_116 = arith.constant 1 : index
      %c16_117 = arith.constant 16 : index
      %97 = vector.load %arg15[%c1_116, %c16_117] : memref<14x224xf32, #tpu.memory_space<vmem>>, vector<13x208xf32>
      %98 = arith.maximumf %96, %97 : vector<13x208xf32>
      %99 = arith.maximumf %95, %98 : vector<13x208xf32>
      %c0_118 = arith.constant 0 : index
      %c0_119 = arith.constant 0 : index
      %100 = vector.load %arg16[%c0_118, %c0_119] : memref<13x208xf32, #tpu.memory_space<vmem>>, vector<13x208xf32>
      tpu.vector_store %arg16[%c0_118, %c0_119], %99 {strides = array<i32>} : memref<13x208xf32, #tpu.memory_space<vmem>>, vector<13x208xf32>,
      %c0_120 = arith.constant 0 : index
      %c0_121 = arith.constant 0 : index
      %101 = vector.load %arg16[%c0_120, %c0_121] : memref<13x208xf32, #tpu.memory_space<vmem>>, vector<1x208xf32>
      %c1_122 = arith.constant 1 : index
      %c0_123 = arith.constant 0 : index
      %102 = vector.load %arg17[%c1_122, %c0_123] : memref<9x208xf32, #tpu.memory_space<vmem>>, vector<1x208xf32>
      tpu.vector_store %arg17[%c1_122, %c0_123], %101 {strides = array<i32>} : memref<9x208xf32, #tpu.memory_space<vmem>>, vector<1x208xf32>,
      %c2_124 = arith.constant 2 : index
      %c0_125 = arith.constant 0 : index
      %103 = vector.load %arg16[%c2_124, %c0_125] : memref<13x208xf32, #tpu.memory_space<vmem>>, vector<1x208xf32>
      %c2_126 = arith.constant 2 : index
      %c0_127 = arith.constant 0 : index
      %104 = vector.load %arg17[%c2_126, %c0_127] : memref<9x208xf32, #tpu.memory_space<vmem>>, vector<1x208xf32>
      tpu.vector_store %arg17[%c2_126, %c0_127], %103 {strides = array<i32>} : memref<9x208xf32, #tpu.memory_space<vmem>>, vector<1x208xf32>,
      %c4_128 = arith.constant 4 : index
      %c0_129 = arith.constant 0 : index
      %105 = vector.load %arg16[%c4_128, %c0_129] : memref<13x208xf32, #tpu.memory_space<vmem>>, vector<1x208xf32>
      %c3_130 = arith.constant 3 : index
      %c0_131 = arith.constant 0 : index
      %106 = vector.load %arg17[%c3_130, %c0_131] : memref<9x208xf32, #tpu.memory_space<vmem>>, vector<1x208xf32>
      tpu.vector_store %arg17[%c3_130, %c0_131], %105 {strides = array<i32>} : memref<9x208xf32, #tpu.memory_space<vmem>>, vector<1x208xf32>,
      %c6_132 = arith.constant 6 : index
      %c0_133 = arith.constant 0 : index
      %107 = vector.load %arg16[%c6_132, %c0_133] : memref<13x208xf32, #tpu.memory_space<vmem>>, vector<1x208xf32>
      %c4_134 = arith.constant 4 : index
      %c0_135 = arith.constant 0 : index
      %108 = vector.load %arg17[%c4_134, %c0_135] : memref<9x208xf32, #tpu.memory_space<vmem>>, vector<1x208xf32>
      tpu.vector_store %arg17[%c4_134, %c0_135], %107 {strides = array<i32>} : memref<9x208xf32, #tpu.memory_space<vmem>>, vector<1x208xf32>,
      %c8_136 = arith.constant 8 : index
      %c0_137 = arith.constant 0 : index
      %109 = vector.load %arg16[%c8_136, %c0_137] : memref<13x208xf32, #tpu.memory_space<vmem>>, vector<1x208xf32>
      %c5_138 = arith.constant 5 : index
      %c0_139 = arith.constant 0 : index
      %110 = vector.load %arg17[%c5_138, %c0_139] : memref<9x208xf32, #tpu.memory_space<vmem>>, vector<1x208xf32>
      tpu.vector_store %arg17[%c5_138, %c0_139], %109 {strides = array<i32>} : memref<9x208xf32, #tpu.memory_space<vmem>>, vector<1x208xf32>,
      %c10_140 = arith.constant 10 : index
      %c0_141 = arith.constant 0 : index
      %111 = vector.load %arg16[%c10_140, %c0_141] : memref<13x208xf32, #tpu.memory_space<vmem>>, vector<1x208xf32>
      %c6_142 = arith.constant 6 : index
      %c0_143 = arith.constant 0 : index
      %112 = vector.load %arg17[%c6_142, %c0_143] : memref<9x208xf32, #tpu.memory_space<vmem>>, vector<1x208xf32>
      tpu.vector_store %arg17[%c6_142, %c0_143], %111 {strides = array<i32>} : memref<9x208xf32, #tpu.memory_space<vmem>>, vector<1x208xf32>,
      %c12_144 = arith.constant 12 : index
      %c0_145 = arith.constant 0 : index
      %113 = vector.load %arg16[%c12_144, %c0_145] : memref<13x208xf32, #tpu.memory_space<vmem>>, vector<1x208xf32>
      %c7_146 = arith.constant 7 : index
      %c0_147 = arith.constant 0 : index
      %114 = vector.load %arg17[%c7_146, %c0_147] : memref<9x208xf32, #tpu.memory_space<vmem>>, vector<1x208xf32>
      tpu.vector_store %arg17[%c7_146, %c0_147], %113 {strides = array<i32>} : memref<9x208xf32, #tpu.memory_space<vmem>>, vector<1x208xf32>,
      %c2_148 = arith.constant 2 : index
      %c0_149 = arith.constant 0 : index
      %115 = vector.load %arg16[%c2_148, %c0_149] : memref<13x208xf32, #tpu.memory_space<vmem>>, vector<1x208xf32>
      %c0_150 = arith.constant 0 : index
      %c0_151 = arith.constant 0 : index
      %116 = vector.load %arg17[%c0_150, %c0_151] : memref<9x208xf32, #tpu.memory_space<vmem>>, vector<1x208xf32>
      tpu.vector_store %arg17[%c0_150, %c0_151], %115 {strides = array<i32>} : memref<9x208xf32, #tpu.memory_space<vmem>>, vector<1x208xf32>,
      %c10_152 = arith.constant 10 : index
      %c0_153 = arith.constant 0 : index
      %117 = vector.load %arg16[%c10_152, %c0_153] : memref<13x208xf32, #tpu.memory_space<vmem>>, vector<1x208xf32>
      %c8_154 = arith.constant 8 : index
      %c0_155 = arith.constant 0 : index
      %118 = vector.load %arg17[%c8_154, %c0_155] : memref<9x208xf32, #tpu.memory_space<vmem>>, vector<1x208xf32>
      tpu.vector_store %arg17[%c8_154, %c0_155], %117 {strides = array<i32>} : memref<9x208xf32, #tpu.memory_space<vmem>>, vector<1x208xf32>,
      %cst_156 = arith.constant 0.000000e+00 : f32
      %119 = vector.broadcast %cst_156 : f32 to vector<7x224xf32>
      %c0_157 = arith.constant 0 : index
      %c0_158 = arith.constant 0 : index
      %120 = vector.load %arg7[%c0_157, %c0_158] : memref<1x224xf32, #tpu.memory_space<vmem>>, vector<1x224xf32>
      %121 = vector.broadcast %120 : vector<1x224xf32> to vector<7x224xf32>
      %122 = arith.addf %119, %121 : vector<7x224xf32>
      %c0_159 = arith.constant 0 : index
      %c0_160 = arith.constant 0 : index
      %123 = vector.load %arg17[%c0_159, %c0_160] : memref<9x208xf32, #tpu.memory_space<vmem>>, vector<7x208xf32>
      %c0_161 = arith.constant 0 : index
      %c0_162 = arith.constant 0 : index
      %c0_163 = arith.constant 0 : index
      %124 = vector.load %arg6[%c0_161, %c0_162, %c0_163] : memref<3x208x224xf32, #tpu.memory_space<vmem>>, vector<1x208x224xf32>
      %125 = vector.shape_cast %124 : vector<1x208x224xf32> to vector<208x224xf32>
      %cst_164 = arith.constant dense<0.000000e+00> : vector<7x224xf32>
      %126 = tpu.matmul %123, %125, %cst_164 {dimension_numbers = #tpu.dot_dimension_numbers<[1], [0], [0], [1], [0, 0, 1, 1], [], []>} : vector<7x208xf32>, vector<208x224xf32>, vector<7x224xf32> -> vector<7x224xf32>
      %127 = arith.addf %122, %126 : vector<7x224xf32>
      %c1_165 = arith.constant 1 : index
      %c0_166 = arith.constant 0 : index
      %128 = vector.load %arg17[%c1_165, %c0_166] : memref<9x208xf32, #tpu.memory_space<vmem>>, vector<7x208xf32>
      %c1_167 = arith.constant 1 : index
      %c0_168 = arith.constant 0 : index
      %c0_169 = arith.constant 0 : index
      %129 = vector.load %arg6[%c1_167, %c0_168, %c0_169] : memref<3x208x224xf32, #tpu.memory_space<vmem>>, vector<1x208x224xf32>
      %130 = vector.shape_cast %129 : vector<1x208x224xf32> to vector<208x224xf32>
      %cst_170 = arith.constant dense<0.000000e+00> : vector<7x224xf32>
      %131 = tpu.matmul %128, %130, %cst_170 {dimension_numbers = #tpu.dot_dimension_numbers<[1], [0], [0], [1], [0, 0, 1, 1], [], []>} : vector<7x208xf32>, vector<208x224xf32>, vector<7x224xf32> -> vector<7x224xf32>
      %132 = arith.addf %127, %131 : vector<7x224xf32>
      %c2_171 = arith.constant 2 : index
      %c0_172 = arith.constant 0 : index
      %133 = vector.load %arg17[%c2_171, %c0_172] : memref<9x208xf32, #tpu.memory_space<vmem>>, vector<7x208xf32>
      %c2_173 = arith.constant 2 : index
      %c0_174 = arith.constant 0 : index
      %c0_175 = arith.constant 0 : index
      %134 = vector.load %arg6[%c2_173, %c0_174, %c0_175] : memref<3x208x224xf32, #tpu.memory_space<vmem>>, vector<1x208x224xf32>
      %135 = vector.shape_cast %134 : vector<1x208x224xf32> to vector<208x224xf32>
      %cst_176 = arith.constant dense<0.000000e+00> : vector<7x224xf32>
      %136 = tpu.matmul %133, %135, %cst_176 {dimension_numbers = #tpu.dot_dimension_numbers<[1], [0], [0], [1], [0, 0, 1, 1], [], []>} : vector<7x208xf32>, vector<208x224xf32>, vector<7x224xf32> -> vector<7x224xf32>
      %137 = arith.addf %132, %136 : vector<7x224xf32>
      %cst_177 = arith.constant 0.000000e+00 : f32
      %138 = vector.broadcast %cst_177 : f32 to vector<7x224xf32>
      %139 = arith.maximumf %137, %138 : vector<7x224xf32>
      %c0_178 = arith.constant 0 : index
      %c0_179 = arith.constant 0 : index
      %140 = vector.load %arg18[%c0_178, %c0_179] : memref<7x224xf32, #tpu.memory_space<vmem>>, vector<7x224xf32>
      tpu.vector_store %arg18[%c0_178, %c0_179], %139 {strides = array<i32>} : memref<7x224xf32, #tpu.memory_space<vmem>>, vector<7x224xf32>,
      %cst_180 = arith.constant 0.000000e+00 : f32
      %141 = vector.broadcast %cst_180 : f32 to vector<1x10xf32>
      %c0_181 = arith.constant 0 : index
      %c0_182 = arith.constant 0 : index
      %142 = vector.load %arg9[%c0_181, %c0_182] : memref<1x10xf32, #tpu.memory_space<vmem>>, vector<1x10xf32>
      %143 = arith.addf %141, %142 : vector<1x10xf32>
      %c0_183 = arith.constant 0 : index
      %c0_184 = arith.constant 0 : index
      %144 = vector.load %arg18[%c0_183, %c0_184] : memref<7x224xf32, #tpu.memory_space<vmem>>, vector<1x224xf32>
      %c0_185 = arith.constant 0 : index
      %c0_186 = arith.constant 0 : index
      %c0_187 = arith.constant 0 : index
      %145 = vector.load %arg8[%c0_185, %c0_186, %c0_187] : memref<7x224x10xf32, #tpu.memory_space<vmem>>, vector<1x224x10xf32>
      %146 = vector.shape_cast %145 : vector<1x224x10xf32> to vector<224x10xf32>
      %cst_188 = arith.constant dense<0.000000e+00> : vector<1x10xf32>
      %147 = tpu.matmul %144, %146, %cst_188 {dimension_numbers = #tpu.dot_dimension_numbers<[1], [0], [0], [1], [0, 0, 1, 1], [], []>} : vector<1x224xf32>, vector<224x10xf32>, vector<1x10xf32> -> vector<1x10xf32>
      %148 = arith.addf %143, %147 : vector<1x10xf32>
      %c1_189 = arith.constant 1 : index
      %c0_190 = arith.constant 0 : index
      %149 = vector.load %arg18[%c1_189, %c0_190] : memref<7x224xf32, #tpu.memory_space<vmem>>, vector<1x224xf32>
      %c1_191 = arith.constant 1 : index
      %c0_192 = arith.constant 0 : index
      %c0_193 = arith.constant 0 : index
      %150 = vector.load %arg8[%c1_191, %c0_192, %c0_193] : memref<7x224x10xf32, #tpu.memory_space<vmem>>, vector<1x224x10xf32>
      %151 = vector.shape_cast %150 : vector<1x224x10xf32> to vector<224x10xf32>
      %cst_194 = arith.constant dense<0.000000e+00> : vector<1x10xf32>
      %152 = tpu.matmul %149, %151, %cst_194 {dimension_numbers = #tpu.dot_dimension_numbers<[1], [0], [0], [1], [0, 0, 1, 1], [], []>} : vector<1x224xf32>, vector<224x10xf32>, vector<1x10xf32> -> vector<1x10xf32>
      %153 = arith.addf %148, %152 : vector<1x10xf32>
      %c2_195 = arith.constant 2 : index
      %c0_196 = arith.constant 0 : index
      %154 = vector.load %arg18[%c2_195, %c0_196] : memref<7x224xf32, #tpu.memory_space<vmem>>, vector<1x224xf32>
      %c2_197 = arith.constant 2 : index
      %c0_198 = arith.constant 0 : index
      %c0_199 = arith.constant 0 : index
      %155 = vector.load %arg8[%c2_197, %c0_198, %c0_199] : memref<7x224x10xf32, #tpu.memory_space<vmem>>, vector<1x224x10xf32>
      %156 = vector.shape_cast %155 : vector<1x224x10xf32> to vector<224x10xf32>
      %cst_200 = arith.constant dense<0.000000e+00> : vector<1x10xf32>
      %157 = tpu.matmul %154, %156, %cst_200 {dimension_numbers = #tpu.dot_dimension_numbers<[1], [0], [0], [1], [0, 0, 1, 1], [], []>} : vector<1x224xf32>, vector<224x10xf32>, vector<1x10xf32> -> vector<1x10xf32>
      %158 = arith.addf %153, %157 : vector<1x10xf32>
      %c3_201 = arith.constant 3 : index
      %c0_202 = arith.constant 0 : index
      %159 = vector.load %arg18[%c3_201, %c0_202] : memref<7x224xf32, #tpu.memory_space<vmem>>, vector<1x224xf32>
      %c3_203 = arith.constant 3 : index
      %c0_204 = arith.constant 0 : index
      %c0_205 = arith.constant 0 : index
      %160 = vector.load %arg8[%c3_203, %c0_204, %c0_205] : memref<7x224x10xf32, #tpu.memory_space<vmem>>, vector<1x224x10xf32>
      %161 = vector.shape_cast %160 : vector<1x224x10xf32> to vector<224x10xf32>
      %cst_206 = arith.constant dense<0.000000e+00> : vector<1x10xf32>
      %162 = tpu.matmul %159, %161, %cst_206 {dimension_numbers = #tpu.dot_dimension_numbers<[1], [0], [0], [1], [0, 0, 1, 1], [], []>} : vector<1x224xf32>, vector<224x10xf32>, vector<1x10xf32> -> vector<1x10xf32>
      %163 = arith.addf %158, %162 : vector<1x10xf32>
      %c4_207 = arith.constant 4 : index
      %c0_208 = arith.constant 0 : index
      %164 = vector.load %arg18[%c4_207, %c0_208] : memref<7x224xf32, #tpu.memory_space<vmem>>, vector<1x224xf32>
      %c4_209 = arith.constant 4 : index
      %c0_210 = arith.constant 0 : index
      %c0_211 = arith.constant 0 : index
      %165 = vector.load %arg8[%c4_209, %c0_210, %c0_211] : memref<7x224x10xf32, #tpu.memory_space<vmem>>, vector<1x224x10xf32>
      %166 = vector.shape_cast %165 : vector<1x224x10xf32> to vector<224x10xf32>
      %cst_212 = arith.constant dense<0.000000e+00> : vector<1x10xf32>
      %167 = tpu.matmul %164, %166, %cst_212 {dimension_numbers = #tpu.dot_dimension_numbers<[1], [0], [0], [1], [0, 0, 1, 1], [], []>} : vector<1x224xf32>, vector<224x10xf32>, vector<1x10xf32> -> vector<1x10xf32>
      %168 = arith.addf %163, %167 : vector<1x10xf32>
      %c5_213 = arith.constant 5 : index
      %c0_214 = arith.constant 0 : index
      %169 = vector.load %arg18[%c5_213, %c0_214] : memref<7x224xf32, #tpu.memory_space<vmem>>, vector<1x224xf32>
      %c5_215 = arith.constant 5 : index
      %c0_216 = arith.constant 0 : index
      %c0_217 = arith.constant 0 : index
      %170 = vector.load %arg8[%c5_215, %c0_216, %c0_217] : memref<7x224x10xf32, #tpu.memory_space<vmem>>, vector<1x224x10xf32>
      %171 = vector.shape_cast %170 : vector<1x224x10xf32> to vector<224x10xf32>
      %cst_218 = arith.constant dense<0.000000e+00> : vector<1x10xf32>
      %172 = tpu.matmul %169, %171, %cst_218 {dimension_numbers = #tpu.dot_dimension_numbers<[1], [0], [0], [1], [0, 0, 1, 1], [], []>} : vector<1x224xf32>, vector<224x10xf32>, vector<1x10xf32> -> vector<1x10xf32>
      %173 = arith.addf %168, %172 : vector<1x10xf32>
      %c6_219 = arith.constant 6 : index
      %c0_220 = arith.constant 0 : index
      %174 = vector.load %arg18[%c6_219, %c0_220] : memref<7x224xf32, #tpu.memory_space<vmem>>, vector<1x224xf32>
      %c6_221 = arith.constant 6 : index
      %c0_222 = arith.constant 0 : index
      %c0_223 = arith.constant 0 : index
      %175 = vector.load %arg8[%c6_221, %c0_222, %c0_223] : memref<7x224x10xf32, #tpu.memory_space<vmem>>, vector<1x224x10xf32>
      %176 = vector.shape_cast %175 : vector<1x224x10xf32> to vector<224x10xf32>
      %cst_224 = arith.constant dense<0.000000e+00> : vector<1x10xf32>
      %177 = tpu.matmul %174, %176, %cst_224 {dimension_numbers = #tpu.dot_dimension_numbers<[1], [0], [0], [1], [0, 0, 1, 1], [], []>} : vector<1x224xf32>, vector<224x10xf32>, vector<1x10xf32> -> vector<1x10xf32>
      %178 = arith.addf %173, %177 : vector<1x10xf32>
      %cst_225 = arith.constant dense<0xFF800000> : vector<1xf32>
      %179 = vector.multi_reduction <maximumf>, %178, %cst_225 [1] : vector<1x10xf32> to vector<1xf32>
      %180 = vector.shape_cast %179 : vector<1xf32> to vector<1x1xf32>
      %181 = vector.broadcast %180 : vector<1x1xf32> to vector<1x10xf32>
      %182 = arith.subf %178, %181 : vector<1x10xf32>
      %183 = math.exp %182 : vector<1x10xf32>
      %cst_226 = arith.constant dense<0.000000e+00> : vector<1xf32>
      %184 = vector.multi_reduction <add>, %183, %cst_226 [1] : vector<1x10xf32> to vector<1xf32>
      %185 = vector.shape_cast %184 : vector<1xf32> to vector<1x1xf32>
      %186 = math.log %185 : vector<1x1xf32>
      %187 = vector.broadcast %186 : vector<1x1xf32> to vector<1x10xf32>
      %188 = arith.subf %182, %187 : vector<1x10xf32>
      %189 = arith.index_cast %arg19 : i32 to index
      %c0_227 = arith.constant 0 : index
      %190 = vector.load %arg10[%189, %c0_227] : memref<2x10xf32, #tpu.memory_space<vmem>>, vector<1x10xf32>
      tpu.vector_store %arg10[%189, %c0_227], %188 {strides = array<i32>} : memref<2x10xf32, #tpu.memory_space<vmem>>, vector<1x10xf32>,
    }
    %c2_i32_0 = arith.constant 2 : i32
    return
  }
  func.func @transform_0(%arg0: i32) -> (i32, i32, i32) {
    %c0_i32 = arith.constant 0 : i32
    %c0_i32_0 = arith.constant 0 : i32
    %c0_i32_1 = arith.constant 0 : i32
    return %arg0, %c0_i32, %c0_i32_0 : i32, i32, i32
  }
  func.func @transform_1(%arg0: i32) -> (i32, i32, i32) {
    %c0_i32 = arith.constant 0 : i32
    %c0_i32_0 = arith.constant 0 : i32
    %c0_i32_1 = arith.constant 0 : i32
    %c0_i32_2 = arith.constant 0 : i32
    return %c0_i32, %c0_i32_0, %c0_i32_1 : i32, i32, i32
  }
  func.func @transform_2(%arg0: i32) -> (i32, i32) {
    %c0_i32 = arith.constant 0 : i32
    %c0_i32_0 = arith.constant 0 : i32
    %c0_i32_1 = arith.constant 0 : i32
    return %c0_i32, %c0_i32_0 : i32, i32
  }
  func.func @transform_3(%arg0: i32) -> (i32, i32, i32) {
    %c0_i32 = arith.constant 0 : i32
    %c0_i32_0 = arith.constant 0 : i32
    %c0_i32_1 = arith.constant 0 : i32
    %c0_i32_2 = arith.constant 0 : i32
    return %c0_i32, %c0_i32_0, %c0_i32_1 : i32, i32, i32
  }
  func.func @transform_4(%arg0: i32) -> (i32, i32) {
    %c0_i32 = arith.constant 0 : i32
    %c0_i32_0 = arith.constant 0 : i32
    %c0_i32_1 = arith.constant 0 : i32
    return %c0_i32, %c0_i32_0 : i32, i32
  }
  func.func @transform_5(%arg0: i32) -> (i32, i32, i32) {
    %c0_i32 = arith.constant 0 : i32
    %c0_i32_0 = arith.constant 0 : i32
    %c0_i32_1 = arith.constant 0 : i32
    %c0_i32_2 = arith.constant 0 : i32
    return %c0_i32, %c0_i32_0, %c0_i32_1 : i32, i32, i32
  }
  func.func @transform_6(%arg0: i32) -> (i32, i32) {
    %c0_i32 = arith.constant 0 : i32
    %c0_i32_0 = arith.constant 0 : i32
    %c0_i32_1 = arith.constant 0 : i32
    return %c0_i32, %c0_i32_0 : i32, i32
  }
  func.func @transform_7(%arg0: i32) -> (i32, i32, i32) {
    %c0_i32 = arith.constant 0 : i32
    %c0_i32_0 = arith.constant 0 : i32
    %c0_i32_1 = arith.constant 0 : i32
    %c0_i32_2 = arith.constant 0 : i32
    return %c0_i32, %c0_i32_0, %c0_i32_1 : i32, i32, i32
  }
  func.func @transform_8(%arg0: i32) -> (i32, i32) {
    %c0_i32 = arith.constant 0 : i32
    %c0_i32_0 = arith.constant 0 : i32
    %c0_i32_1 = arith.constant 0 : i32
    return %c0_i32, %c0_i32_0 : i32, i32
  }
  func.func @transform_9(%arg0: i32) -> (i32, i32) {
    %c0_i32 = arith.constant 0 : i32
    %c0_i32_0 = arith.constant 0 : i32
    return %arg0, %c0_i32 : i32, i32
  }
}

</mosaic_0001>

<llo_original>
// kernel: net_forward.1
$region0: #{net_forward.1}
  #allocation0 [shape = 'u32[]', space=smem, size = 0x4, offset = 0x4, fixed_abs, tag = 'smem constant byte address 0x4 - core index']
  #allocation1 [shape = 'u32[144,128]{1,0:T(1,128)}', space=vmem, size = 0x12000, scoped, tag = 'internal scratch']
  #allocation2 [shape = 'f32[30,28]{1,0:T(8,128)}', space=vmem, size = 0x4000, scoped, tag = 'scratch operand']
  #allocation3 [shape = 'f32[28,224]{1,0:T(8,128)}', space=vmem, size = 0x8000, scoped, tag = 'scratch operand']
  #allocation4 [shape = 'f32[27,216]{1,0:T(8,128)}', space=vmem, size = 0x8000, scoped, tag = 'scratch operand']
  #allocation5 [shape = 'f32[16,216]{1,0:T(8,128)}', space=vmem, size = 0x4000, scoped, tag = 'scratch operand']
  #allocation6 [shape = 'f32[14,224]{1,0:T(8,128)}', space=vmem, size = 0x4000, scoped, tag = 'scratch operand']
  #allocation7 [shape = 'f32[13,208]{1,0:T(8,128)}', space=vmem, size = 0x4000, scoped, tag = 'scratch operand']
  #allocation8 [shape = 'f32[9,208]{1,0:T(8,128)}', space=vmem, size = 0x4000, scoped, tag = 'scratch operand']
  #allocation9 [shape = 'f32[7,224]{1,0:T(8,128)}', space=vmem, size = 0x2000, scoped, tag = 'scratch operand']
  %s0 = inlined_call_operand.vmem [shape: f32[2,28,28], index: 0, kind: input, shape index: {}]
  %s1 = inlined_call_operand.vmem [shape: f32[3,28,224], index: 1, kind: input, shape index: {}]
  %s2 = inlined_call_operand.vmem [shape: f32[1,224], index: 2, kind: input, shape index: {}]
  %s3 = inlined_call_operand.vmem [shape: f32[3,216,224], index: 3, kind: input, shape index: {}]
  %s4 = inlined_call_operand.vmem [shape: f32[1,224], index: 4, kind: input, shape index: {}]
  %s5 = inlined_call_operand.vmem [shape: f32[3,208,224], index: 5, kind: input, shape index: {}]
  %s6 = inlined_call_operand.vmem [shape: f32[1,224], index: 6, kind: input, shape index: {}]
  %s7 = inlined_call_operand.vmem [shape: f32[7,224,10], index: 7, kind: input, shape index: {}]
  %s8 = inlined_call_operand.vmem [shape: f32[1,10], index: 8, kind: input, shape index: {}]
  %s9 = inlined_call_operand.hbm [shape: f32[2,10], index: 9, kind: output, shape index: {}]
  %s10 = sld [smem:[#allocation0]]
  $region53: #{net_forward.1} parent=0
    _
  %s12 = ssub.s32 1, %s10
  %s13 = scalar_select 0, %s12, %s10
  $region1: #{net_forward.1} parent=0
    #allocation10 [shape = 'u8[1024]{0}', space=vmem, size = 0x400, scoped, tag = 'output window, operand 0, single buffered']
    #allocation11 [shape = 's32[1]{0}', space=sflag, size = 0x4, scoped, tag = 'scoped memory for net_forward.1']
    %14 = vsyncpa [#allocation11], 0
    // Predicated region
    $region2: #{net_forward.1} parent=1 // pred_check
      _
    $region3: #{net_forward.1} parent=1 // pred_check_branch
      %16 = sbr.rel (0) target = $region5
    $region4: #{net_forward.1} parent=1 // pred_region
      _
    $region5: #{net_forward.1} parent=1 // pred_fallthru
      _
    // Predicated region
    $region6: #{net_forward.1} parent=1 // pred_check
      _
    $region7: #{net_forward.1} parent=1 // pred_check_branch
      %18 = sbr.rel (0) target = $region9
    $region8: #{net_forward.1} parent=1 // pred_region
      _
    $region9: #{net_forward.1} parent=1 // pred_fallthru
      _
    // Predicated region
    $region10: #{net_forward.1} parent=1 // pred_check
      _
    $region11: #{net_forward.1} parent=1 // pred_check_branch
      %20 = sbr.rel (0) target = $region13
    $region12: #{net_forward.1} parent=1 // pred_region
      _
    $region13: #{net_forward.1} parent=1 // pred_fallthru
      _
    // Predicated region
    $region14: #{net_forward.1} parent=1 // pred_check
      _
    $region15: #{net_forward.1} parent=1 // pred_check_branch
      %22 = sbr.rel (0) target = $region17
    $region16: #{net_forward.1} parent=1 // pred_region
      _
    $region17: #{net_forward.1} parent=1 // pred_fallthru
      _
    // Predicated region
    $region18: #{net_forward.1} parent=1 // pred_check
      _
    $region19: #{net_forward.1} parent=1 // pred_check_branch
      %24 = sbr.rel (0) target = $region21
    $region20: #{net_forward.1} parent=1 // pred_region
      _
    $region21: #{net_forward.1} parent=1 // pred_fallthru
      _
    // Predicated region
    $region22: #{net_forward.1} parent=1 // pred_check
      _
    $region23: #{net_forward.1} parent=1 // pred_check_branch
      %26 = sbr.rel (0) target = $region25
    $region24: #{net_forward.1} parent=1 // pred_region
      _
    $region25: #{net_forward.1} parent=1 // pred_fallthru
      _
    // Predicated region
    $region26: #{net_forward.1} parent=1 // pred_check
      _
    $region27: #{net_forward.1} parent=1 // pred_check_branch
      %28 = sbr.rel (0) target = $region29
    $region28: #{net_forward.1} parent=1 // pred_region
      _
    $region29: #{net_forward.1} parent=1 // pred_fallthru
      _
    // Predicated region
    $region30: #{net_forward.1} parent=1 // pred_check
      _
    $region31: #{net_forward.1} parent=1 // pred_check_branch
      %30 = sbr.rel (0) target = $region33
    $region32: #{net_forward.1} parent=1 // pred_region
      _
    $region33: #{net_forward.1} parent=1 // pred_fallthru
      _
    // Predicated region
    $region34: #{net_forward.1} parent=1 // pred_check
      _
    $region35: #{net_forward.1} parent=1 // pred_check_branch
      %32 = sbr.rel (0) target = $region37
    $region36: #{net_forward.1} parent=1 // pred_region
      _
    $region37: #{net_forward.1} parent=1 // pred_fallthru
      _
    loop: start=0, step=1, limit=2
    $region38: #{net_forward.1} parent=1 // loop_pre_header
      _
    $region39: #{net_forward.1} parent=1 // loop_header
      %s34 = sphi 0, %s38
      %p35 = scmp.ge.s32.totalorder %s34, 2
    $region40: #{net_forward.1} parent=1 // loop_header_branch
      %37 = sbr.rel (%p35) target = $region44
    $region41: #{net_forward.1} parent=1 // loop_body
      %s39 = smul.u32 %s34, 32
      %s40 = scalar_lea.vmem %s0, %s39
      %v41 = vld [vmem:[%s40] sm:$0xff]
      %v42 = vld [vmem:[%s40 + $0x8] sm:$0xff]
      %v43 = vld [vmem:[%s40 + $0x10] sm:$0xff]
      %v44 = vld [vmem:[%s40 + $0x18] sm:$0xf]
      %vm45 = vcmask 228352
      %46 = vst.msk [vmem:[#allocation2 + $0x1] sm:$0xff] %vm45, %v41
      %47 = vst.msk [vmem:[#allocation2 + $0x9] sm:$0xff] %vm45, %v42
      %48 = vst.msk [vmem:[#allocation2 + $0x11] sm:$0xff] %vm45, %v43
      %vm49 = vcmask 224256
      %50 = vst.msk [vmem:[#allocation2 + $0x19] sm:$0xf] %vm49, %v44
      %v51 = vld [vmem:[#allocation2 + $0x2] sm:$0x1]
      %vm52 = vcmask 221184
      %53 = vst.msk [vmem:[#allocation2] sm:$0x1] %vm52, %v51
      %v54 = vld [vmem:[#allocation2 + $0x1b] sm:$0x1]
      %55 = vst.msk [vmem:[#allocation2 + $0x1d] sm:$0x1] %vm52, %v54
      %v56 = vld [vmem:[%s2] sm:$0x3]
      %v58 = vlaneseq
      %v59 = vshrl.u32 %v58, 7
      %v60 = vsub.s32 0, %v59
      %v61 = vrot.slane %v56, %v60
      %v62 = vlaneseq
      %v63 = vshrl.u32 %v62, 7
      %v64 = vsub.s32 1, %v63
      %v65 = vrot.slane %v56, %v64
      %v68 = vadd.f32 %v61, 0.0
      %v69 = vadd.f32 %v65, 0.0
      %v70 = vld [vmem:[#allocation2] sm:$0xff]
      %v71 = vld [vmem:[#allocation2 + $0x8] sm:$0xff]
      %v72 = vld [vmem:[#allocation2 + $0x10] sm:$0xff]
      %v73 = vld [vmem:[#allocation2 + $0x18] sm:$0xf]
      %v74 = vld [vmem:[%s1] sm:$0xff]
      %v75 = vld [vmem:[%s1 + $0x8] sm:$0xff]
      %v76 = vld [vmem:[%s1 + $0x10] sm:$0xff]
      %v77 = vld [vmem:[%s1 + $0x18] sm:$0xff]
      %v78 = vld [vmem:[%s1 + $0x20] sm:$0xff]
      %v79 = vld [vmem:[%s1 + $0x28] sm:$0xff]
      %v80 = vld [vmem:[%s1 + $0x30] sm:$0xf]
      %v81 = vld [vmem:[%s1 + $0x38] sm:$0xf]
      %v83 = vsel %vm45, %v70, 0
      %v86 = vsel %vm45, %v71, 0
      %v89 = vsel %vm45, %v72, 0
      %v92 = vsel %vm45, %v73, 0
      %vm94 = vcmask 1043456
      %v96 = vsel %vm94, %v80, 0
      %v99 = vsel %vm94, %v81, 0
      %101 = vmatprep.subr.mxu0 %v75
      %102 = vmatpush1.msra.mxu0 %v74
      %103 = vmatprep.subr.mxu0 %v77
      %104 = vmatpush1.msra.mxu0 %v76
      %105 = vmatprep.subr.mxu0 %v79
      %106 = vmatpush1.msra.mxu0 %v78
      %107 = vmatprep.subr.mxu0 %v99
      %108 = vmatpush1.msra.mxu0 %v96
      %109 = vmatprep.subr.mxu0 0.0
      %110 = vmatpush1.msra.mxu0 0.0
      %111 = vmatprep.subr.mxu0 0.0
      %112 = vmatpush1.msra.mxu0 0.0
      %113 = vmatprep.subr.mxu0 0.0
      %114 = vmatpush1.msra.mxu0 0.0
      %115 = vmatprep.subr.mxu0 0.0
      %116 = vmatpush1.msra.mxu0 0.0
      %117 = vmatprep.subr.mxu0 0.0
      %118 = vmatpush1.msra.mxu0 0.0
      %119 = vmatprep.subr.mxu0 0.0
      %120 = vmatpush1.msra.mxu0 0.0
      %121 = vmatprep.subr.mxu0 0.0
      %122 = vmatpush1.msra.mxu0 0.0
      %123 = vmatprep.subr.mxu0 0.0
      %124 = vmatpush1.msra.mxu0 0.0
      %125 = vmatprep.subr.mxu0 0.0
      %126 = vmatpush1.msra.mxu0 0.0
      %127 = vmatprep.subr.mxu0 0.0
      %128 = vmatpush1.msra.mxu0 0.0
      %129 = vmatprep.subr.mxu0 0.0
      %130 = vmatpush1.msra.mxu0 0.0
      %131 = vmatprep.subr.mxu0 0.0
      %132 = vmatpush1.msra.mxu0 0.0
      %133 = vmatprep.subr.mxu0 0.0
      %134 = vmatpush1.msra.mxu0 0.0
      %135 = vmatprep.subr.mxu0 0.0
      %136 = vmatpush1.msra.mxu0 0.0
      %137 = vmatprep.subr.mxu0 0.0
      %138 = vmatpush1.msra.mxu0 0.0
      %139 = vmatprep.subr.mxu0 0.0
      %140 = vmatpush1.msra.mxu0 0.0
      %141 = vmatprep.subr.mxu0 0.0
      %142 = vmatpush1.msra.mxu0 0.0
      %143 = vmatprep.subr.mxu0 0.0
      %144 = vmatpush1.msra.mxu0 0.0
      %145 = vmatprep.subr.mxu0 0.0
      %146 = vmatpush1.msra.mxu0 0.0
      %147 = vmatprep.subr.mxu0 0.0
      %148 = vmatpush1.msra.mxu0 0.0
      %149 = vmatprep.subr.mxu0 0.0
      %150 = vmatpush1.msra.mxu0 0.0
      %151 = vmatprep.subr.mxu0 0.0
      %152 = vmatpush1.msra.mxu0 0.0
      %153 = vmatprep.subr.mxu0 0.0
      %154 = vmatpush1.msra.mxu0 0.0
      %155 = vmatprep.subr.mxu0 0.0
      %156 = vmatpush1.msra.mxu0 0.0
      %157 = vmatprep.subr.mxu0 0.0
      %158 = vmatpush1.msra.mxu0 0.0
      %159 = vmatprep.subr.mxu0 0.0
      %160 = vmatpush1.msra.mxu0 0.0
      %161 = vmatprep.subr.mxu0 0.0
      %162 = vmatpush1.msra.mxu0 0.0
      %163 = vmatprep.subr.mxu0 0.0
      %164 = vmatpush1.msra.mxu0 0.0
      %165 = vmatprep.mubr.f32.mxu0 0.0
      %166 = vmatmul.mubr.f32.gmra.mrb[0].mxu0 %v83
      %v167 = vpop.f32.mrb[0].mxu0
      %v168 = vadd.f32 0.0, %v167
      %v169 = vpop.f32.mrb[0].mxu0
      %v170 = vadd.f32 0.0, %v169
      %171 = vmatprep.mubr.f32.mxu0 0.0
      %172 = vmatmul.mubr.f32.gmra.mrb[0].mxu0 %v86
      %v173 = vpop.f32.mrb[0].mxu0
      %v174 = vadd.f32 0.0, %v173
      %v175 = vpop.f32.mrb[0].mxu0
      %v176 = vadd.f32 0.0, %v175
      %177 = vmatprep.mubr.f32.mxu0 0.0
      %178 = vmatmul.mubr.f32.gmra.mrb[0].mxu0 %v89
      %v179 = vpop.f32.mrb[0].mxu0
      %v180 = vadd.f32 0.0, %v179
      %v181 = vpop.f32.mrb[0].mxu0
      %v182 = vadd.f32 0.0, %v181
      %183 = vmatprep.mubr.f32.mxu0 0.0
      %184 = vmatmul.mubr.f32.gmra.mrb[0].mxu0 %v92
      %v185 = vpop.f32.mrb[0].mxu0
      %v186 = vadd.f32 0.0, %v185
      %v187 = vpop.f32.mrb[0].mxu0
      %v188 = vadd.f32 0.0, %v187
      %189 = vdwg.mxu0
      %v190 = vadd.f32 %v68, %v168
      %v191 = vadd.f32 %v69, %v170
      %v192 = vadd.f32 %v68, %v174
      %v193 = vadd.f32 %v69, %v176
      %v194 = vadd.f32 %v68, %v180
      %v195 = vadd.f32 %v69, %v182
      %v196 = vadd.f32 %v68, %v186
      %v197 = vadd.f32 %v69, %v188
      %v198 = vld [vmem:[#allocation2 + $0x1] sm:$0xff]
      %v199 = vld [vmem:[#allocation2 + $0x9] sm:$0xff]
      %v200 = vld [vmem:[#allocation2 + $0x11] sm:$0xff]
      %v201 = vld [vmem:[#allocation2 + $0x19] sm:$0xf]
      %s202 = scalar_lea.vmem %s1, 64
      %v203 = vld [vmem:[%s202] sm:$0xff]
      %v204 = vld [vmem:[%s202 + $0x8] sm:$0xff]
      %v205 = vld [vmem:[%s202 + $0x10] sm:$0xff]
      %v206 = vld [vmem:[%s202 + $0x18] sm:$0xff]
      %v207 = vld [vmem:[%s202 + $0x20] sm:$0xff]
      %v208 = vld [vmem:[%s202 + $0x28] sm:$0xff]
      %v209 = vld [vmem:[%s202 + $0x30] sm:$0xf]
      %v210 = vld [vmem:[%s202 + $0x38] sm:$0xf]
      %v212 = vsel %vm45, %v198, 0
      %v215 = vsel %vm45, %v199, 0
      %v218 = vsel %vm45, %v200, 0
      %v221 = vsel %vm45, %v201, 0
      %v224 = vsel %vm94, %v209, 0
      %v227 = vsel %vm94, %v210, 0
      %229 = vmatprep.subr.mxu0 %v204
      %230 = vmatpush1.msra.mxu0 %v203
      %231 = vmatprep.subr.mxu0 %v206
      %232 = vmatpush1.msra.mxu0 %v205
      %233 = vmatprep.subr.mxu0 %v208
      %234 = vmatpush1.msra.mxu0 %v207
      %235 = vmatprep.subr.mxu0 %v227
      %236 = vmatpush1.msra.mxu0 %v224
      %237 = vmatprep.subr.mxu0 0.0
      %238 = vmatpush1.msra.mxu0 0.0
      %239 = vmatprep.subr.mxu0 0.0
      %240 = vmatpush1.msra.mxu0 0.0
      %241 = vmatprep.subr.mxu0 0.0
      %242 = vmatpush1.msra.mxu0 0.0
      %243 = vmatprep.subr.mxu0 0.0
      %244 = vmatpush1.msra.mxu0 0.0
      %245 = vmatprep.subr.mxu0 0.0
      %246 = vmatpush1.msra.mxu0 0.0
      %247 = vmatprep.subr.mxu0 0.0
      %248 = vmatpush1.msra.mxu0 0.0
      %249 = vmatprep.subr.mxu0 0.0
      %250 = vmatpush1.msra.mxu0 0.0
      %251 = vmatprep.subr.mxu0 0.0
      %252 = vmatpush1.msra.mxu0 0.0
      %253 = vmatprep.subr.mxu0 0.0
      %254 = vmatpush1.msra.mxu0 0.0
      %255 = vmatprep.subr.mxu0 0.0
      %256 = vmatpush1.msra.mxu0 0.0
      %257 = vmatprep.subr.mxu0 0.0
      %258 = vmatpush1.msra.mxu0 0.0
      %259 = vmatprep.subr.mxu0 0.0
      %260 = vmatpush1.msra.mxu0 0.0
      %261 = vmatprep.subr.mxu0 0.0
      %262 = vmatpush1.msra.mxu0 0.0
      %263 = vmatprep.subr.mxu0 0.0
      %264 = vmatpush1.msra.mxu0 0.0
      %265 = vmatprep.subr.mxu0 0.0
      %266 = vmatpush1.msra.mxu0 0.0
      %267 = vmatprep.subr.mxu0 0.0
      %268 = vmatpush1.msra.mxu0 0.0
      %269 = vmatprep.subr.mxu0 0.0
      %270 = vmatpush1.msra.mxu0 0.0
      %271 = vmatprep.subr.mxu0 0.0
      %272 = vmatpush1.msra.mxu0 0.0
      %273 = vmatprep.subr.mxu0 0.0
      %274 = vmatpush1.msra.mxu0 0.0
      %275 = vmatprep.subr.mxu0 0.0
      %276 = vmatpush1.msra.mxu0 0.0
      %277 = vmatprep.subr.mxu0 0.0
      %278 = vmatpush1.msra.mxu0 0.0
      %279 = vmatprep.subr.mxu0 0.0
      %280 = vmatpush1.msra.mxu0 0.0
      %281 = vmatprep.subr.mxu0 0.0
      %282 = vmatpush1.msra.mxu0 0.0
      %283 = vmatprep.subr.mxu0 0.0
      %284 = vmatpush1.msra.mxu0 0.0
      %285 = vmatprep.subr.mxu0 0.0
      %286 = vmatpush1.msra.mxu0 0.0
      %287 = vmatprep.subr.mxu0 0.0
      %288 = vmatpush1.msra.mxu0 0.0
      %289 = vmatprep.subr.mxu0 0.0
      %290 = vmatpush1.msra.mxu0 0.0
      %291 = vmatprep.subr.mxu0 0.0
      %292 = vmatpush1.msra.mxu0 0.0
      %293 = vmatprep.mubr.f32.mxu0 0.0
      %294 = vmatmul.mubr.f32.gmra.mrb[0].mxu0 %v212
      %v295 = vpop.f32.mrb[0].mxu0
      %v296 = vadd.f32 0.0, %v295
      %v297 = vpop.f32.mrb[0].mxu0
      %v298 = vadd.f32 0.0, %v297
      %299 = vmatprep.mubr.f32.mxu0 0.0
      %300 = vmatmul.mubr.f32.gmra.mrb[0].mxu0 %v215
      %v301 = vpop.f32.mrb[0].mxu0
      %v302 = vadd.f32 0.0, %v301
      %v303 = vpop.f32.mrb[0].mxu0
      %v304 = vadd.f32 0.0, %v303
      %305 = vmatprep.mubr.f32.mxu0 0.0
      %306 = vmatmul.mubr.f32.gmra.mrb[0].mxu0 %v218
      %v307 = vpop.f32.mrb[0].mxu0
      %v308 = vadd.f32 0.0, %v307
      %v309 = vpop.f32.mrb[0].mxu0
      %v310 = vadd.f32 0.0, %v309
      %311 = vmatprep.mubr.f32.mxu0 0.0
      %312 = vmatmul.mubr.f32.gmra.mrb[0].mxu0 %v221
      %v313 = vpop.f32.mrb[0].mxu0
      %v314 = vadd.f32 0.0, %v313
      %v315 = vpop.f32.mrb[0].mxu0
      %v316 = vadd.f32 0.0, %v315
      %317 = vdwg.mxu0
      %v318 = vadd.f32 %v190, %v296
      %v319 = vadd.f32 %v191, %v298
      %v320 = vadd.f32 %v192, %v302
      %v321 = vadd.f32 %v193, %v304
      %v322 = vadd.f32 %v194, %v308
      %v323 = vadd.f32 %v195, %v310
      %v324 = vadd.f32 %v196, %v314
      %v325 = vadd.f32 %v197, %v316
      %v326 = vld [vmem:[#allocation2 + $0x2] sm:$0xff]
      %v327 = vld [vmem:[#allocation2 + $0xa] sm:$0xff]
      %v328 = vld [vmem:[#allocation2 + $0x12] sm:$0xff]
      %v329 = vld [vmem:[#allocation2 + $0x1a] sm:$0xf]
      %s330 = scalar_lea.vmem %s1, 128
      %v331 = vld [vmem:[%s330] sm:$0xff]
      %v332 = vld [vmem:[%s330 + $0x8] sm:$0xff]
      %v333 = vld [vmem:[%s330 + $0x10] sm:$0xff]
      %v334 = vld [vmem:[%s330 + $0x18] sm:$0xff]
      %v335 = vld [vmem:[%s330 + $0x20] sm:$0xff]
      %v336 = vld [vmem:[%s330 + $0x28] sm:$0xff]
      %v337 = vld [vmem:[%s330 + $0x30] sm:$0xf]
      %v338 = vld [vmem:[%s330 + $0x38] sm:$0xf]
      %v340 = vsel %vm45, %v326, 0
      %v343 = vsel %vm45, %v327, 0
      %v346 = vsel %vm45, %v328, 0
      %v349 = vsel %vm45, %v329, 0
      %v352 = vsel %vm94, %v337, 0
      %v355 = vsel %vm94, %v338, 0
      %357 = vmatprep.subr.mxu0 %v332
      %358 = vmatpush1.msra.mxu0 %v331
      %359 = vmatprep.subr.mxu0 %v334
      %360 = vmatpush1.msra.mxu0 %v333
      %361 = vmatprep.subr.mxu0 %v336
      %362 = vmatpush1.msra.mxu0 %v335
      %363 = vmatprep.subr.mxu0 %v355
      %364 = vmatpush1.msra.mxu0 %v352
      %365 = vmatprep.subr.mxu0 0.0
      %366 = vmatpush1.msra.mxu0 0.0
      %367 = vmatprep.subr.mxu0 0.0
      %368 = vmatpush1.msra.mxu0 0.0
      %369 = vmatprep.subr.mxu0 0.0
      %370 = vmatpush1.msra.mxu0 0.0
      %371 = vmatprep.subr.mxu0 0.0
      %372 = vmatpush1.msra.mxu0 0.0
      %373 = vmatprep.subr.mxu0 0.0
      %374 = vmatpush1.msra.mxu0 0.0
      %375 = vmatprep.subr.mxu0 0.0
      %376 = vmatpush1.msra.mxu0 0.0
      %377 = vmatprep.subr.mxu0 0.0
      %378 = vmatpush1.msra.mxu0 0.0
      %379 = vmatprep.subr.mxu0 0.0
      %380 = vmatpush1.msra.mxu0 0.0
      %381 = vmatprep.subr.mxu0 0.0
      %382 = vmatpush1.msra.mxu0 0.0
      %383 = vmatprep.subr.mxu0 0.0
      %384 = vmatpush1.msra.mxu0 0.0
      %385 = vmatprep.subr.mxu0 0.0
      %386 = vmatpush1.msra.mxu0 0.0
      %387 = vmatprep.subr.mxu0 0.0
      %388 = vmatpush1.msra.mxu0 0.0
      %389 = vmatprep.subr.mxu0 0.0
      %390 = vmatpush1.msra.mxu0 0.0
      %391 = vmatprep.subr.mxu0 0.0
      %392 = vmatpush1.msra.mxu0 0.0
      %393 = vmatprep.subr.mxu0 0.0
      %394 = vmatpush1.msra.mxu0 0.0
      %395 = vmatprep.subr.mxu0 0.0
      %396 = vmatpush1.msra.mxu0 0.0
      %397 = vmatprep.subr.mxu0 0.0
      %398 = vmatpush1.msra.mxu0 0.0
      %399 = vmatprep.subr.mxu0 0.0
      %400 = vmatpush1.msra.mxu0 0.0
      %401 = vmatprep.subr.mxu0 0.0
      %402 = vmatpush1.msra.mxu0 0.0
      %403 = vmatprep.subr.mxu0 0.0
      %404 = vmatpush1.msra.mxu0 0.0
      %405 = vmatprep.subr.mxu0 0.0
      %406 = vmatpush1.msra.mxu0 0.0
      %407 = vmatprep.subr.mxu0 0.0
      %408 = vmatpush1.msra.mxu0 0.0
      %409 = vmatprep.subr.mxu0 0.0
      %410 = vmatpush1.msra.mxu0 0.0
      %411 = vmatprep.subr.mxu0 0.0
      %412 = vmatpush1.msra.mxu0 0.0
      %413 = vmatprep.subr.mxu0 0.0
      %414 = vmatpush1.msra.mxu0 0.0
      %415 = vmatprep.subr.mxu0 0.0
      %416 = vmatpush1.msra.mxu0 0.0
      %417 = vmatprep.subr.mxu0 0.0
      %418 = vmatpush1.msra.mxu0 0.0
      %419 = vmatprep.subr.mxu0 0.0
      %420 = vmatpush1.msra.mxu0 0.0
      %421 = vmatprep.mubr.f32.mxu0 0.0
      %422 = vmatmul.mubr.f32.gmra.mrb[0].mxu0 %v340
      %v423 = vpop.f32.mrb[0].mxu0
      %v424 = vadd.f32 0.0, %v423
      %v425 = vpop.f32.mrb[0].mxu0
      %v426 = vadd.f32 0.0, %v425
      %427 = vmatprep.mubr.f32.mxu0 0.0
      %428 = vmatmul.mubr.f32.gmra.mrb[0].mxu0 %v343
      %v429 = vpop.f32.mrb[0].mxu0
      %v430 = vadd.f32 0.0, %v429
      %v431 = vpop.f32.mrb[0].mxu0
      %v432 = vadd.f32 0.0, %v431
      %433 = vmatprep.mubr.f32.mxu0 0.0
      %434 = vmatmul.mubr.f32.gmra.mrb[0].mxu0 %v346
      %v435 = vpop.f32.mrb[0].mxu0
      %v436 = vadd.f32 0.0, %v435
      %v437 = vpop.f32.mrb[0].mxu0
      %v438 = vadd.f32 0.0, %v437
      %439 = vmatprep.mubr.f32.mxu0 0.0
      %440 = vmatmul.mubr.f32.gmra.mrb[0].mxu0 %v349
      %v441 = vpop.f32.mrb[0].mxu0
      %v442 = vadd.f32 0.0, %v441
      %v443 = vpop.f32.mrb[0].mxu0
      %v444 = vadd.f32 0.0, %v443
      %445 = vdwg.mxu0
      %v446 = vadd.f32 %v318, %v424
      %v447 = vadd.f32 %v319, %v426
      %v448 = vadd.f32 %v320, %v430
      %v449 = vadd.f32 %v321, %v432
      %v450 = vadd.f32 %v322, %v436
      %v451 = vadd.f32 %v323, %v438
      %v452 = vadd.f32 %v324, %v442
      %v453 = vadd.f32 %v325, %v444
      %v454 = vmax.f32 %v446, 0.0
      %v455 = vmax.f32 %v447, 0.0
      %v456 = vmax.f32 %v448, 0.0
      %v457 = vmax.f32 %v449, 0.0
      %v458 = vmax.f32 %v450, 0.0
      %v459 = vmax.f32 %v451, 0.0
      %v460 = vmax.f32 %v452, 0.0
      %v461 = vmax.f32 %v453, 0.0
      %462 = vst [vmem:[#allocation3] sm:$0xff] %v454
      %vm463 = vcmask 785408
      %464 = vst.msk [vmem:[#allocation3 + $0x8] sm:$0xff] %vm463, %v455
      %465 = vst [vmem:[#allocation3 + $0x10] sm:$0xff] %v456
      %466 = vst.msk [vmem:[#allocation3 + $0x18] sm:$0xff] %vm463, %v457
      %467 = vst [vmem:[#allocation3 + $0x20] sm:$0xff] %v458
      %468 = vst.msk [vmem:[#allocation3 + $0x28] sm:$0xff] %vm463, %v459
      %469 = vst [vmem:[#allocation3 + $0x30] sm:$0xf] %v460
      %vm470 = vcmask 781312
      %471 = vst.msk [vmem:[#allocation3 + $0x38] sm:$0xf] %vm470, %v461
      %v472 = vld [vmem:[#allocation3] sm:$0xff]
      %v473 = vld [vmem:[#allocation3 + $0x8] sm:$0xff]
      %v474 = vld [vmem:[#allocation3 + $0x10] sm:$0xff]
      %v475 = vld [vmem:[#allocation3 + $0x18] sm:$0xff]
      %v476 = vld [vmem:[#allocation3 + $0x20] sm:$0xff]
      %v477 = vld [vmem:[#allocation3 + $0x28] sm:$0xff]
      %v478 = vld [vmem:[#allocation3 + $0x30] sm:$0x7]
      %v479 = vld [vmem:[#allocation3 + $0x38] sm:$0x7]
      %v480 = vld [vmem:[#allocation3] sm:$0xfe]
      %v481 = vld [vmem:[#allocation3 + $0x8] sm:$0xfe]
      %v482 = vld [vmem:[#allocation3 + $0x30] sm:$0xf]
      %v483 = vld [vmem:[#allocation3 + $0x38] sm:$0xf]
      %vm492 = vcmask 1046528
      %v493 = vrot.slane %v480, 1
      %v494 = vrot.slane %v474, 1
      %v495 = vsel %vm492, %v493, %v494
      %v496 = vrot.slane %v481, 1
      %v497 = vrot.slane %v475, 1
      %v498 = vsel %vm492, %v496, %v497
      %v499 = vrot.slane %v476, 1
      %v500 = vsel %vm492, %v494, %v499
      %v501 = vrot.slane %v477, 1
      %v502 = vsel %vm492, %v497, %v501
      %v503 = vrot.slane %v482, 1
      %v504 = vsel %vm492, %v499, %v503
      %v505 = vrot.slane %v483, 1
      %v506 = vsel %vm492, %v501, %v505
      %v515 = vmax.f32 %v472, %v495
      %v516 = vmax.f32 %v473, %v498
      %v517 = vmax.f32 %v474, %v500
      %v518 = vmax.f32 %v475, %v502
      %v519 = vmax.f32 %v476, %v504
      %v520 = vmax.f32 %v477, %v506
      %v521 = vmax.f32 %v478, %v503
      %v522 = vmax.f32 %v479, %v505
      %531 = vrot.lane.b32.xlu0 %v515, 120
      %v532 = vpop.permute.xlu0 %531
      %533 = vrot.lane.b32.xlu0 %v516, 120
      %v534 = vpop.permute.xlu0 %533
      %535 = vrot.lane.b32.xlu0 %v517, 120
      %v536 = vpop.permute.xlu0 %535
      %537 = vrot.lane.b32.xlu0 %v518, 120
      %v538 = vpop.permute.xlu0 %537
      %539 = vrot.lane.b32.xlu0 %v519, 120
      %v540 = vpop.permute.xlu0 %539
      %541 = vrot.lane.b32.xlu0 %v520, 120
      %v542 = vpop.permute.xlu0 %541
      %543 = vrot.lane.b32.xlu0 %v521, 120
      %v544 = vpop.permute.xlu0 %543
      %545 = vrot.lane.b32.xlu0 %v522, 120
      %v546 = vpop.permute.xlu0 %545
      %vm547 = vcmask 982016
      %v548 = vsel %vm547, %v532, %v534
      %v549 = vsel %vm547, %v536, %v538
      %v550 = vsel %vm547, %v540, %v542
      %v551 = vsel %vm547, %v544, %v546
      %v560 = vmax.f32 %v515, %v548
      %v561 = vmax.f32 %v516, %v534
      %v562 = vmax.f32 %v517, %v549
      %v563 = vmax.f32 %v518, %v538
      %v564 = vmax.f32 %v519, %v550
      %v565 = vmax.f32 %v520, %v542
      %v566 = vmax.f32 %v521, %v551
      %v567 = vmax.f32 %v522, %v546
      %568 = vst [vmem:[#allocation4] sm:$0xff] %v560
      %vm569 = vcmask 719872
      %570 = vst.msk [vmem:[#allocation4 + $0x8] sm:$0xff] %vm569, %v561
      %571 = vst [vmem:[#allocation4 + $0x10] sm:$0xff] %v562
      %572 = vst.msk [vmem:[#allocation4 + $0x18] sm:$0xff] %vm569, %v563
      %573 = vst [vmem:[#allocation4 + $0x20] sm:$0xff] %v564
      %574 = vst.msk [vmem:[#allocation4 + $0x28] sm:$0xff] %vm569, %v565
      %575 = vst [vmem:[#allocation4 + $0x30] sm:$0x7] %v566
      %vm576 = vcmask 714752
      %577 = vst.msk [vmem:[#allocation4 + $0x38] sm:$0x7] %vm576, %v567
      %v578 = vld [vmem:[#allocation4] ss:$8 sm:$0x3]
      %v579 = vlaneseq
      %vm580 = vcmp.ge.s32.totalorder %v579, 0
      %vm581 = vcmp.lt.s32.totalorder %v579, 216
      %vm582 = vmand %vm580, %vm581
      %s583 = scalar_lea.vmem [#allocation5], 1
      %584 = vst.msk [vmem:[%s583] ss:$8 sm:$0x3] %vm582, %v578
      %585 = vst.msk [vmem:[%s583] ss:$8 sm:$0x0] %vm582, %v578
      %s586 = scalar_lea.vmem [#allocation4], 2
      %v587 = vld [vmem:[%s586] ss:$8 sm:$0x3]
      %s588 = scalar_lea.vmem [#allocation5], 2
      %589 = vst.msk [vmem:[%s588] ss:$8 sm:$0x3] %vm582, %v587
      %590 = vst.msk [vmem:[%s588] ss:$8 sm:$0x0] %vm582, %v587
      %s591 = scalar_lea.vmem [#allocation4], 4
      %v592 = vld [vmem:[%s591] ss:$8 sm:$0x3]
      %s593 = scalar_lea.vmem [#allocation5], 3
      %594 = vst.msk [vmem:[%s593] ss:$8 sm:$0x3] %vm582, %v592
      %595 = vst.msk [vmem:[%s593] ss:$8 sm:$0x0] %vm582, %v592
      %s596 = scalar_lea.vmem [#allocation4], 6
      %v597 = vld [vmem:[%s596] ss:$8 sm:$0x3]
      %s598 = scalar_lea.vmem [#allocation5], 4
      %599 = vst.msk [vmem:[%s598] ss:$8 sm:$0x3] %vm582, %v597
      %600 = vst.msk [vmem:[%s598] ss:$8 sm:$0x0] %vm582, %v597
      %s601 = scalar_lea.vmem [#allocation4], 16
      %v602 = vld [vmem:[%s601] ss:$8 sm:$0x3]
      %s603 = scalar_lea.vmem [#allocation5], 5
      %604 = vst.msk [vmem:[%s603] ss:$8 sm:$0x3] %vm582, %v602
      %605 = vst.msk [vmem:[%s603] ss:$8 sm:$0x0] %vm582, %v602
      %s606 = scalar_lea.vmem [#allocation4], 18
      %v607 = vld [vmem:[%s606] ss:$8 sm:$0x3]
      %s608 = scalar_lea.vmem [#allocation5], 6
      %609 = vst.msk [vmem:[%s608] ss:$8 sm:$0x3] %vm582, %v607
      %610 = vst.msk [vmem:[%s608] ss:$8 sm:$0x0] %vm582, %v607
      %s611 = scalar_lea.vmem [#allocation4], 20
      %v612 = vld [vmem:[%s611] ss:$8 sm:$0x3]
      %s613 = scalar_lea.vmem [#allocation5], 7
      %614 = vst.msk [vmem:[%s613] ss:$8 sm:$0x3] %vm582, %v612
      %615 = vst.msk [vmem:[%s613] ss:$8 sm:$0x0] %vm582, %v612
      %s616 = scalar_lea.vmem [#allocation4], 22
      %v617 = vld [vmem:[%s616] ss:$8 sm:$0x3]
      %s618 = scalar_lea.vmem [#allocation5], 16
      %619 = vst.msk [vmem:[%s618] ss:$8 sm:$0x3] %vm582, %v617
      %620 = vst.msk [vmem:[%s618] ss:$8 sm:$0x0] %vm582, %v617
      %s621 = scalar_lea.vmem [#allocation4], 32
      %v622 = vld [vmem:[%s621] ss:$8 sm:$0x3]
      %s623 = scalar_lea.vmem [#allocation5], 17
      %624 = vst.msk [vmem:[%s623] ss:$8 sm:$0x3] %vm582, %v622
      %625 = vst.msk [vmem:[%s623] ss:$8 sm:$0x0] %vm582, %v622
      %s626 = scalar_lea.vmem [#allocation4], 34
      %v627 = vld [vmem:[%s626] ss:$8 sm:$0x3]
      %s628 = scalar_lea.vmem [#allocation5], 18
      %629 = vst.msk [vmem:[%s628] ss:$8 sm:$0x3] %vm582, %v627
      %630 = vst.msk [vmem:[%s628] ss:$8 sm:$0x0] %vm582, %v627
      %s631 = scalar_lea.vmem [#allocation4], 36
      %v632 = vld [vmem:[%s631] ss:$8 sm:$0x3]
      %s633 = scalar_lea.vmem [#allocation5], 19
      %634 = vst.msk [vmem:[%s633] ss:$8 sm:$0x3] %vm582, %v632
      %635 = vst.msk [vmem:[%s633] ss:$8 sm:$0x0] %vm582, %v632
      %s636 = scalar_lea.vmem [#allocation4], 38
      %v637 = vld [vmem:[%s636] ss:$8 sm:$0x3]
      %s638 = scalar_lea.vmem [#allocation5], 20
      %639 = vst.msk [vmem:[%s638] ss:$8 sm:$0x3] %vm582, %v637
      %640 = vst.msk [vmem:[%s638] ss:$8 sm:$0x0] %vm582, %v637
      %s641 = scalar_lea.vmem [#allocation4], 48
      %v642 = vld [vmem:[%s641] ss:$8 sm:$0x3]
      %s643 = scalar_lea.vmem [#allocation5], 21
      %644 = vst.msk [vmem:[%s643] ss:$8 sm:$0x3] %vm582, %v642
      %645 = vst.msk [vmem:[%s643] ss:$8 sm:$0x0] %vm582, %v642
      %s646 = scalar_lea.vmem [#allocation4], 50
      %v647 = vld [vmem:[%s646] ss:$8 sm:$0x3]
      %s648 = scalar_lea.vmem [#allocation5], 22
      %649 = vst.msk [vmem:[%s648] ss:$8 sm:$0x3] %vm582, %v647
      %650 = vst.msk [vmem:[%s648] ss:$8 sm:$0x0] %vm582, %v647
      %v651 = vld [vmem:[%s586] ss:$8 sm:$0x3]
      %652 = vst.msk [vmem:[#allocation5] ss:$8 sm:$0x3] %vm582, %v651
      %653 = vst.msk [vmem:[#allocation5] ss:$8 sm:$0x0] %vm582, %v651
      %v654 = vld [vmem:[%s641] ss:$8 sm:$0x3]
      %s655 = scalar_lea.vmem [#allocation5], 23
      %656 = vst.msk [vmem:[%s655] ss:$8 sm:$0x3] %vm582, %v654
      %657 = vst.msk [vmem:[%s655] ss:$8 sm:$0x0] %vm582, %v654
      %v658 = vld [vmem:[%s4] sm:$0x3]
      %v660 = vlaneseq
      %v661 = vshrl.u32 %v660, 7
      %v662 = vsub.s32 0, %v661
      %v663 = vrot.slane %v658, %v662
      %v664 = vlaneseq
      %v665 = vshrl.u32 %v664, 7
      %v666 = vsub.s32 1, %v665
      %v667 = vrot.slane %v658, %v666
      %v670 = vadd.f32 %v663, 0.0
      %v671 = vadd.f32 %v667, 0.0
      %v672 = vld [vmem:[#allocation5] sm:$0xff]
      %v673 = vld [vmem:[#allocation5 + $0x8] sm:$0xff]
      %v674 = vld [vmem:[#allocation5 + $0x10] sm:$0x3f]
      %v675 = vld [vmem:[#allocation5 + $0x18] sm:$0x3f]
      %v676 = vld [vmem:[%s3] sm:$0xff]
      %v677 = vld [vmem:[%s3 + $0x8] sm:$0xff]
      %v678 = vld [vmem:[%s3 + $0x10] sm:$0xff]
      %v679 = vld [vmem:[%s3 + $0x18] sm:$0xff]
      %v680 = vld [vmem:[%s3 + $0x20] sm:$0xff]
      %v681 = vld [vmem:[%s3 + $0x28] sm:$0xff]
      %v682 = vld [vmem:[%s3 + $0x30] sm:$0xff]
      %v683 = vld [vmem:[%s3 + $0x38] sm:$0xff]
      %v684 = vld [vmem:[%s3 + $0x40] sm:$0xff]
      %v685 = vld [vmem:[%s3 + $0x48] sm:$0xff]
      %v686 = vld [vmem:[%s3 + $0x50] sm:$0xff]
      %v687 = vld [vmem:[%s3 + $0x58] sm:$0xff]
      %v688 = vld [vmem:[%s3 + $0x60] sm:$0xff]
      %v689 = vld [vmem:[%s3 + $0x68] sm:$0xff]
      %v690 = vld [vmem:[%s3 + $0x70] sm:$0xff]
      %v691 = vld [vmem:[%s3 + $0x78] sm:$0xff]
      %v692 = vld [vmem:[%s3 + $0x80] sm:$0xff]
      %v693 = vld [vmem:[%s3 + $0x88] sm:$0xff]
      %v694 = vld [vmem:[%s3 + $0x90] sm:$0xff]
      %v695 = vld [vmem:[%s3 + $0x98] sm:$0xff]
      %v696 = vld [vmem:[%s3 + $0xa0] sm:$0xff]
      %v697 = vld [vmem:[%s3 + $0xa8] sm:$0xff]
      %v698 = vld [vmem:[%s3 + $0xb0] sm:$0xff]
      %v699 = vld [vmem:[%s3 + $0xb8] sm:$0xff]
      %v700 = vld [vmem:[%s3 + $0xc0] sm:$0xff]
      %v701 = vld [vmem:[%s3 + $0xc8] sm:$0xff]
      %v702 = vld [vmem:[%s3 + $0xd0] sm:$0xff]
      %v703 = vld [vmem:[%s3 + $0xd8] sm:$0xff]
      %v704 = vld [vmem:[%s3 + $0xe0] sm:$0xff]
      %v705 = vld [vmem:[%s3 + $0xe8] sm:$0xff]
      %v706 = vld [vmem:[%s3 + $0xf0] sm:$0xff]
      %v707 = vld [vmem:[%s3 + $0xf8] sm:$0xff]
      %v708 = vld [vmem:[%s3 + $0x100] sm:$0xff]
      %v709 = vld [vmem:[%s3 + $0x108] sm:$0xff]
      %v710 = vld [vmem:[%s3 + $0x110] sm:$0xff]
      %v711 = vld [vmem:[%s3 + $0x118] sm:$0xff]
      %v712 = vld [vmem:[%s3 + $0x120] sm:$0xff]
      %v713 = vld [vmem:[%s3 + $0x128] sm:$0xff]
      %v714 = vld [vmem:[%s3 + $0x130] sm:$0xff]
      %v715 = vld [vmem:[%s3 + $0x138] sm:$0xff]
      %v716 = vld [vmem:[%s3 + $0x140] sm:$0xff]
      %v717 = vld [vmem:[%s3 + $0x148] sm:$0xff]
      %v718 = vld [vmem:[%s3 + $0x150] sm:$0xff]
      %v719 = vld [vmem:[%s3 + $0x158] sm:$0xff]
      %v720 = vld [vmem:[%s3 + $0x160] sm:$0xff]
      %v721 = vld [vmem:[%s3 + $0x168] sm:$0xff]
      %v722 = vld [vmem:[%s3 + $0x170] sm:$0xff]
      %v723 = vld [vmem:[%s3 + $0x178] sm:$0xff]
      %v724 = vld [vmem:[%s3 + $0x180] sm:$0xff]
      %v725 = vld [vmem:[%s3 + $0x188] sm:$0xff]
      %v726 = vld [vmem:[%s3 + $0x190] sm:$0xff]
      %v727 = vld [vmem:[%s3 + $0x198] sm:$0xff]
      %v728 = vld [vmem:[%s3 + $0x1a0] sm:$0xff]
      %v729 = vld [vmem:[%s3 + $0x1a8] sm:$0xff]
      %v731 = vsel %vm569, %v673, 0
      %v734 = vsel %vm569, %v675, 0
      %736 = vmatprep.subr.mxu0 %v677
      %737 = vmatpush1.msra.mxu0 %v676
      %738 = vmatprep.subr.mxu0 %v679
      %739 = vmatpush1.msra.mxu0 %v678
      %740 = vmatprep.subr.mxu0 %v681
      %741 = vmatpush1.msra.mxu0 %v680
      %742 = vmatprep.subr.mxu0 %v683
      %743 = vmatpush1.msra.mxu0 %v682
      %744 = vmatprep.subr.mxu0 %v685
      %745 = vmatpush1.msra.mxu0 %v684
      %746 = vmatprep.subr.mxu0 %v687
      %747 = vmatpush1.msra.mxu0 %v686
      %748 = vmatprep.subr.mxu0 %v689
      %749 = vmatpush1.msra.mxu0 %v688
      %750 = vmatprep.subr.mxu0 %v691
      %751 = vmatpush1.msra.mxu0 %v690
      %752 = vmatprep.subr.mxu0 %v693
      %753 = vmatpush1.msra.mxu0 %v692
      %754 = vmatprep.subr.mxu0 %v695
      %755 = vmatpush1.msra.mxu0 %v694
      %756 = vmatprep.subr.mxu0 %v697
      %757 = vmatpush1.msra.mxu0 %v696
      %758 = vmatprep.subr.mxu0 %v699
      %759 = vmatpush1.msra.mxu0 %v698
      %760 = vmatprep.subr.mxu0 %v701
      %761 = vmatpush1.msra.mxu0 %v700
      %762 = vmatprep.subr.mxu0 %v703
      %763 = vmatpush1.msra.mxu0 %v702
      %764 = vmatprep.subr.mxu0 %v705
      %765 = vmatpush1.msra.mxu0 %v704
      %766 = vmatprep.subr.mxu0 %v707
      %767 = vmatpush1.msra.mxu0 %v706
      %768 = vmatprep.subr.mxu0 %v709
      %769 = vmatpush1.msra.mxu0 %v708
      %770 = vmatprep.subr.mxu0 %v711
      %771 = vmatpush1.msra.mxu0 %v710
      %772 = vmatprep.subr.mxu0 %v713
      %773 = vmatpush1.msra.mxu0 %v712
      %774 = vmatprep.subr.mxu0 %v715
      %775 = vmatpush1.msra.mxu0 %v714
      %776 = vmatprep.subr.mxu0 %v717
      %777 = vmatpush1.msra.mxu0 %v716
      %778 = vmatprep.subr.mxu0 %v719
      %779 = vmatpush1.msra.mxu0 %v718
      %780 = vmatprep.subr.mxu0 %v721
      %781 = vmatpush1.msra.mxu0 %v720
      %782 = vmatprep.subr.mxu0 %v723
      %783 = vmatpush1.msra.mxu0 %v722
      %784 = vmatprep.subr.mxu0 %v725
      %785 = vmatpush1.msra.mxu0 %v724
      %786 = vmatprep.subr.mxu0 %v727
      %787 = vmatpush1.msra.mxu0 %v726
      %788 = vmatprep.subr.mxu0 %v729
      %789 = vmatpush1.msra.mxu0 %v728
      %790 = vmatprep.subr.mxu0 0.0
      %791 = vmatpush1.msra.mxu0 0.0
      %792 = vmatprep.subr.mxu0 0.0
      %793 = vmatpush1.msra.mxu0 0.0
      %794 = vmatprep.subr.mxu0 0.0
      %795 = vmatpush1.msra.mxu0 0.0
      %796 = vmatprep.subr.mxu0 0.0
      %797 = vmatpush1.msra.mxu0 0.0
      %798 = vmatprep.subr.mxu0 0.0
      %799 = vmatpush1.msra.mxu0 0.0
      %800 = vmatprep.mubr.f32.mxu0 %v731
      %801 = vmatmul.mubr.f32.gmra.mrb[0].mxu0 %v672
      %v802 = vpop.f32.mrb[0].mxu0
      %v803 = vadd.f32 0.0, %v802
      %v804 = vpop.f32.mrb[0].mxu0
      %v805 = vadd.f32 0.0, %v804
      %806 = vmatprep.mubr.f32.mxu0 %v734
      %807 = vmatmul.mubr.f32.gmra.mrb[0].mxu0 %v674
      %v808 = vpop.f32.mrb[0].mxu0
      %v809 = vadd.f32 0.0, %v808
      %v810 = vpop.f32.mrb[0].mxu0
      %v811 = vadd.f32 0.0, %v810
      %812 = vdwg.mxu0
      %v813 = vadd.f32 %v670, %v803
      %v814 = vadd.f32 %v671, %v805
      %v815 = vadd.f32 %v670, %v809
      %v816 = vadd.f32 %v671, %v811
      %v817 = vld [vmem:[#allocation5] sm:$0xfe]
      %v818 = vld [vmem:[#allocation5 + $0x8] sm:$0xfe]
      %v819 = vld [vmem:[#allocation5 + $0x10] sm:$0x7f]
      %v820 = vld [vmem:[#allocation5 + $0x18] sm:$0x7f]
      %s821 = scalar_lea.vmem %s3, 432
      %v822 = vld [vmem:[%s821] sm:$0xff]
      %v823 = vld [vmem:[%s821 + $0x8] sm:$0xff]
      %v824 = vld [vmem:[%s821 + $0x10] sm:$0xff]
      %v825 = vld [vmem:[%s821 + $0x18] sm:$0xff]
      %v826 = vld [vmem:[%s821 + $0x20] sm:$0xff]
      %v827 = vld [vmem:[%s821 + $0x28] sm:$0xff]
      %v828 = vld [vmem:[%s821 + $0x30] sm:$0xff]
      %v829 = vld [vmem:[%s821 + $0x38] sm:$0xff]
      %v830 = vld [vmem:[%s821 + $0x40] sm:$0xff]
      %v831 = vld [vmem:[%s821 + $0x48] sm:$0xff]
      %v832 = vld [vmem:[%s821 + $0x50] sm:$0xff]
      %v833 = vld [vmem:[%s821 + $0x58] sm:$0xff]
      %v834 = vld [vmem:[%s821 + $0x60] sm:$0xff]
      %v835 = vld [vmem:[%s821 + $0x68] sm:$0xff]
      %v836 = vld [vmem:[%s821 + $0x70] sm:$0xff]
      %v837 = vld [vmem:[%s821 + $0x78] sm:$0xff]
      %v838 = vld [vmem:[%s821 + $0x80] sm:$0xff]
      %v839 = vld [vmem:[%s821 + $0x88] sm:$0xff]
      %v840 = vld [vmem:[%s821 + $0x90] sm:$0xff]
      %v841 = vld [vmem:[%s821 + $0x98] sm:$0xff]
      %v842 = vld [vmem:[%s821 + $0xa0] sm:$0xff]
      %v843 = vld [vmem:[%s821 + $0xa8] sm:$0xff]
      %v844 = vld [vmem:[%s821 + $0xb0] sm:$0xff]
      %v845 = vld [vmem:[%s821 + $0xb8] sm:$0xff]
      %v846 = vld [vmem:[%s821 + $0xc0] sm:$0xff]
      %v847 = vld [vmem:[%s821 + $0xc8] sm:$0xff]
      %v848 = vld [vmem:[%s821 + $0xd0] sm:$0xff]
      %v849 = vld [vmem:[%s821 + $0xd8] sm:$0xff]
      %v850 = vld [vmem:[%s821 + $0xe0] sm:$0xff]
      %v851 = vld [vmem:[%s821 + $0xe8] sm:$0xff]
      %v852 = vld [vmem:[%s821 + $0xf0] sm:$0xff]
      %v853 = vld [vmem:[%s821 + $0xf8] sm:$0xff]
      %v854 = vld [vmem:[%s821 + $0x100] sm:$0xff]
      %v855 = vld [vmem:[%s821 + $0x108] sm:$0xff]
      %v856 = vld [vmem:[%s821 + $0x110] sm:$0xff]
      %v857 = vld [vmem:[%s821 + $0x118] sm:$0xff]
      %v858 = vld [vmem:[%s821 + $0x120] sm:$0xff]
      %v859 = vld [vmem:[%s821 + $0x128] sm:$0xff]
      %v860 = vld [vmem:[%s821 + $0x130] sm:$0xff]
      %v861 = vld [vmem:[%s821 + $0x138] sm:$0xff]
      %v862 = vld [vmem:[%s821 + $0x140] sm:$0xff]
      %v863 = vld [vmem:[%s821 + $0x148] sm:$0xff]
      %v864 = vld [vmem:[%s821 + $0x150] sm:$0xff]
      %v865 = vld [vmem:[%s821 + $0x158] sm:$0xff]
      %v866 = vld [vmem:[%s821 + $0x160] sm:$0xff]
      %v867 = vld [vmem:[%s821 + $0x168] sm:$0xff]
      %v868 = vld [vmem:[%s821 + $0x170] sm:$0xff]
      %v869 = vld [vmem:[%s821 + $0x178] sm:$0xff]
      %v870 = vld [vmem:[%s821 + $0x180] sm:$0xff]
      %v871 = vld [vmem:[%s821 + $0x188] sm:$0xff]
      %v872 = vld [vmem:[%s821 + $0x190] sm:$0xff]
      %v873 = vld [vmem:[%s821 + $0x198] sm:$0xff]
      %v874 = vld [vmem:[%s821 + $0x1a0] sm:$0xff]
      %v875 = vld [vmem:[%s821 + $0x1a8] sm:$0xff]
      %v880 = vrot.slane %v817, 1
      %v881 = vrot.slane %v819, 1
      %v882 = vsel %vm492, %v880, %v881
      %v883 = vrot.slane %v818, 1
      %v884 = vrot.slane %v820, 1
      %v885 = vsel %vm492, %v883, %v884
      %v888 = vsel %vm569, %v885, 0
      %v890 = vsel %vm569, %v884, 0
      %892 = vmatprep.subr.mxu0 %v823
      %893 = vmatpush1.msra.mxu0 %v822
      %894 = vmatprep.subr.mxu0 %v825
      %895 = vmatpush1.msra.mxu0 %v824
      %896 = vmatprep.subr.mxu0 %v827
      %897 = vmatpush1.msra.mxu0 %v826
      %898 = vmatprep.subr.mxu0 %v829
      %899 = vmatpush1.msra.mxu0 %v828
      %900 = vmatprep.subr.mxu0 %v831
      %901 = vmatpush1.msra.mxu0 %v830
      %902 = vmatprep.subr.mxu0 %v833
      %903 = vmatpush1.msra.mxu0 %v832
      %904 = vmatprep.subr.mxu0 %v835
      %905 = vmatpush1.msra.mxu0 %v834
      %906 = vmatprep.subr.mxu0 %v837
      %907 = vmatpush1.msra.mxu0 %v836
      %908 = vmatprep.subr.mxu0 %v839
      %909 = vmatpush1.msra.mxu0 %v838
      %910 = vmatprep.subr.mxu0 %v841
      %911 = vmatpush1.msra.mxu0 %v840
      %912 = vmatprep.subr.mxu0 %v843
      %913 = vmatpush1.msra.mxu0 %v842
      %914 = vmatprep.subr.mxu0 %v845
      %915 = vmatpush1.msra.mxu0 %v844
      %916 = vmatprep.subr.mxu0 %v847
      %917 = vmatpush1.msra.mxu0 %v846
      %918 = vmatprep.subr.mxu0 %v849
      %919 = vmatpush1.msra.mxu0 %v848
      %920 = vmatprep.subr.mxu0 %v851
      %921 = vmatpush1.msra.mxu0 %v850
      %922 = vmatprep.subr.mxu0 %v853
      %923 = vmatpush1.msra.mxu0 %v852
      %924 = vmatprep.subr.mxu0 %v855
      %925 = vmatpush1.msra.mxu0 %v854
      %926 = vmatprep.subr.mxu0 %v857
      %927 = vmatpush1.msra.mxu0 %v856
      %928 = vmatprep.subr.mxu0 %v859
      %929 = vmatpush1.msra.mxu0 %v858
      %930 = vmatprep.subr.mxu0 %v861
      %931 = vmatpush1.msra.mxu0 %v860
      %932 = vmatprep.subr.mxu0 %v863
      %933 = vmatpush1.msra.mxu0 %v862
      %934 = vmatprep.subr.mxu0 %v865
      %935 = vmatpush1.msra.mxu0 %v864
      %936 = vmatprep.subr.mxu0 %v867
      %937 = vmatpush1.msra.mxu0 %v866
      %938 = vmatprep.subr.mxu0 %v869
      %939 = vmatpush1.msra.mxu0 %v868
      %940 = vmatprep.subr.mxu0 %v871
      %941 = vmatpush1.msra.mxu0 %v870
      %942 = vmatprep.subr.mxu0 %v873
      %943 = vmatpush1.msra.mxu0 %v872
      %944 = vmatprep.subr.mxu0 %v875
      %945 = vmatpush1.msra.mxu0 %v874
      %946 = vmatprep.subr.mxu0 0.0
      %947 = vmatpush1.msra.mxu0 0.0
      %948 = vmatprep.subr.mxu0 0.0
      %949 = vmatpush1.msra.mxu0 0.0
      %950 = vmatprep.subr.mxu0 0.0
      %951 = vmatpush1.msra.mxu0 0.0
      %952 = vmatprep.subr.mxu0 0.0
      %953 = vmatpush1.msra.mxu0 0.0
      %954 = vmatprep.subr.mxu0 0.0
      %955 = vmatpush1.msra.mxu0 0.0
      %956 = vmatprep.mubr.f32.mxu0 %v888
      %957 = vmatmul.mubr.f32.gmra.mrb[0].mxu0 %v882
      %v958 = vpop.f32.mrb[0].mxu0
      %v959 = vadd.f32 0.0, %v958
      %v960 = vpop.f32.mrb[0].mxu0
      %v961 = vadd.f32 0.0, %v960
      %962 = vmatprep.mubr.f32.mxu0 %v890
      %963 = vmatmul.mubr.f32.gmra.mrb[0].mxu0 %v881
      %v964 = vpop.f32.mrb[0].mxu0
      %v965 = vadd.f32 0.0, %v964
      %v966 = vpop.f32.mrb[0].mxu0
      %v967 = vadd.f32 0.0, %v966
      %968 = vdwg.mxu0
      %v969 = vadd.f32 %v813, %v959
      %v970 = vadd.f32 %v814, %v961
      %v971 = vadd.f32 %v815, %v965
      %v972 = vadd.f32 %v816, %v967
      %v973 = vld [vmem:[#allocation5] sm:$0xfc]
      %v974 = vld [vmem:[#allocation5 + $0x8] sm:$0xfc]
      %v975 = vld [vmem:[#allocation5 + $0x10] sm:$0xff]
      %v976 = vld [vmem:[#allocation5 + $0x18] sm:$0xff]
      %s977 = scalar_lea.vmem %s3, 864
      %v978 = vld [vmem:[%s977] sm:$0xff]
      %v979 = vld [vmem:[%s977 + $0x8] sm:$0xff]
      %v980 = vld [vmem:[%s977 + $0x10] sm:$0xff]
      %v981 = vld [vmem:[%s977 + $0x18] sm:$0xff]
      %v982 = vld [vmem:[%s977 + $0x20] sm:$0xff]
      %v983 = vld [vmem:[%s977 + $0x28] sm:$0xff]
      %v984 = vld [vmem:[%s977 + $0x30] sm:$0xff]
      %v985 = vld [vmem:[%s977 + $0x38] sm:$0xff]
      %v986 = vld [vmem:[%s977 + $0x40] sm:$0xff]
      %v987 = vld [vmem:[%s977 + $0x48] sm:$0xff]
      %v988 = vld [vmem:[%s977 + $0x50] sm:$0xff]
      %v989 = vld [vmem:[%s977 + $0x58] sm:$0xff]
      %v990 = vld [vmem:[%s977 + $0x60] sm:$0xff]
      %v991 = vld [vmem:[%s977 + $0x68] sm:$0xff]
      %v992 = vld [vmem:[%s977 + $0x70] sm:$0xff]
      %v993 = vld [vmem:[%s977 + $0x78] sm:$0xff]
      %v994 = vld [vmem:[%s977 + $0x80] sm:$0xff]
      %v995 = vld [vmem:[%s977 + $0x88] sm:$0xff]
      %v996 = vld [vmem:[%s977 + $0x90] sm:$0xff]
      %v997 = vld [vmem:[%s977 + $0x98] sm:$0xff]
      %v998 = vld [vmem:[%s977 + $0xa0] sm:$0xff]
      %v999 = vld [vmem:[%s977 + $0xa8] sm:$0xff]
      %v1000 = vld [vmem:[%s977 + $0xb0] sm:$0xff]
      %v1001 = vld [vmem:[%s977 + $0xb8] sm:$0xff]
      %v1002 = vld [vmem:[%s977 + $0xc0] sm:$0xff]
      %v1003 = vld [vmem:[%s977 + $0xc8] sm:$0xff]
      %v1004 = vld [vmem:[%s977 + $0xd0] sm:$0xff]
      %v1005 = vld [vmem:[%s977 + $0xd8] sm:$0xff]
      %v1006 = vld [vmem:[%s977 + $0xe0] sm:$0xff]
      %v1007 = vld [vmem:[%s977 + $0xe8] sm:$0xff]
      %v1008 = vld [vmem:[%s977 + $0xf0] sm:$0xff]
      %v1009 = vld [vmem:[%s977 + $0xf8] sm:$0xff]
      %v1010 = vld [vmem:[%s977 + $0x100] sm:$0xff]
      %v1011 = vld [vmem:[%s977 + $0x108] sm:$0xff]
      %v1012 = vld [vmem:[%s977 + $0x110] sm:$0xff]
      %v1013 = vld [vmem:[%s977 + $0x118] sm:$0xff]
      %v1014 = vld [vmem:[%s977 + $0x120] sm:$0xff]
      %v1015 = vld [vmem:[%s977 + $0x128] sm:$0xff]
      %v1016 = vld [vmem:[%s977 + $0x130] sm:$0xff]
      %v1017 = vld [vmem:[%s977 + $0x138] sm:$0xff]
      %v1018 = vld [vmem:[%s977 + $0x140] sm:$0xff]
      %v1019 = vld [vmem:[%s977 + $0x148] sm:$0xff]
      %v1020 = vld [vmem:[%s977 + $0x150] sm:$0xff]
      %v1021 = vld [vmem:[%s977 + $0x158] sm:$0xff]
      %v1022 = vld [vmem:[%s977 + $0x160] sm:$0xff]
      %v1023 = vld [vmem:[%s977 + $0x168] sm:$0xff]
      %v1024 = vld [vmem:[%s977 + $0x170] sm:$0xff]
      %v1025 = vld [vmem:[%s977 + $0x178] sm:$0xff]
      %v1026 = vld [vmem:[%s977 + $0x180] sm:$0xff]
      %v1027 = vld [vmem:[%s977 + $0x188] sm:$0xff]
      %v1028 = vld [vmem:[%s977 + $0x190] sm:$0xff]
      %v1029 = vld [vmem:[%s977 + $0x198] sm:$0xff]
      %v1030 = vld [vmem:[%s977 + $0x1a0] sm:$0xff]
      %v1031 = vld [vmem:[%s977 + $0x1a8] sm:$0xff]
      %vm1036 = vcmask 1045504
      %v1037 = vrot.slane %v973, 2
      %v1038 = vrot.slane %v975, 2
      %v1039 = vsel %vm1036, %v1037, %v1038
      %v1040 = vrot.slane %v974, 2
      %v1041 = vrot.slane %v976, 2
      %v1042 = vsel %vm1036, %v1040, %v1041
      %v1045 = vsel %vm569, %v1042, 0
      %v1047 = vsel %vm569, %v1041, 0
      %1049 = vmatprep.subr.mxu0 %v979
      %1050 = vmatpush1.msra.mxu0 %v978
      %1051 = vmatprep.subr.mxu0 %v981
      %1052 = vmatpush1.msra.mxu0 %v980
      %1053 = vmatprep.subr.mxu0 %v983
      %1054 = vmatpush1.msra.mxu0 %v982
      %1055 = vmatprep.subr.mxu0 %v985
      %1056 = vmatpush1.msra.mxu0 %v984
      %1057 = vmatprep.subr.mxu0 %v987
      %1058 = vmatpush1.msra.mxu0 %v986
      %1059 = vmatprep.subr.mxu0 %v989
      %1060 = vmatpush1.msra.mxu0 %v988
      %1061 = vmatprep.subr.mxu0 %v991
      %1062 = vmatpush1.msra.mxu0 %v990
      %1063 = vmatprep.subr.mxu0 %v993
      %1064 = vmatpush1.msra.mxu0 %v992
      %1065 = vmatprep.subr.mxu0 %v995
      %1066 = vmatpush1.msra.mxu0 %v994
      %1067 = vmatprep.subr.mxu0 %v997
      %1068 = vmatpush1.msra.mxu0 %v996
      %1069 = vmatprep.subr.mxu0 %v999
      %1070 = vmatpush1.msra.mxu0 %v998
      %1071 = vmatprep.subr.mxu0 %v1001
      %1072 = vmatpush1.msra.mxu0 %v1000
      %1073 = vmatprep.subr.mxu0 %v1003
      %1074 = vmatpush1.msra.mxu0 %v1002
      %1075 = vmatprep.subr.mxu0 %v1005
      %1076 = vmatpush1.msra.mxu0 %v1004
      %1077 = vmatprep.subr.mxu0 %v1007
      %1078 = vmatpush1.msra.mxu0 %v1006
      %1079 = vmatprep.subr.mxu0 %v1009
      %1080 = vmatpush1.msra.mxu0 %v1008
      %1081 = vmatprep.subr.mxu0 %v1011
      %1082 = vmatpush1.msra.mxu0 %v1010
      %1083 = vmatprep.subr.mxu0 %v1013
      %1084 = vmatpush1.msra.mxu0 %v1012
      %1085 = vmatprep.subr.mxu0 %v1015
      %1086 = vmatpush1.msra.mxu0 %v1014
      %1087 = vmatprep.subr.mxu0 %v1017
      %1088 = vmatpush1.msra.mxu0 %v1016
      %1089 = vmatprep.subr.mxu0 %v1019
      %1090 = vmatpush1.msra.mxu0 %v1018
      %1091 = vmatprep.subr.mxu0 %v1021
      %1092 = vmatpush1.msra.mxu0 %v1020
      %1093 = vmatprep.subr.mxu0 %v1023
      %1094 = vmatpush1.msra.mxu0 %v1022
      %1095 = vmatprep.subr.mxu0 %v1025
      %1096 = vmatpush1.msra.mxu0 %v1024
      %1097 = vmatprep.subr.mxu0 %v1027
      %1098 = vmatpush1.msra.mxu0 %v1026
      %1099 = vmatprep.subr.mxu0 %v1029
      %1100 = vmatpush1.msra.mxu0 %v1028
      %1101 = vmatprep.subr.mxu0 %v1031
      %1102 = vmatpush1.msra.mxu0 %v1030
      %1103 = vmatprep.subr.mxu0 0.0
      %1104 = vmatpush1.msra.mxu0 0.0
      %1105 = vmatprep.subr.mxu0 0.0
      %1106 = vmatpush1.msra.mxu0 0.0
      %1107 = vmatprep.subr.mxu0 0.0
      %1108 = vmatpush1.msra.mxu0 0.0
      %1109 = vmatprep.subr.mxu0 0.0
      %1110 = vmatpush1.msra.mxu0 0.0
      %1111 = vmatprep.subr.mxu0 0.0
      %1112 = vmatpush1.msra.mxu0 0.0
      %1113 = vmatprep.mubr.f32.mxu0 %v1045
      %1114 = vmatmul.mubr.f32.gmra.mrb[0].mxu0 %v1039
      %v1115 = vpop.f32.mrb[0].mxu0
      %v1116 = vadd.f32 0.0, %v1115
      %v1117 = vpop.f32.mrb[0].mxu0
      %v1118 = vadd.f32 0.0, %v1117
      %1119 = vmatprep.mubr.f32.mxu0 %v1047
      %1120 = vmatmul.mubr.f32.gmra.mrb[0].mxu0 %v1038
      %v1121 = vpop.f32.mrb[0].mxu0
      %v1122 = vadd.f32 0.0, %v1121
      %v1123 = vpop.f32.mrb[0].mxu0
      %v1124 = vadd.f32 0.0, %v1123
      %1125 = vdwg.mxu0
      %v1126 = vadd.f32 %v969, %v1116
      %v1127 = vadd.f32 %v970, %v1118
      %v1128 = vadd.f32 %v971, %v1122
      %v1129 = vadd.f32 %v972, %v1124
      %v1130 = vmax.f32 %v1126, 0.0
      %v1131 = vmax.f32 %v1127, 0.0
      %v1132 = vmax.f32 %v1128, 0.0
      %v1133 = vmax.f32 %v1129, 0.0
      %1134 = vst [vmem:[#allocation6] sm:$0xff] %v1130
      %1135 = vst.msk [vmem:[#allocation6 + $0x8] sm:$0xff] %vm463, %v1131
      %1136 = vst [vmem:[#allocation6 + $0x10] sm:$0x3f] %v1132
      %vm1137 = vcmask 783360
      %1138 = vst.msk [vmem:[#allocation6 + $0x18] sm:$0x3f] %vm1137, %v1133
      %v1139 = vld [vmem:[#allocation6] sm:$0xff]
      %v1140 = vld [vmem:[#allocation6 + $0x8] sm:$0xff]
      %v1141 = vld [vmem:[#allocation6 + $0x10] sm:$0x1f]
      %v1142 = vld [vmem:[#allocation6 + $0x18] sm:$0x1f]
      %v1143 = vld [vmem:[#allocation6] sm:$0xfe]
      %v1144 = vld [vmem:[#allocation6 + $0x8] sm:$0xfe]
      %v1145 = vld [vmem:[#allocation6 + $0x10] sm:$0x3f]
      %v1146 = vld [vmem:[#allocation6 + $0x18] sm:$0x3f]
      %v1151 = vrot.slane %v1143, 1
      %v1152 = vrot.slane %v1145, 1
      %v1153 = vsel %vm492, %v1151, %v1152
      %v1154 = vrot.slane %v1144, 1
      %v1155 = vrot.slane %v1146, 1
      %v1156 = vsel %vm492, %v1154, %v1155
      %v1161 = vmax.f32 %v1139, %v1153
      %v1162 = vmax.f32 %v1140, %v1156
      %v1163 = vmax.f32 %v1141, %v1152
      %v1164 = vmax.f32 %v1142, %v1155
      %1169 = vrot.lane.b32.xlu0 %v1161, 112
      %v1170 = vpop.permute.xlu0 %1169
      %1171 = vrot.lane.b32.xlu0 %v1162, 112
      %v1172 = vpop.permute.xlu0 %1171
      %1173 = vrot.lane.b32.xlu0 %v1163, 112
      %v1174 = vpop.permute.xlu0 %1173
      %1175 = vrot.lane.b32.xlu0 %v1164, 112
      %v1176 = vpop.permute.xlu0 %1175
      %vm1177 = vcmask 916480
      %v1178 = vsel %vm1177, %v1170, %v1172
      %v1179 = vsel %vm1177, %v1174, %v1176
      %v1184 = vmax.f32 %v1161, %v1178
      %v1185 = vmax.f32 %v1162, %v1172
      %v1186 = vmax.f32 %v1163, %v1179
      %v1187 = vmax.f32 %v1164, %v1176
      %1188 = vst [vmem:[#allocation7] sm:$0xff] %v1184
      %vm1189 = vcmask 654336
      %1190 = vst.msk [vmem:[#allocation7 + $0x8] sm:$0xff] %vm1189, %v1185
      %1191 = vst [vmem:[#allocation7 + $0x10] sm:$0x1f] %v1186
      %vm1192 = vcmask 651264
      %1193 = vst.msk [vmem:[#allocation7 + $0x18] sm:$0x1f] %vm1192, %v1187
      %v1194 = vld [vmem:[#allocation7] ss:$8 sm:$0x3]
      %vm1195 = vcmp.lt.s32.totalorder %v579, 208
      %vm1196 = vmand %vm580, %vm1195
      %s1197 = scalar_lea.vmem [#allocation8], 1
      %1198 = vst.msk [vmem:[%s1197] ss:$8 sm:$0x3] %vm1196, %v1194
      %1199 = vst.msk [vmem:[%s1197] ss:$8 sm:$0x0] %vm1196, %v1194
      %s1200 = scalar_lea.vmem [#allocation7], 2
      %v1201 = vld [vmem:[%s1200] ss:$8 sm:$0x3]
      %s1202 = scalar_lea.vmem [#allocation8], 2
      %1203 = vst.msk [vmem:[%s1202] ss:$8 sm:$0x3] %vm1196, %v1201
      %1204 = vst.msk [vmem:[%s1202] ss:$8 sm:$0x0] %vm1196, %v1201
      %s1205 = scalar_lea.vmem [#allocation7], 4
      %v1206 = vld [vmem:[%s1205] ss:$8 sm:$0x3]
      %s1207 = scalar_lea.vmem [#allocation8], 3
      %1208 = vst.msk [vmem:[%s1207] ss:$8 sm:$0x3] %vm1196, %v1206
      %1209 = vst.msk [vmem:[%s1207] ss:$8 sm:$0x0] %vm1196, %v1206
      %s1210 = scalar_lea.vmem [#allocation7], 6
      %v1211 = vld [vmem:[%s1210] ss:$8 sm:$0x3]
      %s1212 = scalar_lea.vmem [#allocation8], 4
      %1213 = vst.msk [vmem:[%s1212] ss:$8 sm:$0x3] %vm1196, %v1211
      %1214 = vst.msk [vmem:[%s1212] ss:$8 sm:$0x0] %vm1196, %v1211
      %s1215 = scalar_lea.vmem [#allocation7], 16
      %v1216 = vld [vmem:[%s1215] ss:$8 sm:$0x3]
      %s1217 = scalar_lea.vmem [#allocation8], 5
      %1218 = vst.msk [vmem:[%s1217] ss:$8 sm:$0x3] %vm1196, %v1216
      %1219 = vst.msk [vmem:[%s1217] ss:$8 sm:$0x0] %vm1196, %v1216
      %s1220 = scalar_lea.vmem [#allocation7], 18
      %v1221 = vld [vmem:[%s1220] ss:$8 sm:$0x3]
      %s1222 = scalar_lea.vmem [#allocation8], 6
      %1223 = vst.msk [vmem:[%s1222] ss:$8 sm:$0x3] %vm1196, %v1221
      %1224 = vst.msk [vmem:[%s1222] ss:$8 sm:$0x0] %vm1196, %v1221
      %s1225 = scalar_lea.vmem [#allocation7], 20
      %v1226 = vld [vmem:[%s1225] ss:$8 sm:$0x3]
      %s1227 = scalar_lea.vmem [#allocation8], 7
      %1228 = vst.msk [vmem:[%s1227] ss:$8 sm:$0x3] %vm1196, %v1226
      %1229 = vst.msk [vmem:[%s1227] ss:$8 sm:$0x0] %vm1196, %v1226
      %v1230 = vld [vmem:[%s1200] ss:$8 sm:$0x3]
      %1231 = vst.msk [vmem:[#allocation8] ss:$8 sm:$0x3] %vm1196, %v1230
      %1232 = vst.msk [vmem:[#allocation8] ss:$8 sm:$0x0] %vm1196, %v1230
      %v1233 = vld [vmem:[%s1220] ss:$8 sm:$0x3]
      %s1234 = scalar_lea.vmem [#allocation8], 16
      %1235 = vst.msk [vmem:[%s1234] ss:$8 sm:$0x3] %vm1196, %v1233
      %1236 = vst.msk [vmem:[%s1234] ss:$8 sm:$0x0] %vm1196, %v1233
      %v1237 = vld [vmem:[%s6] sm:$0x3]
      %v1239 = vlaneseq
      %v1240 = vshrl.u32 %v1239, 7
      %v1241 = vsub.s32 0, %v1240
      %v1242 = vrot.slane %v1237, %v1241
      %v1243 = vlaneseq
      %v1244 = vshrl.u32 %v1243, 7
      %v1245 = vsub.s32 1, %v1244
      %v1246 = vrot.slane %v1237, %v1245
      %v1249 = vadd.f32 %v1242, 0.0
      %v1250 = vadd.f32 %v1246, 0.0
      %v1251 = vld [vmem:[#allocation8] sm:$0x7f]
      %v1252 = vld [vmem:[#allocation8 + $0x8] sm:$0x7f]
      %v1253 = vld [vmem:[%s5] sm:$0xff]
      %v1254 = vld [vmem:[%s5 + $0x8] sm:$0xff]
      %v1255 = vld [vmem:[%s5 + $0x10] sm:$0xff]
      %v1256 = vld [vmem:[%s5 + $0x18] sm:$0xff]
      %v1257 = vld [vmem:[%s5 + $0x20] sm:$0xff]
      %v1258 = vld [vmem:[%s5 + $0x28] sm:$0xff]
      %v1259 = vld [vmem:[%s5 + $0x30] sm:$0xff]
      %v1260 = vld [vmem:[%s5 + $0x38] sm:$0xff]
      %v1261 = vld [vmem:[%s5 + $0x40] sm:$0xff]
      %v1262 = vld [vmem:[%s5 + $0x48] sm:$0xff]
      %v1263 = vld [vmem:[%s5 + $0x50] sm:$0xff]
      %v1264 = vld [vmem:[%s5 + $0x58] sm:$0xff]
      %v1265 = vld [vmem:[%s5 + $0x60] sm:$0xff]
      %v1266 = vld [vmem:[%s5 + $0x68] sm:$0xff]
      %v1267 = vld [vmem:[%s5 + $0x70] sm:$0xff]
      %v1268 = vld [vmem:[%s5 + $0x78] sm:$0xff]
      %v1269 = vld [vmem:[%s5 + $0x80] sm:$0xff]
      %v1270 = vld [vmem:[%s5 + $0x88] sm:$0xff]
      %v1271 = vld [vmem:[%s5 + $0x90] sm:$0xff]
      %v1272 = vld [vmem:[%s5 + $0x98] sm:$0xff]
      %v1273 = vld [vmem:[%s5 + $0xa0] sm:$0xff]
      %v1274 = vld [vmem:[%s5 + $0xa8] sm:$0xff]
      %v1275 = vld [vmem:[%s5 + $0xb0] sm:$0xff]
      %v1276 = vld [vmem:[%s5 + $0xb8] sm:$0xff]
      %v1277 = vld [vmem:[%s5 + $0xc0] sm:$0xff]
      %v1278 = vld [vmem:[%s5 + $0xc8] sm:$0xff]
      %v1279 = vld [vmem:[%s5 + $0xd0] sm:$0xff]
      %v1280 = vld [vmem:[%s5 + $0xd8] sm:$0xff]
      %v1281 = vld [vmem:[%s5 + $0xe0] sm:$0xff]
      %v1282 = vld [vmem:[%s5 + $0xe8] sm:$0xff]
      %v1283 = vld [vmem:[%s5 + $0xf0] sm:$0xff]
      %v1284 = vld [vmem:[%s5 + $0xf8] sm:$0xff]
      %v1285 = vld [vmem:[%s5 + $0x100] sm:$0xff]
      %v1286 = vld [vmem:[%s5 + $0x108] sm:$0xff]
      %v1287 = vld [vmem:[%s5 + $0x110] sm:$0xff]
      %v1288 = vld [vmem:[%s5 + $0x118] sm:$0xff]
      %v1289 = vld [vmem:[%s5 + $0x120] sm:$0xff]
      %v1290 = vld [vmem:[%s5 + $0x128] sm:$0xff]
      %v1291 = vld [vmem:[%s5 + $0x130] sm:$0xff]
      %v1292 = vld [vmem:[%s5 + $0x138] sm:$0xff]
      %v1293 = vld [vmem:[%s5 + $0x140] sm:$0xff]
      %v1294 = vld [vmem:[%s5 + $0x148] sm:$0xff]
      %v1295 = vld [vmem:[%s5 + $0x150] sm:$0xff]
      %v1296 = vld [vmem:[%s5 + $0x158] sm:$0xff]
      %v1297 = vld [vmem:[%s5 + $0x160] sm:$0xff]
      %v1298 = vld [vmem:[%s5 + $0x168] sm:$0xff]
      %v1299 = vld [vmem:[%s5 + $0x170] sm:$0xff]
      %v1300 = vld [vmem:[%s5 + $0x178] sm:$0xff]
      %v1301 = vld [vmem:[%s5 + $0x180] sm:$0xff]
      %v1302 = vld [vmem:[%s5 + $0x188] sm:$0xff]
      %v1303 = vld [vmem:[%s5 + $0x190] sm:$0xff]
      %v1304 = vld [vmem:[%s5 + $0x198] sm:$0xff]
      %v1306 = vsel %vm1189, %v1252, 0
      %1308 = vmatprep.subr.mxu0 %v1254
      %1309 = vmatpush1.msra.mxu0 %v1253
      %1310 = vmatprep.subr.mxu0 %v1256
      %1311 = vmatpush1.msra.mxu0 %v1255
      %1312 = vmatprep.subr.mxu0 %v1258
      %1313 = vmatpush1.msra.mxu0 %v1257
      %1314 = vmatprep.subr.mxu0 %v1260
      %1315 = vmatpush1.msra.mxu0 %v1259
      %1316 = vmatprep.subr.mxu0 %v1262
      %1317 = vmatpush1.msra.mxu0 %v1261
      %1318 = vmatprep.subr.mxu0 %v1264
      %1319 = vmatpush1.msra.mxu0 %v1263
      %1320 = vmatprep.subr.mxu0 %v1266
      %1321 = vmatpush1.msra.mxu0 %v1265
      %1322 = vmatprep.subr.mxu0 %v1268
      %1323 = vmatpush1.msra.mxu0 %v1267
      %1324 = vmatprep.subr.mxu0 %v1270
      %1325 = vmatpush1.msra.mxu0 %v1269
      %1326 = vmatprep.subr.mxu0 %v1272
      %1327 = vmatpush1.msra.mxu0 %v1271
      %1328 = vmatprep.subr.mxu0 %v1274
      %1329 = vmatpush1.msra.mxu0 %v1273
      %1330 = vmatprep.subr.mxu0 %v1276
      %1331 = vmatpush1.msra.mxu0 %v1275
      %1332 = vmatprep.subr.mxu0 %v1278
      %1333 = vmatpush1.msra.mxu0 %v1277
      %1334 = vmatprep.subr.mxu0 %v1280
      %1335 = vmatpush1.msra.mxu0 %v1279
      %1336 = vmatprep.subr.mxu0 %v1282
      %1337 = vmatpush1.msra.mxu0 %v1281
      %1338 = vmatprep.subr.mxu0 %v1284
      %1339 = vmatpush1.msra.mxu0 %v1283
      %1340 = vmatprep.subr.mxu0 %v1286
      %1341 = vmatpush1.msra.mxu0 %v1285
      %1342 = vmatprep.subr.mxu0 %v1288
      %1343 = vmatpush1.msra.mxu0 %v1287
      %1344 = vmatprep.subr.mxu0 %v1290
      %1345 = vmatpush1.msra.mxu0 %v1289
      %1346 = vmatprep.subr.mxu0 %v1292
      %1347 = vmatpush1.msra.mxu0 %v1291
      %1348 = vmatprep.subr.mxu0 %v1294
      %1349 = vmatpush1.msra.mxu0 %v1293
      %1350 = vmatprep.subr.mxu0 %v1296
      %1351 = vmatpush1.msra.mxu0 %v1295
      %1352 = vmatprep.subr.mxu0 %v1298
      %1353 = vmatpush1.msra.mxu0 %v1297
      %1354 = vmatprep.subr.mxu0 %v1300
      %1355 = vmatpush1.msra.mxu0 %v1299
      %1356 = vmatprep.subr.mxu0 %v1302
      %1357 = vmatpush1.msra.mxu0 %v1301
      %1358 = vmatprep.subr.mxu0 %v1304
      %1359 = vmatpush1.msra.mxu0 %v1303
      %1360 = vmatprep.subr.mxu0 0.0
      %1361 = vmatpush1.msra.mxu0 0.0
      %1362 = vmatprep.subr.mxu0 0.0
      %1363 = vmatpush1.msra.mxu0 0.0
      %1364 = vmatprep.subr.mxu0 0.0
      %1365 = vmatpush1.msra.mxu0 0.0
      %1366 = vmatprep.subr.mxu0 0.0
      %1367 = vmatpush1.msra.mxu0 0.0
      %1368 = vmatprep.subr.mxu0 0.0
      %1369 = vmatpush1.msra.mxu0 0.0
      %1370 = vmatprep.subr.mxu0 0.0
      %1371 = vmatpush1.msra.mxu0 0.0
      %1372 = vmatprep.mubr.f32.mxu0 %v1306
      %1373 = vmatmul.mubr.f32.gmra.mrb[0].mxu0 %v1251
      %v1374 = vpop.f32.mrb[0].mxu0
      %v1375 = vadd.f32 0.0, %v1374
      %v1376 = vpop.f32.mrb[0].mxu0
      %v1377 = vadd.f32 0.0, %v1376
      %1378 = vdwg.mxu0
      %v1379 = vadd.f32 %v1249, %v1375
      %v1380 = vadd.f32 %v1250, %v1377
      %v1381 = vld [vmem:[#allocation8] sm:$0xfe]
      %v1382 = vld [vmem:[#allocation8 + $0x8] sm:$0xfe]
      %s1383 = scalar_lea.vmem %s5, 416
      %v1384 = vld [vmem:[%s1383] sm:$0xff]
      %v1385 = vld [vmem:[%s1383 + $0x8] sm:$0xff]
      %v1386 = vld [vmem:[%s1383 + $0x10] sm:$0xff]
      %v1387 = vld [vmem:[%s1383 + $0x18] sm:$0xff]
      %v1388 = vld [vmem:[%s1383 + $0x20] sm:$0xff]
      %v1389 = vld [vmem:[%s1383 + $0x28] sm:$0xff]
      %v1390 = vld [vmem:[%s1383 + $0x30] sm:$0xff]
      %v1391 = vld [vmem:[%s1383 + $0x38] sm:$0xff]
      %v1392 = vld [vmem:[%s1383 + $0x40] sm:$0xff]
      %v1393 = vld [vmem:[%s1383 + $0x48] sm:$0xff]
      %v1394 = vld [vmem:[%s1383 + $0x50] sm:$0xff]
      %v1395 = vld [vmem:[%s1383 + $0x58] sm:$0xff]
      %v1396 = vld [vmem:[%s1383 + $0x60] sm:$0xff]
      %v1397 = vld [vmem:[%s1383 + $0x68] sm:$0xff]
      %v1398 = vld [vmem:[%s1383 + $0x70] sm:$0xff]
      %v1399 = vld [vmem:[%s1383 + $0x78] sm:$0xff]
      %v1400 = vld [vmem:[%s1383 + $0x80] sm:$0xff]
      %v1401 = vld [vmem:[%s1383 + $0x88] sm:$0xff]
      %v1402 = vld [vmem:[%s1383 + $0x90] sm:$0xff]
      %v1403 = vld [vmem:[%s1383 + $0x98] sm:$0xff]
      %v1404 = vld [vmem:[%s1383 + $0xa0] sm:$0xff]
      %v1405 = vld [vmem:[%s1383 + $0xa8] sm:$0xff]
      %v1406 = vld [vmem:[%s1383 + $0xb0] sm:$0xff]
      %v1407 = vld [vmem:[%s1383 + $0xb8] sm:$0xff]
      %v1408 = vld [vmem:[%s1383 + $0xc0] sm:$0xff]
      %v1409 = vld [vmem:[%s1383 + $0xc8] sm:$0xff]
      %v1410 = vld [vmem:[%s1383 + $0xd0] sm:$0xff]
      %v1411 = vld [vmem:[%s1383 + $0xd8] sm:$0xff]
      %v1412 = vld [vmem:[%s1383 + $0xe0] sm:$0xff]
      %v1413 = vld [vmem:[%s1383 + $0xe8] sm:$0xff]
      %v1414 = vld [vmem:[%s1383 + $0xf0] sm:$0xff]
      %v1415 = vld [vmem:[%s1383 + $0xf8] sm:$0xff]
      %v1416 = vld [vmem:[%s1383 + $0x100] sm:$0xff]
      %v1417 = vld [vmem:[%s1383 + $0x108] sm:$0xff]
      %v1418 = vld [vmem:[%s1383 + $0x110] sm:$0xff]
      %v1419 = vld [vmem:[%s1383 + $0x118] sm:$0xff]
      %v1420 = vld [vmem:[%s1383 + $0x120] sm:$0xff]
      %v1421 = vld [vmem:[%s1383 + $0x128] sm:$0xff]
      %v1422 = vld [vmem:[%s1383 + $0x130] sm:$0xff]
      %v1423 = vld [vmem:[%s1383 + $0x138] sm:$0xff]
      %v1424 = vld [vmem:[%s1383 + $0x140] sm:$0xff]
      %v1425 = vld [vmem:[%s1383 + $0x148] sm:$0xff]
      %v1426 = vld [vmem:[%s1383 + $0x150] sm:$0xff]
      %v1427 = vld [vmem:[%s1383 + $0x158] sm:$0xff]
      %v1428 = vld [vmem:[%s1383 + $0x160] sm:$0xff]
      %v1429 = vld [vmem:[%s1383 + $0x168] sm:$0xff]
      %v1430 = vld [vmem:[%s1383 + $0x170] sm:$0xff]
      %v1431 = vld [vmem:[%s1383 + $0x178] sm:$0xff]
      %v1432 = vld [vmem:[%s1383 + $0x180] sm:$0xff]
      %v1433 = vld [vmem:[%s1383 + $0x188] sm:$0xff]
      %v1434 = vld [vmem:[%s1383 + $0x190] sm:$0xff]
      %v1435 = vld [vmem:[%s1383 + $0x198] sm:$0xff]
      %v1438 = vrot.slane %v1381, 1
      %v1439 = vrot.slane %v1382, 1
      %v1441 = vsel %vm1189, %v1439, 0
      %1443 = vmatprep.subr.mxu0 %v1385
      %1444 = vmatpush1.msra.mxu0 %v1384
      %1445 = vmatprep.subr.mxu0 %v1387
      %1446 = vmatpush1.msra.mxu0 %v1386
      %1447 = vmatprep.subr.mxu0 %v1389
      %1448 = vmatpush1.msra.mxu0 %v1388
      %1449 = vmatprep.subr.mxu0 %v1391
      %1450 = vmatpush1.msra.mxu0 %v1390
      %1451 = vmatprep.subr.mxu0 %v1393
      %1452 = vmatpush1.msra.mxu0 %v1392
      %1453 = vmatprep.subr.mxu0 %v1395
      %1454 = vmatpush1.msra.mxu0 %v1394
      %1455 = vmatprep.subr.mxu0 %v1397
      %1456 = vmatpush1.msra.mxu0 %v1396
      %1457 = vmatprep.subr.mxu0 %v1399
      %1458 = vmatpush1.msra.mxu0 %v1398
      %1459 = vmatprep.subr.mxu0 %v1401
      %1460 = vmatpush1.msra.mxu0 %v1400
      %1461 = vmatprep.subr.mxu0 %v1403
      %1462 = vmatpush1.msra.mxu0 %v1402
      %1463 = vmatprep.subr.mxu0 %v1405
      %1464 = vmatpush1.msra.mxu0 %v1404
      %1465 = vmatprep.subr.mxu0 %v1407
      %1466 = vmatpush1.msra.mxu0 %v1406
      %1467 = vmatprep.subr.mxu0 %v1409
      %1468 = vmatpush1.msra.mxu0 %v1408
      %1469 = vmatprep.subr.mxu0 %v1411
      %1470 = vmatpush1.msra.mxu0 %v1410
      %1471 = vmatprep.subr.mxu0 %v1413
      %1472 = vmatpush1.msra.mxu0 %v1412
      %1473 = vmatprep.subr.mxu0 %v1415
      %1474 = vmatpush1.msra.mxu0 %v1414
      %1475 = vmatprep.subr.mxu0 %v1417
      %1476 = vmatpush1.msra.mxu0 %v1416
      %1477 = vmatprep.subr.mxu0 %v1419
      %1478 = vmatpush1.msra.mxu0 %v1418
      %1479 = vmatprep.subr.mxu0 %v1421
      %1480 = vmatpush1.msra.mxu0 %v1420
      %1481 = vmatprep.subr.mxu0 %v1423
      %1482 = vmatpush1.msra.mxu0 %v1422
      %1483 = vmatprep.subr.mxu0 %v1425
      %1484 = vmatpush1.msra.mxu0 %v1424
      %1485 = vmatprep.subr.mxu0 %v1427
      %1486 = vmatpush1.msra.mxu0 %v1426
      %1487 = vmatprep.subr.mxu0 %v1429
      %1488 = vmatpush1.msra.mxu0 %v1428
      %1489 = vmatprep.subr.mxu0 %v1431
      %1490 = vmatpush1.msra.mxu0 %v1430
      %1491 = vmatprep.subr.mxu0 %v1433
      %1492 = vmatpush1.msra.mxu0 %v1432
      %1493 = vmatprep.subr.mxu0 %v1435
      %1494 = vmatpush1.msra.mxu0 %v1434
      %1495 = vmatprep.subr.mxu0 0.0
      %1496 = vmatpush1.msra.mxu0 0.0
      %1497 = vmatprep.subr.mxu0 0.0
      %1498 = vmatpush1.msra.mxu0 0.0
      %1499 = vmatprep.subr.mxu0 0.0
      %1500 = vmatpush1.msra.mxu0 0.0
      %1501 = vmatprep.subr.mxu0 0.0
      %1502 = vmatpush1.msra.mxu0 0.0
      %1503 = vmatprep.subr.mxu0 0.0
      %1504 = vmatpush1.msra.mxu0 0.0
      %1505 = vmatprep.subr.mxu0 0.0
      %1506 = vmatpush1.msra.mxu0 0.0
      %1507 = vmatprep.mubr.f32.mxu0 %v1441
      %1508 = vmatmul.mubr.f32.gmra.mrb[0].mxu0 %v1438
      %v1509 = vpop.f32.mrb[0].mxu0
      %v1510 = vadd.f32 0.0, %v1509
      %v1511 = vpop.f32.mrb[0].mxu0
      %v1512 = vadd.f32 0.0, %v1511
      %1513 = vdwg.mxu0
      %v1514 = vadd.f32 %v1379, %v1510
      %v1515 = vadd.f32 %v1380, %v1512
      %v1516 = vld [vmem:[#allocation8] sm:$0xfc]
      %v1517 = vld [vmem:[#allocation8 + $0x8] sm:$0xfc]
      %v1518 = vld [vmem:[#allocation8 + $0x10] sm:$0x1]
      %v1519 = vld [vmem:[#allocation8 + $0x18] sm:$0x1]
      %s1520 = scalar_lea.vmem %s5, 832
      %v1521 = vld [vmem:[%s1520] sm:$0xff]
      %v1522 = vld [vmem:[%s1520 + $0x8] sm:$0xff]
      %v1523 = vld [vmem:[%s1520 + $0x10] sm:$0xff]
      %v1524 = vld [vmem:[%s1520 + $0x18] sm:$0xff]
      %v1525 = vld [vmem:[%s1520 + $0x20] sm:$0xff]
      %v1526 = vld [vmem:[%s1520 + $0x28] sm:$0xff]
      %v1527 = vld [vmem:[%s1520 + $0x30] sm:$0xff]
      %v1528 = vld [vmem:[%s1520 + $0x38] sm:$0xff]
      %v1529 = vld [vmem:[%s1520 + $0x40] sm:$0xff]
      %v1530 = vld [vmem:[%s1520 + $0x48] sm:$0xff]
      %v1531 = vld [vmem:[%s1520 + $0x50] sm:$0xff]
      %v1532 = vld [vmem:[%s1520 + $0x58] sm:$0xff]
      %v1533 = vld [vmem:[%s1520 + $0x60] sm:$0xff]
      %v1534 = vld [vmem:[%s1520 + $0x68] sm:$0xff]
      %v1535 = vld [vmem:[%s1520 + $0x70] sm:$0xff]
      %v1536 = vld [vmem:[%s1520 + $0x78] sm:$0xff]
      %v1537 = vld [vmem:[%s1520 + $0x80] sm:$0xff]
      %v1538 = vld [vmem:[%s1520 + $0x88] sm:$0xff]
      %v1539 = vld [vmem:[%s1520 + $0x90] sm:$0xff]
      %v1540 = vld [vmem:[%s1520 + $0x98] sm:$0xff]
      %v1541 = vld [vmem:[%s1520 + $0xa0] sm:$0xff]
      %v1542 = vld [vmem:[%s1520 + $0xa8] sm:$0xff]
      %v1543 = vld [vmem:[%s1520 + $0xb0] sm:$0xff]
      %v1544 = vld [vmem:[%s1520 + $0xb8] sm:$0xff]
      %v1545 = vld [vmem:[%s1520 + $0xc0] sm:$0xff]
      %v1546 = vld [vmem:[%s1520 + $0xc8] sm:$0xff]
      %v1547 = vld [vmem:[%s1520 + $0xd0] sm:$0xff]
      %v1548 = vld [vmem:[%s1520 + $0xd8] sm:$0xff]
      %v1549 = vld [vmem:[%s1520 + $0xe0] sm:$0xff]
      %v1550 = vld [vmem:[%s1520 + $0xe8] sm:$0xff]
      %v1551 = vld [vmem:[%s1520 + $0xf0] sm:$0xff]
      %v1552 = vld [vmem:[%s1520 + $0xf8] sm:$0xff]
      %v1553 = vld [vmem:[%s1520 + $0x100] sm:$0xff]
      %v1554 = vld [vmem:[%s1520 + $0x108] sm:$0xff]
      %v1555 = vld [vmem:[%s1520 + $0x110] sm:$0xff]
      %v1556 = vld [vmem:[%s1520 + $0x118] sm:$0xff]
      %v1557 = vld [vmem:[%s1520 + $0x120] sm:$0xff]
      %v1558 = vld [vmem:[%s1520 + $0x128] sm:$0xff]
      %v1559 = vld [vmem:[%s1520 + $0x130] sm:$0xff]
      %v1560 = vld [vmem:[%s1520 + $0x138] sm:$0xff]
      %v1561 = vld [vmem:[%s1520 + $0x140] sm:$0xff]
      %v1562 = vld [vmem:[%s1520 + $0x148] sm:$0xff]
      %v1563 = vld [vmem:[%s1520 + $0x150] sm:$0xff]
      %v1564 = vld [vmem:[%s1520 + $0x158] sm:$0xff]
      %v1565 = vld [vmem:[%s1520 + $0x160] sm:$0xff]
      %v1566 = vld [vmem:[%s1520 + $0x168] sm:$0xff]
      %v1567 = vld [vmem:[%s1520 + $0x170] sm:$0xff]
      %v1568 = vld [vmem:[%s1520 + $0x178] sm:$0xff]
      %v1569 = vld [vmem:[%s1520 + $0x180] sm:$0xff]
      %v1570 = vld [vmem:[%s1520 + $0x188] sm:$0xff]
      %v1571 = vld [vmem:[%s1520 + $0x190] sm:$0xff]
      %v1572 = vld [vmem:[%s1520 + $0x198] sm:$0xff]
      %v1577 = vrot.slane %v1516, 2
      %v1578 = vrot.slane %v1518, 2
      %v1579 = vsel %vm1036, %v1577, %v1578
      %v1580 = vrot.slane %v1517, 2
      %v1581 = vrot.slane %v1519, 2
      %v1582 = vsel %vm1036, %v1580, %v1581
      %v1584 = vsel %vm1189, %v1582, 0
      %1586 = vmatprep.subr.mxu0 %v1522
      %1587 = vmatpush1.msra.mxu0 %v1521
      %1588 = vmatprep.subr.mxu0 %v1524
      %1589 = vmatpush1.msra.mxu0 %v1523
      %1590 = vmatprep.subr.mxu0 %v1526
      %1591 = vmatpush1.msra.mxu0 %v1525
      %1592 = vmatprep.subr.mxu0 %v1528
      %1593 = vmatpush1.msra.mxu0 %v1527
      %1594 = vmatprep.subr.mxu0 %v1530
      %1595 = vmatpush1.msra.mxu0 %v1529
      %1596 = vmatprep.subr.mxu0 %v1532
      %1597 = vmatpush1.msra.mxu0 %v1531
      %1598 = vmatprep.subr.mxu0 %v1534
      %1599 = vmatpush1.msra.mxu0 %v1533
      %1600 = vmatprep.subr.mxu0 %v1536
      %1601 = vmatpush1.msra.mxu0 %v1535
      %1602 = vmatprep.subr.mxu0 %v1538
      %1603 = vmatpush1.msra.mxu0 %v1537
      %1604 = vmatprep.subr.mxu0 %v1540
      %1605 = vmatpush1.msra.mxu0 %v1539
      %1606 = vmatprep.subr.mxu0 %v1542
      %1607 = vmatpush1.msra.mxu0 %v1541
      %1608 = vmatprep.subr.mxu0 %v1544
      %1609 = vmatpush1.msra.mxu0 %v1543
      %1610 = vmatprep.subr.mxu0 %v1546
      %1611 = vmatpush1.msra.mxu0 %v1545
      %1612 = vmatprep.subr.mxu0 %v1548
      %1613 = vmatpush1.msra.mxu0 %v1547
      %1614 = vmatprep.subr.mxu0 %v1550
      %1615 = vmatpush1.msra.mxu0 %v1549
      %1616 = vmatprep.subr.mxu0 %v1552
      %1617 = vmatpush1.msra.mxu0 %v1551
      %1618 = vmatprep.subr.mxu0 %v1554
      %1619 = vmatpush1.msra.mxu0 %v1553
      %1620 = vmatprep.subr.mxu0 %v1556
      %1621 = vmatpush1.msra.mxu0 %v1555
      %1622 = vmatprep.subr.mxu0 %v1558
      %1623 = vmatpush1.msra.mxu0 %v1557
      %1624 = vmatprep.subr.mxu0 %v1560
      %1625 = vmatpush1.msra.mxu0 %v1559
      %1626 = vmatprep.subr.mxu0 %v1562
      %1627 = vmatpush1.msra.mxu0 %v1561
      %1628 = vmatprep.subr.mxu0 %v1564
      %1629 = vmatpush1.msra.mxu0 %v1563
      %1630 = vmatprep.subr.mxu0 %v1566
      %1631 = vmatpush1.msra.mxu0 %v1565
      %1632 = vmatprep.subr.mxu0 %v1568
      %1633 = vmatpush1.msra.mxu0 %v1567
      %1634 = vmatprep.subr.mxu0 %v1570
      %1635 = vmatpush1.msra.mxu0 %v1569
      %1636 = vmatprep.subr.mxu0 %v1572
      %1637 = vmatpush1.msra.mxu0 %v1571
      %1638 = vmatprep.subr.mxu0 0.0
      %1639 = vmatpush1.msra.mxu0 0.0
      %1640 = vmatprep.subr.mxu0 0.0
      %1641 = vmatpush1.msra.mxu0 0.0
      %1642 = vmatprep.subr.mxu0 0.0
      %1643 = vmatpush1.msra.mxu0 0.0
      %1644 = vmatprep.subr.mxu0 0.0
      %1645 = vmatpush1.msra.mxu0 0.0
      %1646 = vmatprep.subr.mxu0 0.0
      %1647 = vmatpush1.msra.mxu0 0.0
      %1648 = vmatprep.subr.mxu0 0.0
      %1649 = vmatpush1.msra.mxu0 0.0
      %1650 = vmatprep.mubr.f32.mxu0 %v1584
      %1651 = vmatmul.mubr.f32.gmra.mrb[0].mxu0 %v1579
      %v1652 = vpop.f32.mrb[0].mxu0
      %v1653 = vadd.f32 0.0, %v1652
      %v1654 = vpop.f32.mrb[0].mxu0
      %v1655 = vadd.f32 0.0, %v1654
      %1656 = vdwg.mxu0
      %v1657 = vadd.f32 %v1514, %v1653
      %v1658 = vadd.f32 %v1515, %v1655
      %v1659 = vmax.f32 %v1657, 0.0
      %v1660 = vmax.f32 %v1658, 0.0
      %1661 = vst [vmem:[#allocation9] sm:$0x7f] %v1659
      %vm1662 = vcmask 784384
      %1663 = vst.msk [vmem:[#allocation9 + $0x8] sm:$0x7f] %vm1662, %v1660
      %v1664 = vld [vmem:[%s8] sm:$0x1]
      %v1665 = vadd.f32 %v1664, 0.0
      %v1666 = vld [vmem:[#allocation9] ss:$8 sm:$0x3]
      %v1667 = vld [vmem:[%s7] sm:$0xff]
      %v1668 = vld [vmem:[%s7 + $0x8] sm:$0xff]
      %v1669 = vld [vmem:[%s7 + $0x10] sm:$0xff]
      %v1670 = vld [vmem:[%s7 + $0x18] sm:$0xff]
      %v1671 = vld [vmem:[%s7 + $0x20] sm:$0xff]
      %v1672 = vld [vmem:[%s7 + $0x28] sm:$0xff]
      %v1673 = vld [vmem:[%s7 + $0x30] sm:$0xff]
      %v1674 = vld [vmem:[%s7 + $0x38] sm:$0xff]
      %v1675 = vld [vmem:[%s7 + $0x40] sm:$0xff]
      %v1676 = vld [vmem:[%s7 + $0x48] sm:$0xff]
      %v1677 = vld [vmem:[%s7 + $0x50] sm:$0xff]
      %v1678 = vld [vmem:[%s7 + $0x58] sm:$0xff]
      %v1679 = vld [vmem:[%s7 + $0x60] sm:$0xff]
      %v1680 = vld [vmem:[%s7 + $0x68] sm:$0xff]
      %v1681 = vld [vmem:[%s7 + $0x70] sm:$0xff]
      %v1682 = vld [vmem:[%s7 + $0x78] sm:$0xff]
      %v1683 = vld [vmem:[%s7 + $0x80] sm:$0xff]
      %v1684 = vld [vmem:[%s7 + $0x88] sm:$0xff]
      %v1685 = vld [vmem:[%s7 + $0x90] sm:$0xff]
      %v1686 = vld [vmem:[%s7 + $0x98] sm:$0xff]
      %v1687 = vld [vmem:[%s7 + $0xa0] sm:$0xff]
      %v1688 = vld [vmem:[%s7 + $0xa8] sm:$0xff]
      %v1689 = vld [vmem:[%s7 + $0xb0] sm:$0xff]
      %v1690 = vld [vmem:[%s7 + $0xb8] sm:$0xff]
      %v1691 = vld [vmem:[%s7 + $0xc0] sm:$0xff]
      %v1692 = vld [vmem:[%s7 + $0xc8] sm:$0xff]
      %v1693 = vld [vmem:[%s7 + $0xd0] sm:$0xff]
      %v1694 = vld [vmem:[%s7 + $0xd8] sm:$0xff]
      %v1696 = vlaneseq
      %v1697 = vshrl.u32 %v1696, 7
      %v1698 = vsub.s32 0, %v1697
      %v1699 = vrot.slane %v1666, %v1698
      %v1700 = vlaneseq
      %v1701 = vshrl.u32 %v1700, 7
      %v1702 = vsub.s32 1, %v1701
      %v1703 = vrot.slane %v1666, %v1702
      %v1705 = vsel %vm463, %v1703, 0
      %1707 = vmatprep.subr.mxu0 0.0
      %1708 = vmatpush1.msra.mxu0 %v1667
      %1709 = vmatprep.subr.mxu0 0.0
      %1710 = vmatpush1.msra.mxu0 %v1668
      %1711 = vmatprep.subr.mxu0 0.0
      %1712 = vmatpush1.msra.mxu0 %v1669
      %1713 = vmatprep.subr.mxu0 0.0
      %1714 = vmatpush1.msra.mxu0 %v1670
      %1715 = vmatprep.subr.mxu0 0.0
      %1716 = vmatpush1.msra.mxu0 %v1671
      %1717 = vmatprep.subr.mxu0 0.0
      %1718 = vmatpush1.msra.mxu0 %v1672
      %1719 = vmatprep.subr.mxu0 0.0
      %1720 = vmatpush1.msra.mxu0 %v1673
      %1721 = vmatprep.subr.mxu0 0.0
      %1722 = vmatpush1.msra.mxu0 %v1674
      %1723 = vmatprep.subr.mxu0 0.0
      %1724 = vmatpush1.msra.mxu0 %v1675
      %1725 = vmatprep.subr.mxu0 0.0
      %1726 = vmatpush1.msra.mxu0 %v1676
      %1727 = vmatprep.subr.mxu0 0.0
      %1728 = vmatpush1.msra.mxu0 %v1677
      %1729 = vmatprep.subr.mxu0 0.0
      %1730 = vmatpush1.msra.mxu0 %v1678
      %1731 = vmatprep.subr.mxu0 0.0
      %1732 = vmatpush1.msra.mxu0 %v1679
      %1733 = vmatprep.subr.mxu0 0.0
      %1734 = vmatpush1.msra.mxu0 %v1680
      %1735 = vmatprep.subr.mxu0 0.0
      %1736 = vmatpush1.msra.mxu0 %v1681
      %1737 = vmatprep.subr.mxu0 0.0
      %1738 = vmatpush1.msra.mxu0 %v1682
      %1739 = vmatprep.subr.mxu0 0.0
      %1740 = vmatpush1.msra.mxu0 %v1683
      %1741 = vmatprep.subr.mxu0 0.0
      %1742 = vmatpush1.msra.mxu0 %v1684
      %1743 = vmatprep.subr.mxu0 0.0
      %1744 = vmatpush1.msra.mxu0 %v1685
      %1745 = vmatprep.subr.mxu0 0.0
      %1746 = vmatpush1.msra.mxu0 %v1686
      %1747 = vmatprep.subr.mxu0 0.0
      %1748 = vmatpush1.msra.mxu0 %v1687
      %1749 = vmatprep.subr.mxu0 0.0
      %1750 = vmatpush1.msra.mxu0 %v1688
      %1751 = vmatprep.subr.mxu0 0.0
      %1752 = vmatpush1.msra.mxu0 %v1689
      %1753 = vmatprep.subr.mxu0 0.0
      %1754 = vmatpush1.msra.mxu0 %v1690
      %1755 = vmatprep.subr.mxu0 0.0
      %1756 = vmatpush1.msra.mxu0 %v1691
      %1757 = vmatprep.subr.mxu0 0.0
      %1758 = vmatpush1.msra.mxu0 %v1692
      %1759 = vmatprep.subr.mxu0 0.0
      %1760 = vmatpush1.msra.mxu0 %v1693
      %1761 = vmatprep.subr.mxu0 0.0
      %1762 = vmatpush1.msra.mxu0 %v1694
      %1763 = vmatprep.subr.mxu0 0.0
      %1764 = vmatpush1.msra.mxu0 0.0
      %1765 = vmatprep.subr.mxu0 0.0
      %1766 = vmatpush1.msra.mxu0 0.0
      %1767 = vmatprep.subr.mxu0 0.0
      %1768 = vmatpush1.msra.mxu0 0.0
      %1769 = vmatprep.subr.mxu0 0.0
      %1770 = vmatpush1.msra.mxu0 0.0
      %1771 = vmatprep.mubr.f32.mxu0 %v1705
      %1772 = vmatmul.mubr.f32.gmra.mrb[0].mxu0 %v1699
      %v1773 = vpop.f32.mrb[0].mxu0
      %v1774 = vadd.f32 0.0, %v1773
      %v1775 = vpop.f32.mrb[0].mxu0
      %1776 = vdwg.mxu0
      %v1777 = vadd.f32 %v1665, %v1774
      %s1778 = scalar_lea.vmem [#allocation9], 1
      %v1779 = vld [vmem:[%s1778] ss:$8 sm:$0x3]
      %s1780 = scalar_lea.vmem %s7, 224
      %v1781 = vld [vmem:[%s1780] sm:$0xff]
      %v1782 = vld [vmem:[%s1780 + $0x8] sm:$0xff]
      %v1783 = vld [vmem:[%s1780 + $0x10] sm:$0xff]
      %v1784 = vld [vmem:[%s1780 + $0x18] sm:$0xff]
      %v1785 = vld [vmem:[%s1780 + $0x20] sm:$0xff]
      %v1786 = vld [vmem:[%s1780 + $0x28] sm:$0xff]
      %v1787 = vld [vmem:[%s1780 + $0x30] sm:$0xff]
      %v1788 = vld [vmem:[%s1780 + $0x38] sm:$0xff]
      %v1789 = vld [vmem:[%s1780 + $0x40] sm:$0xff]
      %v1790 = vld [vmem:[%s1780 + $0x48] sm:$0xff]
      %v1791 = vld [vmem:[%s1780 + $0x50] sm:$0xff]
      %v1792 = vld [vmem:[%s1780 + $0x58] sm:$0xff]
      %v1793 = vld [vmem:[%s1780 + $0x60] sm:$0xff]
      %v1794 = vld [vmem:[%s1780 + $0x68] sm:$0xff]
      %v1795 = vld [vmem:[%s1780 + $0x70] sm:$0xff]
      %v1796 = vld [vmem:[%s1780 + $0x78] sm:$0xff]
      %v1797 = vld [vmem:[%s1780 + $0x80] sm:$0xff]
      %v1798 = vld [vmem:[%s1780 + $0x88] sm:$0xff]
      %v1799 = vld [vmem:[%s1780 + $0x90] sm:$0xff]
      %v1800 = vld [vmem:[%s1780 + $0x98] sm:$0xff]
      %v1801 = vld [vmem:[%s1780 + $0xa0] sm:$0xff]
      %v1802 = vld [vmem:[%s1780 + $0xa8] sm:$0xff]
      %v1803 = vld [vmem:[%s1780 + $0xb0] sm:$0xff]
      %v1804 = vld [vmem:[%s1780 + $0xb8] sm:$0xff]
      %v1805 = vld [vmem:[%s1780 + $0xc0] sm:$0xff]
      %v1806 = vld [vmem:[%s1780 + $0xc8] sm:$0xff]
      %v1807 = vld [vmem:[%s1780 + $0xd0] sm:$0xff]
      %v1808 = vld [vmem:[%s1780 + $0xd8] sm:$0xff]
      %v1810 = vlaneseq
      %v1811 = vshrl.u32 %v1810, 7
      %v1812 = vsub.s32 0, %v1811
      %v1813 = vrot.slane %v1779, %v1812
      %v1814 = vlaneseq
      %v1815 = vshrl.u32 %v1814, 7
      %v1816 = vsub.s32 1, %v1815
      %v1817 = vrot.slane %v1779, %v1816
      %v1819 = vsel %vm463, %v1817, 0
      %1821 = vmatprep.subr.mxu0 0.0
      %1822 = vmatpush1.msra.mxu0 %v1781
      %1823 = vmatprep.subr.mxu0 0.0
      %1824 = vmatpush1.msra.mxu0 %v1782
      %1825 = vmatprep.subr.mxu0 0.0
      %1826 = vmatpush1.msra.mxu0 %v1783
      %1827 = vmatprep.subr.mxu0 0.0
      %1828 = vmatpush1.msra.mxu0 %v1784
      %1829 = vmatprep.subr.mxu0 0.0
      %1830 = vmatpush1.msra.mxu0 %v1785
      %1831 = vmatprep.subr.mxu0 0.0
      %1832 = vmatpush1.msra.mxu0 %v1786
      %1833 = vmatprep.subr.mxu0 0.0
      %1834 = vmatpush1.msra.mxu0 %v1787
      %1835 = vmatprep.subr.mxu0 0.0
      %1836 = vmatpush1.msra.mxu0 %v1788
      %1837 = vmatprep.subr.mxu0 0.0
      %1838 = vmatpush1.msra.mxu0 %v1789
      %1839 = vmatprep.subr.mxu0 0.0
      %1840 = vmatpush1.msra.mxu0 %v1790
      %1841 = vmatprep.subr.mxu0 0.0
      %1842 = vmatpush1.msra.mxu0 %v1791
      %1843 = vmatprep.subr.mxu0 0.0
      %1844 = vmatpush1.msra.mxu0 %v1792
      %1845 = vmatprep.subr.mxu0 0.0
      %1846 = vmatpush1.msra.mxu0 %v1793
      %1847 = vmatprep.subr.mxu0 0.0
      %1848 = vmatpush1.msra.mxu0 %v1794
      %1849 = vmatprep.subr.mxu0 0.0
      %1850 = vmatpush1.msra.mxu0 %v1795
      %1851 = vmatprep.subr.mxu0 0.0
      %1852 = vmatpush1.msra.mxu0 %v1796
      %1853 = vmatprep.subr.mxu0 0.0
      %1854 = vmatpush1.msra.mxu0 %v1797
      %1855 = vmatprep.subr.mxu0 0.0
      %1856 = vmatpush1.msra.mxu0 %v1798
      %1857 = vmatprep.subr.mxu0 0.0
      %1858 = vmatpush1.msra.mxu0 %v1799
      %1859 = vmatprep.subr.mxu0 0.0
      %1860 = vmatpush1.msra.mxu0 %v1800
      %1861 = vmatprep.subr.mxu0 0.0
      %1862 = vmatpush1.msra.mxu0 %v1801
      %1863 = vmatprep.subr.mxu0 0.0
      %1864 = vmatpush1.msra.mxu0 %v1802
      %1865 = vmatprep.subr.mxu0 0.0
      %1866 = vmatpush1.msra.mxu0 %v1803
      %1867 = vmatprep.subr.mxu0 0.0
      %1868 = vmatpush1.msra.mxu0 %v1804
      %1869 = vmatprep.subr.mxu0 0.0
      %1870 = vmatpush1.msra.mxu0 %v1805
      %1871 = vmatprep.subr.mxu0 0.0
      %1872 = vmatpush1.msra.mxu0 %v1806
      %1873 = vmatprep.subr.mxu0 0.0
      %1874 = vmatpush1.msra.mxu0 %v1807
      %1875 = vmatprep.subr.mxu0 0.0
      %1876 = vmatpush1.msra.mxu0 %v1808
      %1877 = vmatprep.subr.mxu0 0.0
      %1878 = vmatpush1.msra.mxu0 0.0
      %1879 = vmatprep.subr.mxu0 0.0
      %1880 = vmatpush1.msra.mxu0 0.0
      %1881 = vmatprep.subr.mxu0 0.0
      %1882 = vmatpush1.msra.mxu0 0.0
      %1883 = vmatprep.subr.mxu0 0.0
      %1884 = vmatpush1.msra.mxu0 0.0
      %1885 = vmatprep.mubr.f32.mxu0 %v1819
      %1886 = vmatmul.mubr.f32.gmra.mrb[0].mxu0 %v1813
      %v1887 = vpop.f32.mrb[0].mxu0
      %v1888 = vadd.f32 0.0, %v1887
      %v1889 = vpop.f32.mrb[0].mxu0
      %1890 = vdwg.mxu0
      %v1891 = vadd.f32 %v1777, %v1888
      %s1892 = scalar_lea.vmem [#allocation9], 2
      %v1893 = vld [vmem:[%s1892] ss:$8 sm:$0x3]
      %s1894 = scalar_lea.vmem %s7, 448
      %v1895 = vld [vmem:[%s1894] sm:$0xff]
      %v1896 = vld [vmem:[%s1894 + $0x8] sm:$0xff]
      %v1897 = vld [vmem:[%s1894 + $0x10] sm:$0xff]
      %v1898 = vld [vmem:[%s1894 + $0x18] sm:$0xff]
      %v1899 = vld [vmem:[%s1894 + $0x20] sm:$0xff]
      %v1900 = vld [vmem:[%s1894 + $0x28] sm:$0xff]
      %v1901 = vld [vmem:[%s1894 + $0x30] sm:$0xff]
      %v1902 = vld [vmem:[%s1894 + $0x38] sm:$0xff]
      %v1903 = vld [vmem:[%s1894 + $0x40] sm:$0xff]
      %v1904 = vld [vmem:[%s1894 + $0x48] sm:$0xff]
      %v1905 = vld [vmem:[%s1894 + $0x50] sm:$0xff]
      %v1906 = vld [vmem:[%s1894 + $0x58] sm:$0xff]
      %v1907 = vld [vmem:[%s1894 + $0x60] sm:$0xff]
      %v1908 = vld [vmem:[%s1894 + $0x68] sm:$0xff]
      %v1909 = vld [vmem:[%s1894 + $0x70] sm:$0xff]
      %v1910 = vld [vmem:[%s1894 + $0x78] sm:$0xff]
      %v1911 = vld [vmem:[%s1894 + $0x80] sm:$0xff]
      %v1912 = vld [vmem:[%s1894 + $0x88] sm:$0xff]
      %v1913 = vld [vmem:[%s1894 + $0x90] sm:$0xff]
      %v1914 = vld [vmem:[%s1894 + $0x98] sm:$0xff]
      %v1915 = vld [vmem:[%s1894 + $0xa0] sm:$0xff]
      %v1916 = vld [vmem:[%s1894 + $0xa8] sm:$0xff]
      %v1917 = vld [vmem:[%s1894 + $0xb0] sm:$0xff]
      %v1918 = vld [vmem:[%s1894 + $0xb8] sm:$0xff]
      %v1919 = vld [vmem:[%s1894 + $0xc0] sm:$0xff]
      %v1920 = vld [vmem:[%s1894 + $0xc8] sm:$0xff]
      %v1921 = vld [vmem:[%s1894 + $0xd0] sm:$0xff]
      %v1922 = vld [vmem:[%s1894 + $0xd8] sm:$0xff]
      %v1924 = vlaneseq
      %v1925 = vshrl.u32 %v1924, 7
      %v1926 = vsub.s32 0, %v1925
      %v1927 = vrot.slane %v1893, %v1926
      %v1928 = vlaneseq
      %v1929 = vshrl.u32 %v1928, 7
      %v1930 = vsub.s32 1, %v1929
      %v1931 = vrot.slane %v1893, %v1930
      %v1933 = vsel %vm463, %v1931, 0
      %1935 = vmatprep.subr.mxu0 0.0
      %1936 = vmatpush1.msra.mxu0 %v1895
      %1937 = vmatprep.subr.mxu0 0.0
      %1938 = vmatpush1.msra.mxu0 %v1896
      %1939 = vmatprep.subr.mxu0 0.0
      %1940 = vmatpush1.msra.mxu0 %v1897
      %1941 = vmatprep.subr.mxu0 0.0
      %1942 = vmatpush1.msra.mxu0 %v1898
      %1943 = vmatprep.subr.mxu0 0.0
      %1944 = vmatpush1.msra.mxu0 %v1899
      %1945 = vmatprep.subr.mxu0 0.0
      %1946 = vmatpush1.msra.mxu0 %v1900
      %1947 = vmatprep.subr.mxu0 0.0
      %1948 = vmatpush1.msra.mxu0 %v1901
      %1949 = vmatprep.subr.mxu0 0.0
      %1950 = vmatpush1.msra.mxu0 %v1902
      %1951 = vmatprep.subr.mxu0 0.0
      %1952 = vmatpush1.msra.mxu0 %v1903
      %1953 = vmatprep.subr.mxu0 0.0
      %1954 = vmatpush1.msra.mxu0 %v1904
      %1955 = vmatprep.subr.mxu0 0.0
      %1956 = vmatpush1.msra.mxu0 %v1905
      %1957 = vmatprep.subr.mxu0 0.0
      %1958 = vmatpush1.msra.mxu0 %v1906
      %1959 = vmatprep.subr.mxu0 0.0
      %1960 = vmatpush1.msra.mxu0 %v1907
      %1961 = vmatprep.subr.mxu0 0.0
      %1962 = vmatpush1.msra.mxu0 %v1908
      %1963 = vmatprep.subr.mxu0 0.0
      %1964 = vmatpush1.msra.mxu0 %v1909
      %1965 = vmatprep.subr.mxu0 0.0
      %1966 = vmatpush1.msra.mxu0 %v1910
      %1967 = vmatprep.subr.mxu0 0.0
      %1968 = vmatpush1.msra.mxu0 %v1911
      %1969 = vmatprep.subr.mxu0 0.0
      %1970 = vmatpush1.msra.mxu0 %v1912
      %1971 = vmatprep.subr.mxu0 0.0
      %1972 = vmatpush1.msra.mxu0 %v1913
      %1973 = vmatprep.subr.mxu0 0.0
      %1974 = vmatpush1.msra.mxu0 %v1914
      %1975 = vmatprep.subr.mxu0 0.0
      %1976 = vmatpush1.msra.mxu0 %v1915
      %1977 = vmatprep.subr.mxu0 0.0
      %1978 = vmatpush1.msra.mxu0 %v1916
      %1979 = vmatprep.subr.mxu0 0.0
      %1980 = vmatpush1.msra.mxu0 %v1917
      %1981 = vmatprep.subr.mxu0 0.0
      %1982 = vmatpush1.msra.mxu0 %v1918
      %1983 = vmatprep.subr.mxu0 0.0
      %1984 = vmatpush1.msra.mxu0 %v1919
      %1985 = vmatprep.subr.mxu0 0.0
      %1986 = vmatpush1.msra.mxu0 %v1920
      %1987 = vmatprep.subr.mxu0 0.0
      %1988 = vmatpush1.msra.mxu0 %v1921
      %1989 = vmatprep.subr.mxu0 0.0
      %1990 = vmatpush1.msra.mxu0 %v1922
      %1991 = vmatprep.subr.mxu0 0.0
      %1992 = vmatpush1.msra.mxu0 0.0
      %1993 = vmatprep.subr.mxu0 0.0
      %1994 = vmatpush1.msra.mxu0 0.0
      %1995 = vmatprep.subr.mxu0 0.0
      %1996 = vmatpush1.msra.mxu0 0.0
      %1997 = vmatprep.subr.mxu0 0.0
      %1998 = vmatpush1.msra.mxu0 0.0
      %1999 = vmatprep.mubr.f32.mxu0 %v1933
      %2000 = vmatmul.mubr.f32.gmra.mrb[0].mxu0 %v1927
      %v2001 = vpop.f32.mrb[0].mxu0
      %v2002 = vadd.f32 0.0, %v2001
      %v2003 = vpop.f32.mrb[0].mxu0
      %2004 = vdwg.mxu0
      %v2005 = vadd.f32 %v1891, %v2002
      %s2006 = scalar_lea.vmem [#allocation9], 3
      %v2007 = vld [vmem:[%s2006] ss:$8 sm:$0x3]
      %s2008 = scalar_lea.vmem %s7, 672
      %v2009 = vld [vmem:[%s2008] sm:$0xff]
      %v2010 = vld [vmem:[%s2008 + $0x8] sm:$0xff]
      %v2011 = vld [vmem:[%s2008 + $0x10] sm:$0xff]
      %v2012 = vld [vmem:[%s2008 + $0x18] sm:$0xff]
      %v2013 = vld [vmem:[%s2008 + $0x20] sm:$0xff]
      %v2014 = vld [vmem:[%s2008 + $0x28] sm:$0xff]
      %v2015 = vld [vmem:[%s2008 + $0x30] sm:$0xff]
      %v2016 = vld [vmem:[%s2008 + $0x38] sm:$0xff]
      %v2017 = vld [vmem:[%s2008 + $0x40] sm:$0xff]
      %v2018 = vld [vmem:[%s2008 + $0x48] sm:$0xff]
      %v2019 = vld [vmem:[%s2008 + $0x50] sm:$0xff]
      %v2020 = vld [vmem:[%s2008 + $0x58] sm:$0xff]
      %v2021 = vld [vmem:[%s2008 + $0x60] sm:$0xff]
      %v2022 = vld [vmem:[%s2008 + $0x68] sm:$0xff]
      %v2023 = vld [vmem:[%s2008 + $0x70] sm:$0xff]
      %v2024 = vld [vmem:[%s2008 + $0x78] sm:$0xff]
      %v2025 = vld [vmem:[%s2008 + $0x80] sm:$0xff]
      %v2026 = vld [vmem:[%s2008 + $0x88] sm:$0xff]
      %v2027 = vld [vmem:[%s2008 + $0x90] sm:$0xff]
      %v2028 = vld [vmem:[%s2008 + $0x98] sm:$0xff]
      %v2029 = vld [vmem:[%s2008 + $0xa0] sm:$0xff]
      %v2030 = vld [vmem:[%s2008 + $0xa8] sm:$0xff]
      %v2031 = vld [vmem:[%s2008 + $0xb0] sm:$0xff]
      %v2032 = vld [vmem:[%s2008 + $0xb8] sm:$0xff]
      %v2033 = vld [vmem:[%s2008 + $0xc0] sm:$0xff]
      %v2034 = vld [vmem:[%s2008 + $0xc8] sm:$0xff]
      %v2035 = vld [vmem:[%s2008 + $0xd0] sm:$0xff]
      %v2036 = vld [vmem:[%s2008 + $0xd8] sm:$0xff]
      %v2038 = vlaneseq
      %v2039 = vshrl.u32 %v2038, 7
      %v2040 = vsub.s32 0, %v2039
      %v2041 = vrot.slane %v2007, %v2040
      %v2042 = vlaneseq
      %v2043 = vshrl.u32 %v2042, 7
      %v2044 = vsub.s32 1, %v2043
      %v2045 = vrot.slane %v2007, %v2044
      %v2047 = vsel %vm463, %v2045, 0
      %2049 = vmatprep.subr.mxu0 0.0
      %2050 = vmatpush1.msra.mxu0 %v2009
      %2051 = vmatprep.subr.mxu0 0.0
      %2052 = vmatpush1.msra.mxu0 %v2010
      %2053 = vmatprep.subr.mxu0 0.0
      %2054 = vmatpush1.msra.mxu0 %v2011
      %2055 = vmatprep.subr.mxu0 0.0
      %2056 = vmatpush1.msra.mxu0 %v2012
      %2057 = vmatprep.subr.mxu0 0.0
      %2058 = vmatpush1.msra.mxu0 %v2013
      %2059 = vmatprep.subr.mxu0 0.0
      %2060 = vmatpush1.msra.mxu0 %v2014
      %2061 = vmatprep.subr.mxu0 0.0
      %2062 = vmatpush1.msra.mxu0 %v2015
      %2063 = vmatprep.subr.mxu0 0.0
      %2064 = vmatpush1.msra.mxu0 %v2016
      %2065 = vmatprep.subr.mxu0 0.0
      %2066 = vmatpush1.msra.mxu0 %v2017
      %2067 = vmatprep.subr.mxu0 0.0
      %2068 = vmatpush1.msra.mxu0 %v2018
      %2069 = vmatprep.subr.mxu0 0.0
      %2070 = vmatpush1.msra.mxu0 %v2019
      %2071 = vmatprep.subr.mxu0 0.0
      %2072 = vmatpush1.msra.mxu0 %v2020
      %2073 = vmatprep.subr.mxu0 0.0
      %2074 = vmatpush1.msra.mxu0 %v2021
      %2075 = vmatprep.subr.mxu0 0.0
      %2076 = vmatpush1.msra.mxu0 %v2022
      %2077 = vmatprep.subr.mxu0 0.0
      %2078 = vmatpush1.msra.mxu0 %v2023
      %2079 = vmatprep.subr.mxu0 0.0
      %2080 = vmatpush1.msra.mxu0 %v2024
      %2081 = vmatprep.subr.mxu0 0.0
      %2082 = vmatpush1.msra.mxu0 %v2025
      %2083 = vmatprep.subr.mxu0 0.0
      %2084 = vmatpush1.msra.mxu0 %v2026
      %2085 = vmatprep.subr.mxu0 0.0
      %2086 = vmatpush1.msra.mxu0 %v2027
      %2087 = vmatprep.subr.mxu0 0.0
      %2088 = vmatpush1.msra.mxu0 %v2028
      %2089 = vmatprep.subr.mxu0 0.0
      %2090 = vmatpush1.msra.mxu0 %v2029
      %2091 = vmatprep.subr.mxu0 0.0
      %2092 = vmatpush1.msra.mxu0 %v2030
      %2093 = vmatprep.subr.mxu0 0.0
      %2094 = vmatpush1.msra.mxu0 %v2031
      %2095 = vmatprep.subr.mxu0 0.0
      %2096 = vmatpush1.msra.mxu0 %v2032
      %2097 = vmatprep.subr.mxu0 0.0
      %2098 = vmatpush1.msra.mxu0 %v2033
      %2099 = vmatprep.subr.mxu0 0.0
      %2100 = vmatpush1.msra.mxu0 %v2034
      %2101 = vmatprep.subr.mxu0 0.0
      %2102 = vmatpush1.msra.mxu0 %v2035
      %2103 = vmatprep.subr.mxu0 0.0
      %2104 = vmatpush1.msra.mxu0 %v2036
      %2105 = vmatprep.subr.mxu0 0.0
      %2106 = vmatpush1.msra.mxu0 0.0
      %2107 = vmatprep.subr.mxu0 0.0
      %2108 = vmatpush1.msra.mxu0 0.0
      %2109 = vmatprep.subr.mxu0 0.0
      %2110 = vmatpush1.msra.mxu0 0.0
      %2111 = vmatprep.subr.mxu0 0.0
      %2112 = vmatpush1.msra.mxu0 0.0
      %2113 = vmatprep.mubr.f32.mxu0 %v2047
      %2114 = vmatmul.mubr.f32.gmra.mrb[0].mxu0 %v2041
      %v2115 = vpop.f32.mrb[0].mxu0
      %v2116 = vadd.f32 0.0, %v2115
      %v2117 = vpop.f32.mrb[0].mxu0
      %2118 = vdwg.mxu0
      %v2119 = vadd.f32 %v2005, %v2116
      %s2120 = scalar_lea.vmem [#allocation9], 4
      %v2121 = vld [vmem:[%s2120] ss:$8 sm:$0x3]
      %s2122 = scalar_lea.vmem %s7, 896
      %v2123 = vld [vmem:[%s2122] sm:$0xff]
      %v2124 = vld [vmem:[%s2122 + $0x8] sm:$0xff]
      %v2125 = vld [vmem:[%s2122 + $0x10] sm:$0xff]
      %v2126 = vld [vmem:[%s2122 + $0x18] sm:$0xff]
      %v2127 = vld [vmem:[%s2122 + $0x20] sm:$0xff]
      %v2128 = vld [vmem:[%s2122 + $0x28] sm:$0xff]
      %v2129 = vld [vmem:[%s2122 + $0x30] sm:$0xff]
      %v2130 = vld [vmem:[%s2122 + $0x38] sm:$0xff]
      %v2131 = vld [vmem:[%s2122 + $0x40] sm:$0xff]
      %v2132 = vld [vmem:[%s2122 + $0x48] sm:$0xff]
      %v2133 = vld [vmem:[%s2122 + $0x50] sm:$0xff]
      %v2134 = vld [vmem:[%s2122 + $0x58] sm:$0xff]
      %v2135 = vld [vmem:[%s2122 + $0x60] sm:$0xff]
      %v2136 = vld [vmem:[%s2122 + $0x68] sm:$0xff]
      %v2137 = vld [vmem:[%s2122 + $0x70] sm:$0xff]
      %v2138 = vld [vmem:[%s2122 + $0x78] sm:$0xff]
      %v2139 = vld [vmem:[%s2122 + $0x80] sm:$0xff]
      %v2140 = vld [vmem:[%s2122 + $0x88] sm:$0xff]
      %v2141 = vld [vmem:[%s2122 + $0x90] sm:$0xff]
      %v2142 = vld [vmem:[%s2122 + $0x98] sm:$0xff]
      %v2143 = vld [vmem:[%s2122 + $0xa0] sm:$0xff]
      %v2144 = vld [vmem:[%s2122 + $0xa8] sm:$0xff]
      %v2145 = vld [vmem:[%s2122 + $0xb0] sm:$0xff]
      %v2146 = vld [vmem:[%s2122 + $0xb8] sm:$0xff]
      %v2147 = vld [vmem:[%s2122 + $0xc0] sm:$0xff]
      %v2148 = vld [vmem:[%s2122 + $0xc8] sm:$0xff]
      %v2149 = vld [vmem:[%s2122 + $0xd0] sm:$0xff]
      %v2150 = vld [vmem:[%s2122 + $0xd8] sm:$0xff]
      %v2152 = vlaneseq
      %v2153 = vshrl.u32 %v2152, 7
      %v2154 = vsub.s32 0, %v2153
      %v2155 = vrot.slane %v2121, %v2154
      %v2156 = vlaneseq
      %v2157 = vshrl.u32 %v2156, 7
      %v2158 = vsub.s32 1, %v2157
      %v2159 = vrot.slane %v2121, %v2158
      %v2161 = vsel %vm463, %v2159, 0
      %2163 = vmatprep.subr.mxu0 0.0
      %2164 = vmatpush1.msra.mxu0 %v2123
      %2165 = vmatprep.subr.mxu0 0.0
      %2166 = vmatpush1.msra.mxu0 %v2124
      %2167 = vmatprep.subr.mxu0 0.0
      %2168 = vmatpush1.msra.mxu0 %v2125
      %2169 = vmatprep.subr.mxu0 0.0
      %2170 = vmatpush1.msra.mxu0 %v2126
      %2171 = vmatprep.subr.mxu0 0.0
      %2172 = vmatpush1.msra.mxu0 %v2127
      %2173 = vmatprep.subr.mxu0 0.0
      %2174 = vmatpush1.msra.mxu0 %v2128
      %2175 = vmatprep.subr.mxu0 0.0
      %2176 = vmatpush1.msra.mxu0 %v2129
      %2177 = vmatprep.subr.mxu0 0.0
      %2178 = vmatpush1.msra.mxu0 %v2130
      %2179 = vmatprep.subr.mxu0 0.0
      %2180 = vmatpush1.msra.mxu0 %v2131
      %2181 = vmatprep.subr.mxu0 0.0
      %2182 = vmatpush1.msra.mxu0 %v2132
      %2183 = vmatprep.subr.mxu0 0.0
      %2184 = vmatpush1.msra.mxu0 %v2133
      %2185 = vmatprep.subr.mxu0 0.0
      %2186 = vmatpush1.msra.mxu0 %v2134
      %2187 = vmatprep.subr.mxu0 0.0
      %2188 = vmatpush1.msra.mxu0 %v2135
      %2189 = vmatprep.subr.mxu0 0.0
      %2190 = vmatpush1.msra.mxu0 %v2136
      %2191 = vmatprep.subr.mxu0 0.0
      %2192 = vmatpush1.msra.mxu0 %v2137
      %2193 = vmatprep.subr.mxu0 0.0
      %2194 = vmatpush1.msra.mxu0 %v2138
      %2195 = vmatprep.subr.mxu0 0.0
      %2196 = vmatpush1.msra.mxu0 %v2139
      %2197 = vmatprep.subr.mxu0 0.0
      %2198 = vmatpush1.msra.mxu0 %v2140
      %2199 = vmatprep.subr.mxu0 0.0
      %2200 = vmatpush1.msra.mxu0 %v2141
      %2201 = vmatprep.subr.mxu0 0.0
      %2202 = vmatpush1.msra.mxu0 %v2142
      %2203 = vmatprep.subr.mxu0 0.0
      %2204 = vmatpush1.msra.mxu0 %v2143
      %2205 = vmatprep.subr.mxu0 0.0
      %2206 = vmatpush1.msra.mxu0 %v2144
      %2207 = vmatprep.subr.mxu0 0.0
      %2208 = vmatpush1.msra.mxu0 %v2145
      %2209 = vmatprep.subr.mxu0 0.0
      %2210 = vmatpush1.msra.mxu0 %v2146
      %2211 = vmatprep.subr.mxu0 0.0
      %2212 = vmatpush1.msra.mxu0 %v2147
      %2213 = vmatprep.subr.mxu0 0.0
      %2214 = vmatpush1.msra.mxu0 %v2148
      %2215 = vmatprep.subr.mxu0 0.0
      %2216 = vmatpush1.msra.mxu0 %v2149
      %2217 = vmatprep.subr.mxu0 0.0
      %2218 = vmatpush1.msra.mxu0 %v2150
      %2219 = vmatprep.subr.mxu0 0.0
      %2220 = vmatpush1.msra.mxu0 0.0
      %2221 = vmatprep.subr.mxu0 0.0
      %2222 = vmatpush1.msra.mxu0 0.0
      %2223 = vmatprep.subr.mxu0 0.0
      %2224 = vmatpush1.msra.mxu0 0.0
      %2225 = vmatprep.subr.mxu0 0.0
      %2226 = vmatpush1.msra.mxu0 0.0
      %2227 = vmatprep.mubr.f32.mxu0 %v2161
      %2228 = vmatmul.mubr.f32.gmra.mrb[0].mxu0 %v2155
      %v2229 = vpop.f32.mrb[0].mxu0
      %v2230 = vadd.f32 0.0, %v2229
      %v2231 = vpop.f32.mrb[0].mxu0
      %2232 = vdwg.mxu0
      %v2233 = vadd.f32 %v2119, %v2230
      %s2234 = scalar_lea.vmem [#allocation9], 5
      %v2235 = vld [vmem:[%s2234] ss:$8 sm:$0x3]
      %s2236 = scalar_lea.vmem %s7, 1120
      %v2237 = vld [vmem:[%s2236] sm:$0xff]
      %v2238 = vld [vmem:[%s2236 + $0x8] sm:$0xff]
      %v2239 = vld [vmem:[%s2236 + $0x10] sm:$0xff]
      %v2240 = vld [vmem:[%s2236 + $0x18] sm:$0xff]
      %v2241 = vld [vmem:[%s2236 + $0x20] sm:$0xff]
      %v2242 = vld [vmem:[%s2236 + $0x28] sm:$0xff]
      %v2243 = vld [vmem:[%s2236 + $0x30] sm:$0xff]
      %v2244 = vld [vmem:[%s2236 + $0x38] sm:$0xff]
      %v2245 = vld [vmem:[%s2236 + $0x40] sm:$0xff]
      %v2246 = vld [vmem:[%s2236 + $0x48] sm:$0xff]
      %v2247 = vld [vmem:[%s2236 + $0x50] sm:$0xff]
      %v2248 = vld [vmem:[%s2236 + $0x58] sm:$0xff]
      %v2249 = vld [vmem:[%s2236 + $0x60] sm:$0xff]
      %v2250 = vld [vmem:[%s2236 + $0x68] sm:$0xff]
      %v2251 = vld [vmem:[%s2236 + $0x70] sm:$0xff]
      %v2252 = vld [vmem:[%s2236 + $0x78] sm:$0xff]
      %v2253 = vld [vmem:[%s2236 + $0x80] sm:$0xff]
      %v2254 = vld [vmem:[%s2236 + $0x88] sm:$0xff]
      %v2255 = vld [vmem:[%s2236 + $0x90] sm:$0xff]
      %v2256 = vld [vmem:[%s2236 + $0x98] sm:$0xff]
      %v2257 = vld [vmem:[%s2236 + $0xa0] sm:$0xff]
      %v2258 = vld [vmem:[%s2236 + $0xa8] sm:$0xff]
      %v2259 = vld [vmem:[%s2236 + $0xb0] sm:$0xff]
      %v2260 = vld [vmem:[%s2236 + $0xb8] sm:$0xff]
      %v2261 = vld [vmem:[%s2236 + $0xc0] sm:$0xff]
      %v2262 = vld [vmem:[%s2236 + $0xc8] sm:$0xff]
      %v2263 = vld [vmem:[%s2236 + $0xd0] sm:$0xff]
      %v2264 = vld [vmem:[%s2236 + $0xd8] sm:$0xff]
      %v2266 = vlaneseq
      %v2267 = vshrl.u32 %v2266, 7
      %v2268 = vsub.s32 0, %v2267
      %v2269 = vrot.slane %v2235, %v2268
      %v2270 = vlaneseq
      %v2271 = vshrl.u32 %v2270, 7
      %v2272 = vsub.s32 1, %v2271
      %v2273 = vrot.slane %v2235, %v2272
      %v2275 = vsel %vm463, %v2273, 0
      %2277 = vmatprep.subr.mxu0 0.0
      %2278 = vmatpush1.msra.mxu0 %v2237
      %2279 = vmatprep.subr.mxu0 0.0
      %2280 = vmatpush1.msra.mxu0 %v2238
      %2281 = vmatprep.subr.mxu0 0.0
      %2282 = vmatpush1.msra.mxu0 %v2239
      %2283 = vmatprep.subr.mxu0 0.0
      %2284 = vmatpush1.msra.mxu0 %v2240
      %2285 = vmatprep.subr.mxu0 0.0
      %2286 = vmatpush1.msra.mxu0 %v2241
      %2287 = vmatprep.subr.mxu0 0.0
      %2288 = vmatpush1.msra.mxu0 %v2242
      %2289 = vmatprep.subr.mxu0 0.0
      %2290 = vmatpush1.msra.mxu0 %v2243
      %2291 = vmatprep.subr.mxu0 0.0
      %2292 = vmatpush1.msra.mxu0 %v2244
      %2293 = vmatprep.subr.mxu0 0.0
      %2294 = vmatpush1.msra.mxu0 %v2245
      %2295 = vmatprep.subr.mxu0 0.0
      %2296 = vmatpush1.msra.mxu0 %v2246
      %2297 = vmatprep.subr.mxu0 0.0
      %2298 = vmatpush1.msra.mxu0 %v2247
      %2299 = vmatprep.subr.mxu0 0.0
      %2300 = vmatpush1.msra.mxu0 %v2248
      %2301 = vmatprep.subr.mxu0 0.0
      %2302 = vmatpush1.msra.mxu0 %v2249
      %2303 = vmatprep.subr.mxu0 0.0
      %2304 = vmatpush1.msra.mxu0 %v2250
      %2305 = vmatprep.subr.mxu0 0.0
      %2306 = vmatpush1.msra.mxu0 %v2251
      %2307 = vmatprep.subr.mxu0 0.0
      %2308 = vmatpush1.msra.mxu0 %v2252
      %2309 = vmatprep.subr.mxu0 0.0
      %2310 = vmatpush1.msra.mxu0 %v2253
      %2311 = vmatprep.subr.mxu0 0.0
      %2312 = vmatpush1.msra.mxu0 %v2254
      %2313 = vmatprep.subr.mxu0 0.0
      %2314 = vmatpush1.msra.mxu0 %v2255
      %2315 = vmatprep.subr.mxu0 0.0
      %2316 = vmatpush1.msra.mxu0 %v2256
      %2317 = vmatprep.subr.mxu0 0.0
      %2318 = vmatpush1.msra.mxu0 %v2257
      %2319 = vmatprep.subr.mxu0 0.0
      %2320 = vmatpush1.msra.mxu0 %v2258
      %2321 = vmatprep.subr.mxu0 0.0
      %2322 = vmatpush1.msra.mxu0 %v2259
      %2323 = vmatprep.subr.mxu0 0.0
      %2324 = vmatpush1.msra.mxu0 %v2260
      %2325 = vmatprep.subr.mxu0 0.0
      %2326 = vmatpush1.msra.mxu0 %v2261
      %2327 = vmatprep.subr.mxu0 0.0
      %2328 = vmatpush1.msra.mxu0 %v2262
      %2329 = vmatprep.subr.mxu0 0.0
      %2330 = vmatpush1.msra.mxu0 %v2263
      %2331 = vmatprep.subr.mxu0 0.0
      %2332 = vmatpush1.msra.mxu0 %v2264
      %2333 = vmatprep.subr.mxu0 0.0
      %2334 = vmatpush1.msra.mxu0 0.0
      %2335 = vmatprep.subr.mxu0 0.0
      %2336 = vmatpush1.msra.mxu0 0.0
      %2337 = vmatprep.subr.mxu0 0.0
      %2338 = vmatpush1.msra.mxu0 0.0
      %2339 = vmatprep.subr.mxu0 0.0
      %2340 = vmatpush1.msra.mxu0 0.0
      %2341 = vmatprep.mubr.f32.mxu0 %v2275
      %2342 = vmatmul.mubr.f32.gmra.mrb[0].mxu0 %v2269
      %v2343 = vpop.f32.mrb[0].mxu0
      %v2344 = vadd.f32 0.0, %v2343
      %v2345 = vpop.f32.mrb[0].mxu0
      %2346 = vdwg.mxu0
      %v2347 = vadd.f32 %v2233, %v2344
      %s2348 = scalar_lea.vmem [#allocation9], 6
      %v2349 = vld [vmem:[%s2348] ss:$8 sm:$0x3]
      %s2350 = scalar_lea.vmem %s7, 1344
      %v2351 = vld [vmem:[%s2350] sm:$0xff]
      %v2352 = vld [vmem:[%s2350 + $0x8] sm:$0xff]
      %v2353 = vld [vmem:[%s2350 + $0x10] sm:$0xff]
      %v2354 = vld [vmem:[%s2350 + $0x18] sm:$0xff]
      %v2355 = vld [vmem:[%s2350 + $0x20] sm:$0xff]
      %v2356 = vld [vmem:[%s2350 + $0x28] sm:$0xff]
      %v2357 = vld [vmem:[%s2350 + $0x30] sm:$0xff]
      %v2358 = vld [vmem:[%s2350 + $0x38] sm:$0xff]
      %v2359 = vld [vmem:[%s2350 + $0x40] sm:$0xff]
      %v2360 = vld [vmem:[%s2350 + $0x48] sm:$0xff]
      %v2361 = vld [vmem:[%s2350 + $0x50] sm:$0xff]
      %v2362 = vld [vmem:[%s2350 + $0x58] sm:$0xff]
      %v2363 = vld [vmem:[%s2350 + $0x60] sm:$0xff]
      %v2364 = vld [vmem:[%s2350 + $0x68] sm:$0xff]
      %v2365 = vld [vmem:[%s2350 + $0x70] sm:$0xff]
      %v2366 = vld [vmem:[%s2350 + $0x78] sm:$0xff]
      %v2367 = vld [vmem:[%s2350 + $0x80] sm:$0xff]
      %v2368 = vld [vmem:[%s2350 + $0x88] sm:$0xff]
      %v2369 = vld [vmem:[%s2350 + $0x90] sm:$0xff]
      %v2370 = vld [vmem:[%s2350 + $0x98] sm:$0xff]
      %v2371 = vld [vmem:[%s2350 + $0xa0] sm:$0xff]
      %v2372 = vld [vmem:[%s2350 + $0xa8] sm:$0xff]
      %v2373 = vld [vmem:[%s2350 + $0xb0] sm:$0xff]
      %v2374 = vld [vmem:[%s2350 + $0xb8] sm:$0xff]
      %v2375 = vld [vmem:[%s2350 + $0xc0] sm:$0xff]
      %v2376 = vld [vmem:[%s2350 + $0xc8] sm:$0xff]
      %v2377 = vld [vmem:[%s2350 + $0xd0] sm:$0xff]
      %v2378 = vld [vmem:[%s2350 + $0xd8] sm:$0xff]
      %v2380 = vlaneseq
      %v2381 = vshrl.u32 %v2380, 7
      %v2382 = vsub.s32 0, %v2381
      %v2383 = vrot.slane %v2349, %v2382
      %v2384 = vlaneseq
      %v2385 = vshrl.u32 %v2384, 7
      %v2386 = vsub.s32 1, %v2385
      %v2387 = vrot.slane %v2349, %v2386
      %v2389 = vsel %vm463, %v2387, 0
      %2391 = vmatprep.subr.mxu0 0.0
      %2392 = vmatpush1.msra.mxu0 %v2351
      %2393 = vmatprep.subr.mxu0 0.0
      %2394 = vmatpush1.msra.mxu0 %v2352
      %2395 = vmatprep.subr.mxu0 0.0
      %2396 = vmatpush1.msra.mxu0 %v2353
      %2397 = vmatprep.subr.mxu0 0.0
      %2398 = vmatpush1.msra.mxu0 %v2354
      %2399 = vmatprep.subr.mxu0 0.0
      %2400 = vmatpush1.msra.mxu0 %v2355
      %2401 = vmatprep.subr.mxu0 0.0
      %2402 = vmatpush1.msra.mxu0 %v2356
      %2403 = vmatprep.subr.mxu0 0.0
      %2404 = vmatpush1.msra.mxu0 %v2357
      %2405 = vmatprep.subr.mxu0 0.0
      %2406 = vmatpush1.msra.mxu0 %v2358
      %2407 = vmatprep.subr.mxu0 0.0
      %2408 = vmatpush1.msra.mxu0 %v2359
      %2409 = vmatprep.subr.mxu0 0.0
      %2410 = vmatpush1.msra.mxu0 %v2360
      %2411 = vmatprep.subr.mxu0 0.0
      %2412 = vmatpush1.msra.mxu0 %v2361
      %2413 = vmatprep.subr.mxu0 0.0
      %2414 = vmatpush1.msra.mxu0 %v2362
      %2415 = vmatprep.subr.mxu0 0.0
      %2416 = vmatpush1.msra.mxu0 %v2363
      %2417 = vmatprep.subr.mxu0 0.0
      %2418 = vmatpush1.msra.mxu0 %v2364
      %2419 = vmatprep.subr.mxu0 0.0
      %2420 = vmatpush1.msra.mxu0 %v2365
      %2421 = vmatprep.subr.mxu0 0.0
      %2422 = vmatpush1.msra.mxu0 %v2366
      %2423 = vmatprep.subr.mxu0 0.0
      %2424 = vmatpush1.msra.mxu0 %v2367
      %2425 = vmatprep.subr.mxu0 0.0
      %2426 = vmatpush1.msra.mxu0 %v2368
      %2427 = vmatprep.subr.mxu0 0.0
      %2428 = vmatpush1.msra.mxu0 %v2369
      %2429 = vmatprep.subr.mxu0 0.0
      %2430 = vmatpush1.msra.mxu0 %v2370
      %2431 = vmatprep.subr.mxu0 0.0
      %2432 = vmatpush1.msra.mxu0 %v2371
      %2433 = vmatprep.subr.mxu0 0.0
      %2434 = vmatpush1.msra.mxu0 %v2372
      %2435 = vmatprep.subr.mxu0 0.0
      %2436 = vmatpush1.msra.mxu0 %v2373
      %2437 = vmatprep.subr.mxu0 0.0
      %2438 = vmatpush1.msra.mxu0 %v2374
      %2439 = vmatprep.subr.mxu0 0.0
      %2440 = vmatpush1.msra.mxu0 %v2375
      %2441 = vmatprep.subr.mxu0 0.0
      %2442 = vmatpush1.msra.mxu0 %v2376
      %2443 = vmatprep.subr.mxu0 0.0
      %2444 = vmatpush1.msra.mxu0 %v2377
      %2445 = vmatprep.subr.mxu0 0.0
      %2446 = vmatpush1.msra.mxu0 %v2378
      %2447 = vmatprep.subr.mxu0 0.0
      %2448 = vmatpush1.msra.mxu0 0.0
      %2449 = vmatprep.subr.mxu0 0.0
      %2450 = vmatpush1.msra.mxu0 0.0
      %2451 = vmatprep.subr.mxu0 0.0
      %2452 = vmatpush1.msra.mxu0 0.0
      %2453 = vmatprep.subr.mxu0 0.0
      %2454 = vmatpush1.msra.mxu0 0.0
      %2455 = vmatprep.mubr.f32.mxu0 %v2389
      %2456 = vmatmul.mubr.f32.gmra.mrb[0].mxu0 %v2383
      %v2457 = vpop.f32.mrb[0].mxu0
      %v2458 = vadd.f32 0.0, %v2457
      %v2459 = vpop.f32.mrb[0].mxu0
      %2460 = vdwg.mxu0
      %v2461 = vadd.f32 %v2347, %v2458
      %vm2462 = vcmask 73728
      %v2463 = vsel %vm2462, %v2461, -inf
      %2464 = vmax.xlane.f32.xlu0 %v2463
      %v2465 = vpop.xlane.xlu0 %2464
      %v2466 = vsub.f32 %v2461, %v2465
      %v2467 = vmul.f32 %v2466, 1.442695
      %v2468 = vpow.pop %v2467
      %v2469 = vsel %vm2462, %v2468, 0.0
      %2470 = vadd.xlane.f32.xlu0 %v2469
      %v2471 = vpop.xlane.xlu0 %2470
      %v2472 = vlog2.pop %v2471
      %v2473 = vmul.f32 %v2472, 0.6931472
      %v2474 = vsub.f32 %v2466, %v2473
      %s2475 = scalar_lea.vmem [#allocation10], %s34
      %2476 = vst.msk [vmem:[%s2475] sm:$0x1] %vm2462, %v2474
    $region42: #{net_forward.1} parent=1 // loop_footer
      %s38 = sadd.s32 1, %s34
    $region43: #{net_forward.1} parent=1 // loop_footer_branch
      %33 = sbr.rel target = $region39
    $region44: #{net_forward.1} parent=1 // loop_exit
      _
    // Predicated region
    $region45: #{net_forward.1} parent=1 // pred_check
      _
    $region46: #{net_forward.1} parent=1 // pred_check_branch
      %2478 = sbr.rel (0) target = $region48
    $region47: #{net_forward.1} parent=1 // pred_region
      %s2480 = ssub.s32 32, 32
      %2481 = vsyncadd [#allocation11], %s2480
      %s2483 = sshll.u32 [#allocation10], 4
      %s2484 = int_to_ptr.vmem [resolvable:$true] %s2483
      %2486 = dma.vmem_to_hbm [thread:$0]  %s2484, 32, %s9, [#allocation11]
    $region48: #{net_forward.1} parent=1 // pred_fallthru
      _
    // Predicated region
    $region49: #{net_forward.1} parent=1 // pred_check
      _
    $region50: #{net_forward.1} parent=1 // pred_check_branch
      %2488 = sbr.rel (0) target = $region52
    $region51: #{net_forward.1} parent=1 // pred_region
      %2489 = dma.done [#allocation11], 32
    $region52: #{net_forward.1} parent=1 // pred_fallthru
      _
    %2490 = vsyncpa [#allocation11], 1

</llo_original>
